<compile_context>
chip_gen: v6e
topology: v6e:2x2x1
jax: 0.10.0
libtpu: 0.0.40
codegen_flags: <defaults>
</compile_context>

<pallas_src>
import jax
import jax.numpy as jnp
from jax.experimental import pallas as pl
from jax.experimental.pallas import tpu as pltpu


# ---------------------------------------------------------------------------
# Kernels
# ---------------------------------------------------------------------------
def _affine_relu(h_bf16, w_ref, b_ref):
    """bf16 MXU matmul, f32 accumulate; epilogue (bias + ReLU) stays in f32."""
    y = jnp.dot(h_bf16, w_ref[...], preferred_element_type=jnp.float32)
    return jnp.maximum(y + b_ref[...], 0.0)


def _mlp_pool_kernel(x_ref, w1_ref, b1_ref, w2_ref, b2_ref, w3_ref, b3_ref,
                     o_ref):
    """Grid: (B, N // TILE_N). Shared MLP on one point tile + running max pool."""
    t = pl.program_id(1)

    x = x_ref[0].astype(jnp.bfloat16)                          # (TILE_N, 8)
    h = _affine_relu(x, w1_ref, b1_ref)                        # (TILE_N, 64)   f32
    h = _affine_relu(h.astype(jnp.bfloat16), w2_ref, b2_ref)   # (TILE_N, 128)  f32
    h = _affine_relu(h.astype(jnp.bfloat16), w3_ref, b3_ref)   # (TILE_N, 1024) f32

    tile_max = jnp.max(h, axis=0, keepdims=True)               # (1, 1024) f32

    # Output block (1, 1, 1024) is resident across the point-tile axis:
    # initialize once, then fold the running max.
    @pl.when(t == 0)
    def _():
        o_ref[...] = jnp.full(o_ref.shape, -jnp.inf, o_ref.dtype)

    o_ref[0] = jnp.maximum(o_ref[0], tile_max)


def _head_kernel(g_ref, wf1_ref, bf1_ref, wf2_ref, bf2_ref, wf3_ref, bf3_ref,
                 o_ref):
    """FC head, run once over the whole batch (M = B). Output lane-padded."""
    g = g_ref[...].astype(jnp.bfloat16)                        # (B, 1024)
    f = _affine_relu(g, wf1_ref, bf1_ref)                      # (B, 512)
    f = _affine_relu(f.astype(jnp.bfloat16), wf2_ref, bf2_ref) # (B, 256)
    o_ref[...] = (jnp.dot(f.astype(jnp.bfloat16), wf3_ref[...],
                          preferred_element_type=jnp.float32)
                  + bf3_ref[...])                              # (B, C_pad)


# ---------------------------------------------------------------------------
# Wrapper
# ---------------------------------------------------------------------------
def _round_up(x, m):
    return (x + m - 1) // m * m


def _pick_tile_n(n, max_tile=1024):
    """Largest point tile <= max_tile that divides N (multiple of 8 sublanes)."""
    if n <= max_tile:
        return n
    for t in range(max_tile, 7, -1):
        if n % t == 0 and t % 8 == 0:
            return t
    return n


def pointnet_forward(x, params):
    B, N, c_in = x.shape
    num_classes = params["wf3"].shape[1]
    tile_n = _pick_tile_n(N)
    c_pad = _round_up(max(num_classes, 128), 128)

    to_bf16 = lambda a: a.astype(jnp.bfloat16)

    # Pad the 3-channel input / first-layer weight to 8 channels (tile-aligned K).
    x_pad = jnp.pad(x, ((0, 0), (0, 0), (0, 8 - c_in)))
    w1 = to_bf16(jnp.pad(params["w1"], ((0, 8 - c_in), (0, 0))))
    w2, w3 = to_bf16(params["w2"]), to_bf16(params["w3"])
    b1, b2, b3 = params["b1"], params["b2"], params["b3"]
    feat = w3.shape[1]  # 1024

    def const_spec(arr):
        # Whole-array block, same block index for every grid step: DMA'd once,
        # stays resident in VMEM across the grid.
        return pl.BlockSpec(arr.shape, lambda b, t: (0,) * arr.ndim)

    mlp_weights = [w1, b1, w2, b2, w3, b3]
    pooled = pl.pallas_call(
        _mlp_pool_kernel,
        out_shape=jax.ShapeDtypeStruct((B, 1, feat), jnp.float32),
        grid_spec=pltpu.PrefetchScalarGridSpec(
            num_scalar_prefetch=0,
            grid=(B, N // tile_n),
            in_specs=[pl.BlockSpec((1, tile_n, 8), lambda b, t: (b, t, 0))]
                     + [const_spec(w) for w in mlp_weights],
            out_specs=pl.BlockSpec((1, 1, feat), lambda b, t: (b, 0, 0)),
        ),
        compiler_params=pltpu.CompilerParams(
            dimension_semantics=("parallel", "arbitrary"),
            vmem_limit_bytes=64 << 20),
    )(x_pad, *mlp_weights)
    pooled = pooled.reshape(B, feat)                           # (B, 1024) f32

    # FC head once over the whole batch (M = B), lane-padded logits.
    wf1, wf2 = to_bf16(params["wf1"]), to_bf16(params["wf2"])
    wf3 = to_bf16(jnp.pad(params["wf3"], ((0, 0), (0, c_pad - num_classes))))
    bf1, bf2 = params["bf1"], params["bf2"]
    bf3 = jnp.pad(params["bf3"], ((0, 0), (0, c_pad - num_classes)))

    head_args = (pooled, wf1, bf1, wf2, bf2, wf3, bf3)
    logits_pad = pl.pallas_call(
        _head_kernel,
        out_shape=jax.ShapeDtypeStruct((B, c_pad), jnp.float32),
        in_specs=[pl.BlockSpec(memory_space=pltpu.MemorySpace.VMEM)] * len(head_args),
        out_specs=pl.BlockSpec(memory_space=pltpu.MemorySpace.VMEM),
    )(*head_args)
    return logits_pad[:, :num_classes]


# ---------------------------------------------------------------------------
# Deterministic parameter construction (glue, plain JAX).
# ---------------------------------------------------------------------------
def _linear_init(key, fan_in, fan_out):
    k_w, k_b = jax.random.split(key)
    bound = 1.0 / float(fan_in) ** 0.5
    w = jax.random.uniform(k_w, (fan_in, fan_out), jnp.float32, -bound, bound)
    b = jax.random.uniform(k_b, (fan_out,), jnp.float32, -bound, bound)
    return w, b


def _bn_init(key, c):
    k1, k2, k3, k4 = jax.random.split(key, 4)
    gamma = jax.random.uniform(k1, (c,), jnp.float32, 0.5, 1.5)
    beta = 0.1 * jax.random.normal(k2, (c,), jnp.float32)
    mean = 0.1 * jax.random.normal(k3, (c,), jnp.float32)
    var = jax.random.uniform(k4, (c,), jnp.float32, 0.5, 1.5)
    return gamma, beta, mean, var


def _fold_bn(w, b, gamma, beta, mean, var, eps=1e-5):
    scale = gamma / jnp.sqrt(var + eps)
    return w * scale[None, :], (b - mean) * scale + beta


def init_params(key, num_classes):
    layer_dims = [(3, 64, True), (64, 128, True), (128, 1024, True),
                  (1024, 512, True), (512, 256, True), (256, num_classes, False)]
    names = ["1", "2", "3", "f1", "f2", "f3"]
    params = {}
    keys = jax.random.split(key, len(layer_dims))
    for (fi, fo, has_bn), name, k in zip(layer_dims, names, keys):
        k_lin, k_bn = jax.random.split(k)
        w, b = _linear_init(k_lin, fi, fo)
        if has_bn:
            w, b = _fold_bn(w, b, *_bn_init(k_bn, fo))
        params["w" + name] = w
        params["b" + name] = b.reshape(1, fo)
    return params


# ---------------------------------------------------------------------------
# Pure-JAX reference (matches the kernel's bf16-matmul / f32-epilogue numerics).
# ---------------------------------------------------------------------------
def pointnet_reference(x, params):
    def mm_relu(h, w, b):
        y = jnp.dot(h.astype(jnp.bfloat16), w.astype(jnp.bfloat16),
                    preferred_element_type=jnp.float32)
        return jnp.maximum(y + b, 0.0)

    B, N, _ = x.shape
    h = x.reshape(B * N, -1)
    h = mm_relu(h, params["w1"], params["b1"])
    h = mm_relu(h, params["w2"], params["b2"])
    h = mm_relu(h, params["w3"], params["b3"])
    g = jnp.max(h.reshape(B, N, -1), axis=1)                   # (B, 1024)
    f = mm_relu(g, params["wf1"], params["bf1"])
    f = mm_relu(f, params["wf2"], params["bf2"])
    return (jnp.dot(f.astype(jnp.bfloat16), params["wf3"].astype(jnp.bfloat16),
                    preferred_element_type=jnp.float32) + params["bf3"])


if __name__ == "__main__":
    B, N, NUM_CLASSES = 2, 128, 10
    key = jax.random.PRNGKey(0)
    k_x, k_p = jax.random.split(key)

    x = jax.random.normal(k_x, (B, N, 3), dtype=jnp.float32)
    params = init_params(k_p, NUM_CLASSES)

    out = jax.jit(pointnet_forward)(x, params)
    out = jax.block_until_ready(out)

    ref = pointnet_reference(x, params)
    assert out.shape == (B, NUM_CLASSES), out.shape
    if not jnp.allclose(out, ref, rtol=2e-2, atol=2e-2):
        raise AssertionError(
            f"kernel/reference mismatch, max abs err = {jnp.max(jnp.abs(out - ref))}")

    print("KERNEL_OK")
</pallas_src>

<mosaic_0001>
module attributes {stable_mosaic.version = 11 : i64} {
  func.func @_head_kernel(%arg0: memref<2x1024xf32, #tpu.memory_space<vmem>>, %arg1: memref<1024x512xbf16, #tpu.memory_space<vmem>>, %arg2: memref<1x512xf32, #tpu.memory_space<vmem>>, %arg3: memref<512x256xbf16, #tpu.memory_space<vmem>>, %arg4: memref<1x256xf32, #tpu.memory_space<vmem>>, %arg5: memref<256x128xbf16, #tpu.memory_space<vmem>>, %arg6: memref<1x128xf32, #tpu.memory_space<vmem>>, %arg7: memref<2x128xf32, #tpu.memory_space<vmem>>) attributes {dimension_semantics = [], scalar_prefetch = 0 : i64, scratch_operands = 0 : i64, tpu.core_type = #tpu.core_type<tc>} {
    %c0 = arith.constant 0 : index
    %c0_0 = arith.constant 0 : index
    %0 = vector.load %arg0[%c0, %c0_0] : memref<2x1024xf32, #tpu.memory_space<vmem>>, vector<2x1024xf32>
    %1 = arith.truncf %0 : vector<2x1024xf32> to vector<2x1024xbf16>
    %c0_1 = arith.constant 0 : index
    %c0_2 = arith.constant 0 : index
    %2 = vector.load %arg1[%c0_1, %c0_2] : memref<1024x512xbf16, #tpu.memory_space<vmem>>, vector<1024x512xbf16>
    %cst = arith.constant dense<0.000000e+00> : vector<2x512xf32>
    %3 = tpu.matmul %1, %2, %cst {dimension_numbers = #tpu.dot_dimension_numbers<[1], [0], [0], [1], [0, 0, 1, 1], [], []>} : vector<2x1024xbf16>, vector<1024x512xbf16>, vector<2x512xf32> -> vector<2x512xf32>
    %c0_3 = arith.constant 0 : index
    %c0_4 = arith.constant 0 : index
    %4 = vector.load %arg2[%c0_3, %c0_4] : memref<1x512xf32, #tpu.memory_space<vmem>>, vector<1x512xf32>
    %5 = vector.broadcast %4 : vector<1x512xf32> to vector<2x512xf32>
    %6 = arith.addf %3, %5 : vector<2x512xf32>
    %cst_5 = arith.constant 0.000000e+00 : f32
    %7 = vector.broadcast %cst_5 : f32 to vector<2x512xf32>
    %8 = arith.maximumf %6, %7 : vector<2x512xf32>
    %9 = arith.truncf %8 : vector<2x512xf32> to vector<2x512xbf16>
    %c0_6 = arith.constant 0 : index
    %c0_7 = arith.constant 0 : index
    %10 = vector.load %arg3[%c0_6, %c0_7] : memref<512x256xbf16, #tpu.memory_space<vmem>>, vector<512x256xbf16>
    %cst_8 = arith.constant dense<0.000000e+00> : vector<2x256xf32>
    %11 = tpu.matmul %9, %10, %cst_8 {dimension_numbers = #tpu.dot_dimension_numbers<[1], [0], [0], [1], [0, 0, 1, 1], [], []>} : vector<2x512xbf16>, vector<512x256xbf16>, vector<2x256xf32> -> vector<2x256xf32>
    %c0_9 = arith.constant 0 : index
    %c0_10 = arith.constant 0 : index
    %12 = vector.load %arg4[%c0_9, %c0_10] : memref<1x256xf32, #tpu.memory_space<vmem>>, vector<1x256xf32>
    %13 = vector.broadcast %12 : vector<1x256xf32> to vector<2x256xf32>
    %14 = arith.addf %11, %13 : vector<2x256xf32>
    %cst_11 = arith.constant 0.000000e+00 : f32
    %15 = vector.broadcast %cst_11 : f32 to vector<2x256xf32>
    %16 = arith.maximumf %14, %15 : vector<2x256xf32>
    %17 = arith.truncf %16 : vector<2x256xf32> to vector<2x256xbf16>
    %c0_12 = arith.constant 0 : index
    %c0_13 = arith.constant 0 : index
    %18 = vector.load %arg5[%c0_12, %c0_13] : memref<256x128xbf16, #tpu.memory_space<vmem>>, vector<256x128xbf16>
    %cst_14 = arith.constant dense<0.000000e+00> : vector<2x128xf32>
    %19 = tpu.matmul %17, %18, %cst_14 {dimension_numbers = #tpu.dot_dimension_numbers<[1], [0], [0], [1], [0, 0, 1, 1], [], []>} : vector<2x256xbf16>, vector<256x128xbf16>, vector<2x128xf32> -> vector<2x128xf32>
    %c0_15 = arith.constant 0 : index
    %c0_16 = arith.constant 0 : index
    %20 = vector.load %arg6[%c0_15, %c0_16] : memref<1x128xf32, #tpu.memory_space<vmem>>, vector<1x128xf32>
    %21 = vector.broadcast %20 : vector<1x128xf32> to vector<2x128xf32>
    %22 = arith.addf %19, %21 : vector<2x128xf32>
    %c0_17 = arith.constant 0 : index
    %c0_18 = arith.constant 0 : index
    %23 = vector.load %arg7[%c0_17, %c0_18] : memref<2x128xf32, #tpu.memory_space<vmem>>, vector<2x128xf32>
    tpu.vector_store %arg7[%c0_17, %c0_18], %22 {strides = array<i32>} : memref<2x128xf32, #tpu.memory_space<vmem>>, vector<2x128xf32>,
    return
  }
}

module attributes {stable_mosaic.version = 11 : i64} {
  func.func @_mlp_pool_kernel(%arg0: i32, %arg1: i32, %arg2: memref<1x128x8xf32, #tpu.memory_space<vmem>>, %arg3: memref<8x64xbf16, #tpu.memory_space<vmem>>, %arg4: memref<1x64xf32, #tpu.memory_space<vmem>>, %arg5: memref<64x128xbf16, #tpu.memory_space<vmem>>, %arg6: memref<1x128xf32, #tpu.memory_space<vmem>>, %arg7: memref<128x1024xbf16, #tpu.memory_space<vmem>>, %arg8: memref<1x1024xf32, #tpu.memory_space<vmem>>, %arg9: memref<1x1x1024xf32, #tpu.memory_space<vmem>>) attributes {dimension_semantics = [#tpu.dimension_semantics<parallel>, #tpu.dimension_semantics<arbitrary>], iteration_bounds = array<i64: 2, 1>, scalar_prefetch = 0 : i64, scratch_operands = 0 : i64, tpu.core_type = #tpu.core_type<tc>, window_params = [{transform_indices = @transform_0, window_bounds = array<i64: 1, 128, 8>}, {pipeline_mode = #tpu.pipeline_mode<synchronous>, transform_indices = @transform_1, window_bounds = array<i64: 8, 64>}, {pipeline_mode = #tpu.pipeline_mode<synchronous>, transform_indices = @transform_2, window_bounds = array<i64: 1, 64>}, {pipeline_mode = #tpu.pipeline_mode<synchronous>, transform_indices = @transform_3, window_bounds = array<i64: 64, 128>}, {pipeline_mode = #tpu.pipeline_mode<synchronous>, transform_indices = @transform_4, window_bounds = array<i64: 1, 128>}, {pipeline_mode = #tpu.pipeline_mode<synchronous>, transform_indices = @transform_5, window_bounds = array<i64: 128, 1024>}, {pipeline_mode = #tpu.pipeline_mode<synchronous>, transform_indices = @transform_6, window_bounds = array<i64: 1, 1024>}, {transform_indices = @transform_7, window_bounds = array<i64: 1, 1, 1024>}]} {
    %c0 = arith.constant 0 : index
    %c0_0 = arith.constant 0 : index
    %c0_1 = arith.constant 0 : index
    %0 = vector.load %arg2[%c0, %c0_0, %c0_1] : memref<1x128x8xf32, #tpu.memory_space<vmem>>, vector<1x128x8xf32>
    %1 = vector.shape_cast %0 : vector<1x128x8xf32> to vector<128x8xf32>
    %2 = arith.truncf %1 : vector<128x8xf32> to vector<128x8xbf16>
    %c0_2 = arith.constant 0 : index
    %c0_3 = arith.constant 0 : index
    %3 = vector.load %arg3[%c0_2, %c0_3] : memref<8x64xbf16, #tpu.memory_space<vmem>>, vector<8x64xbf16>
    %cst = arith.constant dense<0.000000e+00> : vector<128x64xf32>
    %4 = tpu.matmul %2, %3, %cst {dimension_numbers = #tpu.dot_dimension_numbers<[1], [0], [0], [1], [0, 0, 1, 1], [], []>} : vector<128x8xbf16>, vector<8x64xbf16>, vector<128x64xf32> -> vector<128x64xf32>
    %c0_4 = arith.constant 0 : index
    %c0_5 = arith.constant 0 : index
    %5 = vector.load %arg4[%c0_4, %c0_5] : memref<1x64xf32, #tpu.memory_space<vmem>>, vector<1x64xf32>
    %6 = vector.broadcast %5 : vector<1x64xf32> to vector<128x64xf32>
    %7 = arith.addf %4, %6 : vector<128x64xf32>
    %cst_6 = arith.constant 0.000000e+00 : f32
    %8 = vector.broadcast %cst_6 : f32 to vector<128x64xf32>
    %9 = arith.maximumf %7, %8 : vector<128x64xf32>
    %10 = arith.truncf %9 : vector<128x64xf32> to vector<128x64xbf16>
    %c0_7 = arith.constant 0 : index
    %c0_8 = arith.constant 0 : index
    %11 = vector.load %arg5[%c0_7, %c0_8] : memref<64x128xbf16, #tpu.memory_space<vmem>>, vector<64x128xbf16>
    %cst_9 = arith.constant dense<0.000000e+00> : vector<128x128xf32>
    %12 = tpu.matmul %10, %11, %cst_9 {dimension_numbers = #tpu.dot_dimension_numbers<[1], [0], [0], [1], [0, 0, 1, 1], [], []>} : vector<128x64xbf16>, vector<64x128xbf16>, vector<128x128xf32> -> vector<128x128xf32>
    %c0_10 = arith.constant 0 : index
    %c0_11 = arith.constant 0 : index
    %13 = vector.load %arg6[%c0_10, %c0_11] : memref<1x128xf32, #tpu.memory_space<vmem>>, vector<1x128xf32>
    %14 = vector.broadcast %13 : vector<1x128xf32> to vector<128x128xf32>
    %15 = arith.addf %12, %14 : vector<128x128xf32>
    %cst_12 = arith.constant 0.000000e+00 : f32
    %16 = vector.broadcast %cst_12 : f32 to vector<128x128xf32>
    %17 = arith.maximumf %15, %16 : vector<128x128xf32>
    %18 = arith.truncf %17 : vector<128x128xf32> to vector<128x128xbf16>
    %c0_13 = arith.constant 0 : index
    %c0_14 = arith.constant 0 : index
    %19 = vector.load %arg7[%c0_13, %c0_14] : memref<128x1024xbf16, #tpu.memory_space<vmem>>, vector<128x1024xbf16>
    %cst_15 = arith.constant dense<0.000000e+00> : vector<128x1024xf32>
    %20 = tpu.matmul %18, %19, %cst_15 {dimension_numbers = #tpu.dot_dimension_numbers<[1], [0], [0], [1], [0, 0, 1, 1], [], []>} : vector<128x128xbf16>, vector<128x1024xbf16>, vector<128x1024xf32> -> vector<128x1024xf32>
    %c0_16 = arith.constant 0 : index
    %c0_17 = arith.constant 0 : index
    %21 = vector.load %arg8[%c0_16, %c0_17] : memref<1x1024xf32, #tpu.memory_space<vmem>>, vector<1x1024xf32>
    %22 = vector.broadcast %21 : vector<1x1024xf32> to vector<128x1024xf32>
    %23 = arith.addf %20, %22 : vector<128x1024xf32>
    %cst_18 = arith.constant 0.000000e+00 : f32
    %24 = vector.broadcast %cst_18 : f32 to vector<128x1024xf32>
    %25 = arith.maximumf %23, %24 : vector<128x1024xf32>
    %cst_19 = arith.constant dense<0xFF800000> : vector<1024xf32>
    %26 = vector.multi_reduction <maximumf>, %25, %cst_19 [0] : vector<128x1024xf32> to vector<1024xf32>
    %27 = vector.shape_cast %26 : vector<1024xf32> to vector<1x1024xf32>
    %c0_i32 = arith.constant 0 : i32
    %28 = arith.cmpi eq, %arg1, %c0_i32 : i32
    %29 = arith.extui %28 : i1 to i32
    %c0_i32_20 = arith.constant 0 : i32
    %30 = arith.cmpi ne, %29, %c0_i32_20 : i32
    scf.if %30 {
      %cst_27 = arith.constant 0xFF800000 : f32
      %37 = vector.broadcast %cst_27 : f32 to vector<1x1x1024xf32>
      %c0_28 = arith.constant 0 : index
      %c0_29 = arith.constant 0 : index
      %c0_30 = arith.constant 0 : index
      %38 = vector.load %arg9[%c0_28, %c0_29, %c0_30] : memref<1x1x1024xf32, #tpu.memory_space<vmem>>, vector<1x1x1024xf32>
      tpu.vector_store %arg9[%c0_28, %c0_29, %c0_30], %37 {strides = array<i32>} : memref<1x1x1024xf32, #tpu.memory_space<vmem>>, vector<1x1x1024xf32>,
    } else {
    }
    %c0_21 = arith.constant 0 : index
    %c0_22 = arith.constant 0 : index
    %c0_23 = arith.constant 0 : index
    %31 = vector.load %arg9[%c0_21, %c0_22, %c0_23] : memref<1x1x1024xf32, #tpu.memory_space<vmem>>, vector<1x1x1024xf32>
    %32 = vector.shape_cast %31 : vector<1x1x1024xf32> to vector<1x1024xf32>
    %33 = arith.maximumf %32, %27 : vector<1x1024xf32>
    %c0_24 = arith.constant 0 : index
    %c0_25 = arith.constant 0 : index
    %c0_26 = arith.constant 0 : index
    %34 = vector.load %arg9[%c0_24, %c0_25, %c0_26] : memref<1x1x1024xf32, #tpu.memory_space<vmem>>, vector<1x1x1024xf32>
    %35 = vector.shape_cast %34 : vector<1x1x1024xf32> to vector<1x1024xf32>
    %36 = vector.shape_cast %33 : vector<1x1024xf32> to vector<1x1x1024xf32>
    tpu.vector_store %arg9[%c0_24, %c0_25, %c0_26], %36 {strides = array<i32>} : memref<1x1x1024xf32, #tpu.memory_space<vmem>>, vector<1x1x1024xf32>,
    return
  }
  func.func @transform_0(%arg0: i32, %arg1: i32) -> (i32, i32, i32) {
    %c0_i32 = arith.constant 0 : i32
    %c0_i32_0 = arith.constant 0 : i32
    return %arg0, %arg1, %c0_i32 : i32, i32, i32
  }
  func.func @transform_1(%arg0: i32, %arg1: i32) -> (i32, i32) {
    %c0_i32 = arith.constant 0 : i32
    %c0_i32_0 = arith.constant 0 : i32
    %c0_i32_1 = arith.constant 0 : i32
    return %c0_i32, %c0_i32_0 : i32, i32
  }
  func.func @transform_2(%arg0: i32, %arg1: i32) -> (i32, i32) {
    %c0_i32 = arith.constant 0 : i32
    %c0_i32_0 = arith.constant 0 : i32
    %c0_i32_1 = arith.constant 0 : i32
    return %c0_i32, %c0_i32_0 : i32, i32
  }
  func.func @transform_3(%arg0: i32, %arg1: i32) -> (i32, i32) {
    %c0_i32 = arith.constant 0 : i32
    %c0_i32_0 = arith.constant 0 : i32
    %c0_i32_1 = arith.constant 0 : i32
    return %c0_i32, %c0_i32_0 : i32, i32
  }
  func.func @transform_4(%arg0: i32, %arg1: i32) -> (i32, i32) {
    %c0_i32 = arith.constant 0 : i32
    %c0_i32_0 = arith.constant 0 : i32
    %c0_i32_1 = arith.constant 0 : i32
    return %c0_i32, %c0_i32_0 : i32, i32
  }
  func.func @transform_5(%arg0: i32, %arg1: i32) -> (i32, i32) {
    %c0_i32 = arith.constant 0 : i32
    %c0_i32_0 = arith.constant 0 : i32
    %c0_i32_1 = arith.constant 0 : i32
    return %c0_i32, %c0_i32_0 : i32, i32
  }
  func.func @transform_6(%arg0: i32, %arg1: i32) -> (i32, i32) {
    %c0_i32 = arith.constant 0 : i32
    %c0_i32_0 = arith.constant 0 : i32
    %c0_i32_1 = arith.constant 0 : i32
    return %c0_i32, %c0_i32_0 : i32, i32
  }
  func.func @transform_7(%arg0: i32, %arg1: i32) -> (i32, i32, i32) {
    %c0_i32 = arith.constant 0 : i32
    %c0_i32_0 = arith.constant 0 : i32
    %c0_i32_1 = arith.constant 0 : i32
    return %arg0, %c0_i32, %c0_i32_0 : i32, i32, i32
  }
}

</mosaic_0001>

<llo_original>
// kernel: pointnet_forward.2
$region0: #{pointnet_forward.2}
  #allocation0 [shape = 'u32[]', space=smem, size = 0x4, offset = 0x4, fixed_abs, tag = 'smem constant byte address 0x4 - core index']
  #allocation1 [shape = 'u32[144,128]{1,0:T(1,128)}', space=vmem, size = 0x12000, scoped, tag = 'internal scratch']
  %s0 = inlined_call_operand.vmem [shape: f32[2,128,8], index: 0, kind: input, shape index: {}]
  %s1 = inlined_call_operand.vmem [shape: bf16[8,64], index: 1, kind: input, shape index: {}]
  %s2 = inlined_call_operand.hbm [shape: f32[1,64], index: 2, kind: input, shape index: {}]
  %s3 = inlined_call_operand.vmem [shape: bf16[64,128], index: 3, kind: input, shape index: {}]
  %s4 = inlined_call_operand.hbm [shape: f32[1,128], index: 4, kind: input, shape index: {}]
  %s5 = inlined_call_operand.vmem [shape: bf16[128,1024], index: 5, kind: input, shape index: {}]
  %s6 = inlined_call_operand.hbm [shape: f32[1,1024], index: 6, kind: input, shape index: {}]
  %s7 = inlined_call_operand.vmem [shape: f32[2,1,1024], index: 7, kind: output, shape index: {}]
  %s8 = sld [smem:[#allocation0]]
  $region77: #{pointnet_forward.2} parent=0
    _
  %s10 = ssub.s32 1, %s8
  %s11 = scalar_select 0, %s10, %s8
  $region1: #{pointnet_forward.2} parent=0
    #allocation2 [shape = 'u8[512]{0}', space=vmem, size = 0x400, scoped, tag = 'input window, operand 2, single buffered']
    #allocation3 [shape = 's32[2]{0}', space=sflag, size = 0x8, scoped, tag = 'scoped memory for pointnet_forward.2']
    #allocation4 [shape = 'u8[512]{0}', space=vmem, size = 0x400, scoped, tag = 'input window, operand 4, single buffered']
    #allocation5 [shape = 's32[1]{0}', space=sflag, size = 0x4, scoped, tag = 'scoped memory for pointnet_forward.2']
    #allocation6 [shape = 'u8[4096]{0}', space=vmem, size = 0x1000, scoped, tag = 'input window, operand 6, single buffered']
    %12 = vsyncpa [#allocation3], 0
    %13 = vsyncpa [#allocation5], 0
    loop: start=0, step=1, limit=4
    $region2: #{pointnet_forward.2} parent=1 // loop_pre_header
      _
    $region3: #{pointnet_forward.2} parent=1 // loop_header
      %s15 = sphi 0, %s19
      %p16 = scmp.ge.s32.totalorder %s15, 4
      %s22 = sphi 0, %s34
      %s23 = sphi 0, %s30
      %s24 = sphi 0, %s22
      %s25 = sphi 0, %s23
      %s26 = sphi 0, %s24
      %s27 = sphi 0, %s25
      %s39 = sphi 0, %s41
      %s42 = sphi 0, %s39
      %s43 = sphi 0, %s42
      %s59 = sphi 0, %s43
      %s63 = sphi 0, %s63
      %s65 = sphi 0, %s63
      %s66 = sphi 0, %s65
      %s80 = sphi 0, %s66
      %s84 = sphi 0, %s84
      %s86 = sphi 0, %s84
      %s87 = sphi 0, %s86
      %s101 = sphi 0, %s87
      %s105 = sphi 0, %s105
      %s107 = sphi 0, %s105
      %s108 = sphi 0, %s107
      %s122 = sphi 0, %s108
      %s126 = sphi 0, %s126
      %s128 = sphi 0, %s126
      %s129 = sphi 0, %s128
      %s143 = sphi 0, %s129
      %s147 = sphi 0, %s147
      %s149 = sphi 0, %s147
      %s150 = sphi 0, %s149
      %s164 = sphi 0, %s150
      %s168 = sphi 0, %s168
      %s170 = sphi 0, %s168
      %s171 = sphi 0, %s170
      %s185 = sphi 0, %s171
      %s191 = sphi 0, %s193
      %s194 = sphi 0, %s191
      %s195 = sphi 0, %s194
      %s211 = sphi 0, %s195
    $region4: #{pointnet_forward.2} parent=1 // loop_header_branch
      %18 = sbr.rel (%p16) target = $region8
    $region5: #{pointnet_forward.2} parent=1 // loop_body
      %s20 = ssub.s32 %s15, 1
      %s21 = ssub.s32 %s15, 2
      %s28 = sadd.s32 1, %s23
      %p29 = scmp.ge.s32.totalorder %s28, 1
      %s30 = scalar_select %p29, 0, %s28
      %s31 = sadd.s32 1, %s22
      %s32 = scalar_select %p29, %s31, %s22
      %p33 = scmp.ge.s32.totalorder %s32, 2
      %s34 = scalar_select %p33, 0, %s32
      %s35 = ssub.s32 %s22, %s34
      %s36 = ssub.s32 %s23, %s30
      %s37 = sor.u32 %s35, %s36
      %p38 = scmp.eq.s32.totalorder %s37, 0
      %s40 = sadd.s32 %s39, 1
      %s41 = scalar_select %p38, %s39, %s40
      %p44 = pneg %p38
      %p45 = scmp.eq.s32.totalorder %s15, 1
      %p46 = por %p44, %p45
      %p47 = scmp.ne.s32.totalorder %s39, %s42
      %p48 = scmp.eq.s32.totalorder %s15, 0
      %p49 = por %p47, %p48
      %p50 = scmp.ne.s32.totalorder %s39, %s42
      %p51 = scmp.eq.s32.totalorder %s20, 1
      %p52 = por %p50, %p51
      %p53 = scmp.ne.s32.totalorder %s42, %s43
      %p54 = scmp.eq.s32.totalorder %s20, 0
      %p55 = por %p53, %p54
      %p56 = scmp.ne.s32.totalorder %s42, %s43
      %p57 = scmp.eq.s32.totalorder %s21, 1
      %p58 = por %p56, %p57
      %p60 = scmp.ne.s32.totalorder %s43, %s59
      %p61 = scmp.eq.s32.totalorder %s21, 0
      %p62 = por %p60, %p61
      %s64 = sadd.s32 %s63, 1
      %p67 = scmp.eq.s32.totalorder %s15, 1
      %p68 = scmp.ne.s32.totalorder %s63, %s65
      %p69 = scmp.eq.s32.totalorder %s15, 0
      %p70 = por %p68, %p69
      %p71 = scmp.ne.s32.totalorder %s63, %s65
      %p72 = scmp.eq.s32.totalorder %s20, 1
      %p73 = por %p71, %p72
      %p74 = scmp.ne.s32.totalorder %s65, %s66
      %p75 = scmp.eq.s32.totalorder %s20, 0
      %p76 = por %p74, %p75
      %p77 = scmp.ne.s32.totalorder %s65, %s66
      %p78 = scmp.eq.s32.totalorder %s21, 1
      %p79 = por %p77, %p78
      %p81 = scmp.ne.s32.totalorder %s66, %s80
      %p82 = scmp.eq.s32.totalorder %s21, 0
      %p83 = por %p81, %p82
      %s85 = sadd.s32 %s84, 1
      %p88 = scmp.eq.s32.totalorder %s15, 1
      %p89 = scmp.ne.s32.totalorder %s84, %s86
      %p90 = scmp.eq.s32.totalorder %s15, 0
      %p91 = por %p89, %p90
      %p92 = scmp.ne.s32.totalorder %s84, %s86
      %p93 = scmp.eq.s32.totalorder %s20, 1
      %p94 = por %p92, %p93
      %p95 = scmp.ne.s32.totalorder %s86, %s87
      %p96 = scmp.eq.s32.totalorder %s20, 0
      %p97 = por %p95, %p96
      %p98 = scmp.ne.s32.totalorder %s86, %s87
      %p99 = scmp.eq.s32.totalorder %s21, 1
      %p100 = por %p98, %p99
      %p102 = scmp.ne.s32.totalorder %s87, %s101
      %p103 = scmp.eq.s32.totalorder %s21, 0
      %p104 = por %p102, %p103
      %s106 = sadd.s32 %s105, 1
      %p109 = scmp.eq.s32.totalorder %s15, 1
      %p110 = scmp.ne.s32.totalorder %s105, %s107
      %p111 = scmp.eq.s32.totalorder %s15, 0
      %p112 = por %p110, %p111
      %p113 = scmp.ne.s32.totalorder %s105, %s107
      %p114 = scmp.eq.s32.totalorder %s20, 1
      %p115 = por %p113, %p114
      %p116 = scmp.ne.s32.totalorder %s107, %s108
      %p117 = scmp.eq.s32.totalorder %s20, 0
      %p118 = por %p116, %p117
      %p119 = scmp.ne.s32.totalorder %s107, %s108
      %p120 = scmp.eq.s32.totalorder %s21, 1
      %p121 = por %p119, %p120
      %p123 = scmp.ne.s32.totalorder %s108, %s122
      %p124 = scmp.eq.s32.totalorder %s21, 0
      %p125 = por %p123, %p124
      %s127 = sadd.s32 %s126, 1
      %p130 = scmp.eq.s32.totalorder %s15, 1
      %p131 = scmp.ne.s32.totalorder %s126, %s128
      %p132 = scmp.eq.s32.totalorder %s15, 0
      %p133 = por %p131, %p132
      %p134 = scmp.ne.s32.totalorder %s126, %s128
      %p135 = scmp.eq.s32.totalorder %s20, 1
      %p136 = por %p134, %p135
      %p137 = scmp.ne.s32.totalorder %s128, %s129
      %p138 = scmp.eq.s32.totalorder %s20, 0
      %p139 = por %p137, %p138
      %p140 = scmp.ne.s32.totalorder %s128, %s129
      %p141 = scmp.eq.s32.totalorder %s21, 1
      %p142 = por %p140, %p141
      %p144 = scmp.ne.s32.totalorder %s129, %s143
      %p145 = scmp.eq.s32.totalorder %s21, 0
      %p146 = por %p144, %p145
      %s148 = sadd.s32 %s147, 1
      %p151 = scmp.eq.s32.totalorder %s15, 1
      %p152 = scmp.ne.s32.totalorder %s147, %s149
      %p153 = scmp.eq.s32.totalorder %s15, 0
      %p154 = por %p152, %p153
      %p155 = scmp.ne.s32.totalorder %s147, %s149
      %p156 = scmp.eq.s32.totalorder %s20, 1
      %p157 = por %p155, %p156
      %p158 = scmp.ne.s32.totalorder %s149, %s150
      %p159 = scmp.eq.s32.totalorder %s20, 0
      %p160 = por %p158, %p159
      %p161 = scmp.ne.s32.totalorder %s149, %s150
      %p162 = scmp.eq.s32.totalorder %s21, 1
      %p163 = por %p161, %p162
      %p165 = scmp.ne.s32.totalorder %s150, %s164
      %p166 = scmp.eq.s32.totalorder %s21, 0
      %p167 = por %p165, %p166
      %s169 = sadd.s32 %s168, 1
      %p172 = scmp.eq.s32.totalorder %s15, 1
      %p173 = scmp.ne.s32.totalorder %s168, %s170
      %p174 = scmp.eq.s32.totalorder %s15, 0
      %p175 = por %p173, %p174
      %p176 = scmp.ne.s32.totalorder %s168, %s170
      %p177 = scmp.eq.s32.totalorder %s20, 1
      %p178 = por %p176, %p177
      %p179 = scmp.ne.s32.totalorder %s170, %s171
      %p180 = scmp.eq.s32.totalorder %s20, 0
      %p181 = por %p179, %p180
      %p182 = scmp.ne.s32.totalorder %s170, %s171
      %p183 = scmp.eq.s32.totalorder %s21, 1
      %p184 = por %p182, %p183
      %p186 = scmp.ne.s32.totalorder %s171, %s185
      %p187 = scmp.eq.s32.totalorder %s21, 0
      %p188 = por %p186, %p187
      %s189 = ssub.s32 %s22, %s34
      %p190 = scmp.eq.s32.totalorder %s189, 0
      %s192 = sadd.s32 %s191, 1
      %s193 = scalar_select %p190, %s191, %s192
      %p196 = pneg %p190
      %p197 = scmp.eq.s32.totalorder %s15, 1
      %p198 = por %p196, %p197
      %p199 = scmp.ne.s32.totalorder %s191, %s194
      %p200 = scmp.eq.s32.totalorder %s15, 0
      %p201 = por %p199, %p200
      %p202 = scmp.ne.s32.totalorder %s191, %s194
      %p203 = scmp.eq.s32.totalorder %s20, 1
      %p204 = por %p202, %p203
      %p205 = scmp.ne.s32.totalorder %s194, %s195
      %p206 = scmp.eq.s32.totalorder %s20, 0
      %p207 = por %p205, %p206
      %p208 = scmp.ne.s32.totalorder %s194, %s195
      %p209 = scmp.eq.s32.totalorder %s21, 1
      %p210 = por %p208, %p209
      %p212 = scmp.ne.s32.totalorder %s195, %s211
      %p213 = scmp.eq.s32.totalorder %s21, 0
      %p214 = por %p212, %p213
      %p215 = scmp.le.s32.totalorder 1, %s15
      %p216 = scmp.lt.s32.totalorder %s15, 3
      %p217 = pnand %p215, %p216
      %p218 = pneg %p217
      // Predicated region
      $region9: #{pointnet_forward.2} parent=5 // pred_check
        _
      $region10: #{pointnet_forward.2} parent=5 // pred_check_branch
        %220 = sbr.rel (%p217) target = $region12
      $region11: #{pointnet_forward.2} parent=5 // pred_region
        %s221 = ssub.s32 %s15, 1
        // Predicated region
        $region13: #{pointnet_forward.2} parent=11 // pred_check
          %p222 = pneg %p76
        $region14: #{pointnet_forward.2} parent=11 // pred_check_branch
          %224 = sbr.rel (%p222) target = $region16
        $region15: #{pointnet_forward.2} parent=11 // pred_region
          _
        $region16: #{pointnet_forward.2} parent=11 // pred_fallthru
          _
        // Predicated region
        $region17: #{pointnet_forward.2} parent=11 // pred_check
          %p225 = pneg %p97
        $region18: #{pointnet_forward.2} parent=11 // pred_check_branch
          %227 = sbr.rel (%p225) target = $region20
        $region19: #{pointnet_forward.2} parent=11 // pred_region
          %s229 = ssub.s32 16, 16
          %230 = vsyncadd [#allocation3], %s229
          %s232 = sshll.u32 [#allocation2], 4
          %s233 = int_to_ptr.vmem [resolvable:$true] %s232
          %235 = dma.hbm_to_vmem [thread:$0]  %s2, 16, %s233, [#allocation3]
        $region20: #{pointnet_forward.2} parent=11 // pred_fallthru
          _
        // Predicated region
        $region21: #{pointnet_forward.2} parent=11 // pred_check
          %p236 = pneg %p118
        $region22: #{pointnet_forward.2} parent=11 // pred_check_branch
          %238 = sbr.rel (%p236) target = $region24
        $region23: #{pointnet_forward.2} parent=11 // pred_region
          _
        $region24: #{pointnet_forward.2} parent=11 // pred_fallthru
          _
        // Predicated region
        $region25: #{pointnet_forward.2} parent=11 // pred_check
          %p239 = pneg %p139
        $region26: #{pointnet_forward.2} parent=11 // pred_check_branch
          %241 = sbr.rel (%p239) target = $region28
        $region27: #{pointnet_forward.2} parent=11 // pred_region
          %s243 = ssub.s32 16, 16
          %244 = vsyncadd [#allocation5], %s243
          %s246 = sshll.u32 [#allocation4], 4
          %s247 = int_to_ptr.vmem [resolvable:$true] %s246
          %249 = dma.hbm_to_vmem [thread:$0]  %s4, 16, %s247, [#allocation5]
        $region28: #{pointnet_forward.2} parent=11 // pred_fallthru
          _
        // Predicated region
        $region29: #{pointnet_forward.2} parent=11 // pred_check
          %p250 = pneg %p160
        $region30: #{pointnet_forward.2} parent=11 // pred_check_branch
          %252 = sbr.rel (%p250) target = $region32
        $region31: #{pointnet_forward.2} parent=11 // pred_region
          _
        $region32: #{pointnet_forward.2} parent=11 // pred_fallthru
          _
        // Predicated region
        $region33: #{pointnet_forward.2} parent=11 // pred_check
          %p253 = pneg %p181
        $region34: #{pointnet_forward.2} parent=11 // pred_check_branch
          %255 = sbr.rel (%p253) target = $region36
        $region35: #{pointnet_forward.2} parent=11 // pred_region
          %s257 = ssub.s32 128, 128
          %258 = vsyncadd [#allocation5], %s257
          %s260 = sshll.u32 [#allocation6], 4
          %s261 = int_to_ptr.vmem [resolvable:$true] %s260
          %263 = dma.hbm_to_vmem [thread:$0]  %s6, 128, %s261, [#allocation5]
        $region36: #{pointnet_forward.2} parent=11 // pred_fallthru
          _
      $region12: #{pointnet_forward.2} parent=5 // pred_fallthru
        _
      %p264 = scmp.lt.s32.totalorder %s15, 2
      // Predicated region
      $region37: #{pointnet_forward.2} parent=5 // pred_check
        %p265 = pneg %p264
      $region38: #{pointnet_forward.2} parent=5 // pred_check_branch
        %267 = sbr.rel (%p265) target = $region40
      $region39: #{pointnet_forward.2} parent=5 // pred_region
        // Predicated region
        $region41: #{pointnet_forward.2} parent=39 // pred_check
          %p268 = pneg %p49
        $region42: #{pointnet_forward.2} parent=39 // pred_check_branch
          %270 = sbr.rel (%p268) target = $region44
        $region43: #{pointnet_forward.2} parent=39 // pred_region
          %s271 = smul.u32 16, %s23
          %p272 = scmp.lt.s32.totalorder %s22, 1
          %s273 = scalar_select %p272, %s22, 1
          %p274 = scmp.lt.s32.totalorder %s271, 15
          %s275 = scalar_select %p274, %s271, 15
          %s276 = smul.addr %s273, 16
          %s277 = sadd.s32 %s275, %s276
          %s278 = smul.addr %s277, 8
          %s279 = scalar_lea.vmem %s0, %s278
          %s280 = smul.u32 16, %s23
        $region44: #{pointnet_forward.2} parent=39 // pred_fallthru
          _
      $region40: #{pointnet_forward.2} parent=5 // pred_fallthru
        _
      %p281 = scmp.le.s32.totalorder 1, %s15
      %p282 = scmp.lt.s32.totalorder %s15, 3
      %p283 = pnand %p281, %p282
      %p284 = pneg %p283
      // Predicated region
      $region45: #{pointnet_forward.2} parent=5 // pred_check
        _
      $region46: #{pointnet_forward.2} parent=5 // pred_check_branch
        %286 = sbr.rel (%p283) target = $region48
      $region47: #{pointnet_forward.2} parent=5 // pred_region
        %s287 = ssub.s32 %s15, 1
        // Predicated region
        $region49: #{pointnet_forward.2} parent=47 // pred_check
          %p288 = pneg %p97
        $region50: #{pointnet_forward.2} parent=47 // pred_check_branch
          %290 = sbr.rel (%p288) target = $region52
        $region51: #{pointnet_forward.2} parent=47 // pred_region
          %291 = dma.done [#allocation3], 16
        $region52: #{pointnet_forward.2} parent=47 // pred_fallthru
          _
        // Predicated region
        $region53: #{pointnet_forward.2} parent=47 // pred_check
          %p292 = pneg %p139
        $region54: #{pointnet_forward.2} parent=47 // pred_check_branch
          %294 = sbr.rel (%p292) target = $region56
        $region55: #{pointnet_forward.2} parent=47 // pred_region
          %295 = dma.done [#allocation5], 16
        $region56: #{pointnet_forward.2} parent=47 // pred_fallthru
          _
        // Predicated region
        $region57: #{pointnet_forward.2} parent=47 // pred_check
          %p296 = pneg %p181
        $region58: #{pointnet_forward.2} parent=47 // pred_check_branch
          %298 = sbr.rel (%p296) target = $region60
        $region59: #{pointnet_forward.2} parent=47 // pred_region
          %299 = dma.done [#allocation5], 128
        $region60: #{pointnet_forward.2} parent=47 // pred_fallthru
          _
        %s300 = smul.u32 16, %s25
        %p301 = scmp.lt.s32.totalorder %s24, 1
        %s302 = scalar_select %p301, %s24, 1
        %p303 = scmp.lt.s32.totalorder %s300, 15
        %s304 = scalar_select %p303, %s300, 15
        %s305 = smul.addr %s302, 16
        %s306 = sadd.s32 %s304, %s305
        %s307 = smul.addr %s306, 8
        %s308 = scalar_lea.vmem %s0, %s307
        %p309 = pneg %p55
        %p310 = pneg %p52
        %p311 = pneg %p76
        %p312 = pneg %p73
        %p313 = pneg %p97
        %p314 = pneg %p94
        %p315 = pneg %p118
        %p316 = pneg %p115
        %p317 = pneg %p139
        %p318 = pneg %p136
        %p319 = pneg %p160
        %p320 = pneg %p157
        %p321 = pneg %p181
        %p322 = pneg %p178
        %p323 = pneg %p207
        %p324 = pneg %p204
        %p325 = scmp.lt.s32.totalorder %s24, 1
        %s326 = scalar_select %p325, %s24, 1
        %s327 = smul.addr %s326, 8
        %s328 = scalar_lea.vmem %s7, %s327
        %s329 = smul.u32 16, %s25
        %p330 = scmp.lt.s32.totalorder %s24, 1
        %s331 = scalar_select %p330, %s24, 1
        %p332 = scmp.lt.s32.totalorder %s329, 15
        %s333 = scalar_select %p332, %s329, 15
        %s334 = smul.addr %s331, 16
        %s335 = sadd.s32 %s333, %s334
        %s336 = smul.addr %s335, 8
        %s337 = scalar_lea.vmem %s0, %s336
        %s338 = smul.u32 16, %s25
        %p339 = scmp.lt.s32.totalorder %s24, 1
        %s340 = scalar_select %p339, %s24, 1
        %s341 = smul.addr %s340, 8
        %s342 = scalar_lea.vmem %s7, %s341
        %v344 = vld [vmem:[%s337] sm:$0xff]
        %v345 = vld [vmem:[%s337 + $0x8] sm:$0xff]
        %v346 = vld [vmem:[%s337 + $0x10] sm:$0xff]
        %v347 = vld [vmem:[%s337 + $0x18] sm:$0xff]
        %v348 = vld [vmem:[%s337 + $0x20] sm:$0xff]
        %v349 = vld [vmem:[%s337 + $0x28] sm:$0xff]
        %v350 = vld [vmem:[%s337 + $0x30] sm:$0xff]
        %v351 = vld [vmem:[%s337 + $0x38] sm:$0xff]
        %v352 = vld [vmem:[%s337 + $0x40] sm:$0xff]
        %v353 = vld [vmem:[%s337 + $0x48] sm:$0xff]
        %v354 = vld [vmem:[%s337 + $0x50] sm:$0xff]
        %v355 = vld [vmem:[%s337 + $0x58] sm:$0xff]
        %v356 = vld [vmem:[%s337 + $0x60] sm:$0xff]
        %v357 = vld [vmem:[%s337 + $0x68] sm:$0xff]
        %v358 = vld [vmem:[%s337 + $0x70] sm:$0xff]
        %v359 = vld [vmem:[%s337 + $0x78] sm:$0xff]
        %v360 = vpack.c.bf16 %v345, %v344
        %v361 = vpack.c.bf16 %v347, %v346
        %v362 = vpack.c.bf16 %v349, %v348
        %v363 = vpack.c.bf16 %v351, %v350
        %v364 = vpack.c.bf16 %v353, %v352
        %v365 = vpack.c.bf16 %v355, %v354
        %v366 = vpack.c.bf16 %v357, %v356
        %v367 = vpack.c.bf16 %v359, %v358
        %v368 = vld [vmem:[%s1] sm:$0xf]
        %v369 = vld [vmem:[#allocation2] sm:$0x1]
        %v371 = vlaneseq
        %v372 = vshrl.u32 %v371, 7
        %v373 = vsub.s32 0, %v372
        %v374 = vrot.slane %v369, %v373
        %vm376 = vcmask 64512
        %v378 = vsel %vm376, %v360, 0
        %v381 = vsel %vm376, %v361, 0
        %v384 = vsel %vm376, %v362, 0
        %v387 = vsel %vm376, %v363, 0
        %v390 = vsel %vm376, %v364, 0
        %v393 = vsel %vm376, %v365, 0
        %v396 = vsel %vm376, %v366, 0
        %v399 = vsel %vm376, %v367, 0
        %vm401 = vcmask 1043456
        %v403 = vsel %vm401, %v368, 0
        %405 = vmatprep.subr.bf16.mxu0 0
        %406 = vmatpush1.bf16.msra.mxu0 0
        %407 = vmatprep.subr.bf16.mxu0 0
        %408 = vmatpush1.bf16.msra.mxu0 0
        %409 = vmatprep.subr.bf16.mxu0 0
        %410 = vmatpush1.bf16.msra.mxu0 0
        %411 = vmatprep.subr.bf16.mxu0 0
        %412 = vmatpush1.bf16.msra.mxu0 0
        %413 = vmatprep.subr.bf16.mxu0 0
        %414 = vmatpush1.bf16.msra.mxu0 0
        %415 = vmatprep.subr.bf16.mxu0 0
        %416 = vmatpush1.bf16.msra.mxu0 0
        %417 = vmatprep.subr.bf16.mxu0 0
        %418 = vmatpush1.bf16.msra.mxu0 0
        %419 = vmatprep.subr.bf16.mxu0 0
        %420 = vmatpush1.bf16.msra.mxu0 %v403
        %421 = vmatprep.subr.bf16.mxu0 0
        %422 = vmatpush2.bf16.msra.mxu0 0
        %423 = vmatprep.subr.bf16.mxu0 0
        %424 = vmatpush2.bf16.msra.mxu0 0
        %425 = vmatprep.subr.bf16.mxu0 0
        %426 = vmatpush2.bf16.msra.mxu0 0
        %427 = vmatprep.subr.bf16.mxu0 0
        %428 = vmatpush2.bf16.msra.mxu0 0
        %429 = vmatprep.subr.bf16.mxu0 0
        %430 = vmatpush2.bf16.msra.mxu0 0
        %431 = vmatprep.subr.bf16.mxu0 0
        %432 = vmatpush2.bf16.msra.mxu0 0
        %433 = vmatprep.subr.bf16.mxu0 0
        %434 = vmatpush2.bf16.msra.mxu0 0
        %435 = vmatprep.subr.bf16.mxu0 0
        %436 = vmatpush2.bf16.msra.mxu0 0
        %437 = vmatprep.mubr.bf16.mxu0 0
        %438 = vmatmul.mubr.bf16.gmra.mxu0 %v378
        %v439 = vpop.f32.mrf.mxu0
        %v440 = vadd.f32 %v374, %v439
        %v441 = vpop.f32.mrf.mxu0
        %v442 = vpop.f32.mrf.mxu0
        %v443 = vadd.f32 %v374, %v442
        %v444 = vpop.f32.mrf.mxu0
        %445 = vmatprep.mubr.bf16.mxu0 0
        %446 = vmatmul.mubr.bf16.gmra.mxu0 %v381
        %v447 = vpop.f32.mrf.mxu0
        %v448 = vadd.f32 %v374, %v447
        %v449 = vpop.f32.mrf.mxu0
        %v450 = vpop.f32.mrf.mxu0
        %v451 = vadd.f32 %v374, %v450
        %v452 = vpop.f32.mrf.mxu0
        %453 = vmatprep.mubr.bf16.mxu0 0
        %454 = vmatmul.mubr.bf16.gmra.mxu0 %v384
        %v455 = vpop.f32.mrf.mxu0
        %v456 = vadd.f32 %v374, %v455
        %v457 = vpop.f32.mrf.mxu0
        %v458 = vpop.f32.mrf.mxu0
        %v459 = vadd.f32 %v374, %v458
        %v460 = vpop.f32.mrf.mxu0
        %461 = vmatprep.mubr.bf16.mxu0 0
        %462 = vmatmul.mubr.bf16.gmra.mxu0 %v387
        %v463 = vpop.f32.mrf.mxu0
        %v464 = vadd.f32 %v374, %v463
        %v465 = vpop.f32.mrf.mxu0
        %v466 = vpop.f32.mrf.mxu0
        %v467 = vadd.f32 %v374, %v466
        %v468 = vpop.f32.mrf.mxu0
        %469 = vmatprep.mubr.bf16.mxu0 0
        %470 = vmatmul.mubr.bf16.gmra.mxu0 %v390
        %v471 = vpop.f32.mrf.mxu0
        %v472 = vadd.f32 %v374, %v471
        %v473 = vpop.f32.mrf.mxu0
        %v474 = vpop.f32.mrf.mxu0
        %v475 = vadd.f32 %v374, %v474
        %v476 = vpop.f32.mrf.mxu0
        %477 = vmatprep.mubr.bf16.mxu0 0
        %478 = vmatmul.mubr.bf16.gmra.mxu0 %v393
        %v479 = vpop.f32.mrf.mxu0
        %v480 = vadd.f32 %v374, %v479
        %v481 = vpop.f32.mrf.mxu0
        %v482 = vpop.f32.mrf.mxu0
        %v483 = vadd.f32 %v374, %v482
        %v484 = vpop.f32.mrf.mxu0
        %485 = vmatprep.mubr.bf16.mxu0 0
        %486 = vmatmul.mubr.bf16.gmra.mxu0 %v396
        %v487 = vpop.f32.mrf.mxu0
        %v488 = vadd.f32 %v374, %v487
        %v489 = vpop.f32.mrf.mxu0
        %v490 = vpop.f32.mrf.mxu0
        %v491 = vadd.f32 %v374, %v490
        %v492 = vpop.f32.mrf.mxu0
        %493 = vmatprep.mubr.bf16.mxu0 0
        %494 = vmatmul.mubr.bf16.gmra.mxu0 %v399
        %v495 = vpop.f32.mrf.mxu0
        %v496 = vadd.f32 %v374, %v495
        %v497 = vpop.f32.mrf.mxu0
        %v498 = vpop.f32.mrf.mxu0
        %v499 = vadd.f32 %v374, %v498
        %v500 = vpop.f32.mrf.mxu0
        %501 = vdwg.mxu0
        %v502 = vmax.f32 %v440, 0.0
        %v503 = vmax.f32 %v443, 0.0
        %v504 = vmax.f32 %v448, 0.0
        %v505 = vmax.f32 %v451, 0.0
        %v506 = vmax.f32 %v456, 0.0
        %v507 = vmax.f32 %v459, 0.0
        %v508 = vmax.f32 %v464, 0.0
        %v509 = vmax.f32 %v467, 0.0
        %v510 = vmax.f32 %v472, 0.0
        %v511 = vmax.f32 %v475, 0.0
        %v512 = vmax.f32 %v480, 0.0
        %v513 = vmax.f32 %v483, 0.0
        %v514 = vmax.f32 %v488, 0.0
        %v515 = vmax.f32 %v491, 0.0
        %v516 = vmax.f32 %v496, 0.0
        %v517 = vmax.f32 %v499, 0.0
        %v518 = vpack.c.bf16 %v503, %v502
        %v519 = vpack.c.bf16 %v505, %v504
        %v520 = vpack.c.bf16 %v507, %v506
        %v521 = vpack.c.bf16 %v509, %v508
        %v522 = vpack.c.bf16 %v511, %v510
        %v523 = vpack.c.bf16 %v513, %v512
        %v524 = vpack.c.bf16 %v515, %v514
        %v525 = vpack.c.bf16 %v517, %v516
        %v526 = vld [vmem:[%s3] sm:$0xf]
        %v527 = vld [vmem:[%s3 + $0x4] sm:$0xf]
        %v528 = vld [vmem:[%s3 + $0x8] sm:$0xf]
        %v529 = vld [vmem:[%s3 + $0xc] sm:$0xf]
        %v530 = vld [vmem:[%s3 + $0x10] sm:$0xf]
        %v531 = vld [vmem:[%s3 + $0x14] sm:$0xf]
        %v532 = vld [vmem:[%s3 + $0x18] sm:$0xf]
        %v533 = vld [vmem:[%s3 + $0x1c] sm:$0xf]
        %v534 = vld [vmem:[#allocation4] sm:$0x1]
        %v536 = vlaneseq
        %v537 = vshrl.u32 %v536, 7
        %v538 = vsub.s32 0, %v537
        %v539 = vrot.slane %v534, %v538
        %v549 = vunpack.c.l.b16 %v526
        %v550 = vunpack.c.l.b16 %v527
        %v551 = vunpack.c.l.b16 %v528
        %v552 = vunpack.c.l.b16 %v529
        %v553 = vunpack.c.l.b16 %v530
        %v554 = vunpack.c.l.b16 %v531
        %v555 = vunpack.c.l.b16 %v532
        %v556 = vunpack.c.l.b16 %v533
        %v557 = vpack.c.b16 %v550, %v549
        %v558 = vpack.c.b16 %v552, %v551
        %v559 = vpack.c.b16 %v554, %v553
        %v560 = vpack.c.b16 %v556, %v555
        %vm565 = vcmask 523264
        %v567 = vsel %vm565, %v518, 0
        %v570 = vsel %vm565, %v519, 0
        %v573 = vsel %vm565, %v520, 0
        %v576 = vsel %vm565, %v521, 0
        %v579 = vsel %vm565, %v522, 0
        %v582 = vsel %vm565, %v523, 0
        %v585 = vsel %vm565, %v524, 0
        %v588 = vsel %vm565, %v525, 0
        %590 = vmatprep.subr.bf16.mxu0 0
        %591 = vmatpush1.bf16.msra.mxu0 0
        %592 = vmatprep.subr.bf16.mxu0 0
        %593 = vmatpush1.bf16.msra.mxu0 0
        %594 = vmatprep.subr.bf16.mxu0 0
        %595 = vmatpush1.bf16.msra.mxu0 0
        %596 = vmatprep.subr.bf16.mxu0 0
        %597 = vmatpush1.bf16.msra.mxu0 0
        %598 = vmatprep.subr.bf16.mxu0 0
        %599 = vmatpush1.bf16.msra.mxu0 %v560
        %600 = vmatprep.subr.bf16.mxu0 0
        %601 = vmatpush1.bf16.msra.mxu0 %v559
        %602 = vmatprep.subr.bf16.mxu0 0
        %603 = vmatpush1.bf16.msra.mxu0 %v558
        %604 = vmatprep.subr.bf16.mxu0 0
        %605 = vmatpush1.bf16.msra.mxu0 %v557
        %606 = vmatprep.subr.bf16.mxu0 0
        %607 = vmatpush2.bf16.msra.mxu0 0
        %608 = vmatprep.subr.bf16.mxu0 0
        %609 = vmatpush2.bf16.msra.mxu0 0
        %610 = vmatprep.subr.bf16.mxu0 0
        %611 = vmatpush2.bf16.msra.mxu0 0
        %612 = vmatprep.subr.bf16.mxu0 0
        %613 = vmatpush2.bf16.msra.mxu0 0
        %614 = vmatprep.subr.bf16.mxu0 0
        %615 = vmatpush2.bf16.msra.mxu0 0
        %616 = vmatprep.subr.bf16.mxu0 0
        %617 = vmatpush2.bf16.msra.mxu0 0
        %618 = vmatprep.subr.bf16.mxu0 0
        %619 = vmatpush2.bf16.msra.mxu0 0
        %620 = vmatprep.subr.bf16.mxu0 0
        %621 = vmatpush2.bf16.msra.mxu0 0
        %622 = vmatprep.mubr.bf16.mxu0 0
        %623 = vmatmul.mubr.bf16.gmra.mxu0 %v567
        %v624 = vpop.f32.mrf.mxu0
        %v625 = vadd.f32 %v539, %v624
        %v626 = vpop.f32.mrf.mxu0
        %v627 = vpop.f32.mrf.mxu0
        %v628 = vadd.f32 %v539, %v627
        %v629 = vpop.f32.mrf.mxu0
        %630 = vmatprep.mubr.bf16.mxu0 0
        %631 = vmatmul.mubr.bf16.gmra.mxu0 %v570
        %v632 = vpop.f32.mrf.mxu0
        %v633 = vadd.f32 %v539, %v632
        %v634 = vpop.f32.mrf.mxu0
        %v635 = vpop.f32.mrf.mxu0
        %v636 = vadd.f32 %v539, %v635
        %v637 = vpop.f32.mrf.mxu0
        %638 = vmatprep.mubr.bf16.mxu0 0
        %639 = vmatmul.mubr.bf16.gmra.mxu0 %v573
        %v640 = vpop.f32.mrf.mxu0
        %v641 = vadd.f32 %v539, %v640
        %v642 = vpop.f32.mrf.mxu0
        %v643 = vpop.f32.mrf.mxu0
        %v644 = vadd.f32 %v539, %v643
        %v645 = vpop.f32.mrf.mxu0
        %646 = vmatprep.mubr.bf16.mxu0 0
        %647 = vmatmul.mubr.bf16.gmra.mxu0 %v576
        %v648 = vpop.f32.mrf.mxu0
        %v649 = vadd.f32 %v539, %v648
        %v650 = vpop.f32.mrf.mxu0
        %v651 = vpop.f32.mrf.mxu0
        %v652 = vadd.f32 %v539, %v651
        %v653 = vpop.f32.mrf.mxu0
        %654 = vmatprep.mubr.bf16.mxu0 0
        %655 = vmatmul.mubr.bf16.gmra.mxu0 %v579
        %v656 = vpop.f32.mrf.mxu0
        %v657 = vadd.f32 %v539, %v656
        %v658 = vpop.f32.mrf.mxu0
        %v659 = vpop.f32.mrf.mxu0
        %v660 = vadd.f32 %v539, %v659
        %v661 = vpop.f32.mrf.mxu0
        %662 = vmatprep.mubr.bf16.mxu0 0
        %663 = vmatmul.mubr.bf16.gmra.mxu0 %v582
        %v664 = vpop.f32.mrf.mxu0
        %v665 = vadd.f32 %v539, %v664
        %v666 = vpop.f32.mrf.mxu0
        %v667 = vpop.f32.mrf.mxu0
        %v668 = vadd.f32 %v539, %v667
        %v669 = vpop.f32.mrf.mxu0
        %670 = vmatprep.mubr.bf16.mxu0 0
        %671 = vmatmul.mubr.bf16.gmra.mxu0 %v585
        %v672 = vpop.f32.mrf.mxu0
        %v673 = vadd.f32 %v539, %v672
        %v674 = vpop.f32.mrf.mxu0
        %v675 = vpop.f32.mrf.mxu0
        %v676 = vadd.f32 %v539, %v675
        %v677 = vpop.f32.mrf.mxu0
        %678 = vmatprep.mubr.bf16.mxu0 0
        %679 = vmatmul.mubr.bf16.gmra.mxu0 %v588
        %v680 = vpop.f32.mrf.mxu0
        %v681 = vadd.f32 %v539, %v680
        %v682 = vpop.f32.mrf.mxu0
        %v683 = vpop.f32.mrf.mxu0
        %v684 = vadd.f32 %v539, %v683
        %v685 = vpop.f32.mrf.mxu0
        %686 = vdwg.mxu0
        %v687 = vmax.f32 %v625, 0.0
        %v688 = vmax.f32 %v628, 0.0
        %v689 = vmax.f32 %v633, 0.0
        %v690 = vmax.f32 %v636, 0.0
        %v691 = vmax.f32 %v641, 0.0
        %v692 = vmax.f32 %v644, 0.0
        %v693 = vmax.f32 %v649, 0.0
        %v694 = vmax.f32 %v652, 0.0
        %v695 = vmax.f32 %v657, 0.0
        %v696 = vmax.f32 %v660, 0.0
        %v697 = vmax.f32 %v665, 0.0
        %v698 = vmax.f32 %v668, 0.0
        %v699 = vmax.f32 %v673, 0.0
        %v700 = vmax.f32 %v676, 0.0
        %v701 = vmax.f32 %v681, 0.0
        %v702 = vmax.f32 %v684, 0.0
        %v703 = vpack.c.bf16 %v688, %v687
        %v704 = vpack.c.bf16 %v690, %v689
        %v705 = vpack.c.bf16 %v692, %v691
        %v706 = vpack.c.bf16 %v694, %v693
        %v707 = vpack.c.bf16 %v696, %v695
        %v708 = vpack.c.bf16 %v698, %v697
        %v709 = vpack.c.bf16 %v700, %v699
        %v710 = vpack.c.bf16 %v702, %v701
        %v711 = vld [vmem:[%s5] sm:$0xff]
        %v712 = vld [vmem:[%s5 + $0x8] sm:$0xff]
        %v713 = vld [vmem:[%s5 + $0x10] sm:$0xff]
        %v714 = vld [vmem:[%s5 + $0x18] sm:$0xff]
        %v715 = vld [vmem:[%s5 + $0x20] sm:$0xff]
        %v716 = vld [vmem:[%s5 + $0x28] sm:$0xff]
        %v717 = vld [vmem:[%s5 + $0x30] sm:$0xff]
        %v718 = vld [vmem:[%s5 + $0x38] sm:$0xff]
        %v719 = vld [vmem:[%s5 + $0x40] sm:$0xff]
        %v720 = vld [vmem:[%s5 + $0x48] sm:$0xff]
        %v721 = vld [vmem:[%s5 + $0x50] sm:$0xff]
        %v722 = vld [vmem:[%s5 + $0x58] sm:$0xff]
        %v723 = vld [vmem:[%s5 + $0x60] sm:$0xff]
        %v724 = vld [vmem:[%s5 + $0x68] sm:$0xff]
        %v725 = vld [vmem:[%s5 + $0x70] sm:$0xff]
        %v726 = vld [vmem:[%s5 + $0x78] sm:$0xff]
        %v727 = vld [vmem:[%s5 + $0x80] sm:$0xff]
        %v728 = vld [vmem:[%s5 + $0x88] sm:$0xff]
        %v729 = vld [vmem:[%s5 + $0x90] sm:$0xff]
        %v730 = vld [vmem:[%s5 + $0x98] sm:$0xff]
        %v731 = vld [vmem:[%s5 + $0xa0] sm:$0xff]
        %v732 = vld [vmem:[%s5 + $0xa8] sm:$0xff]
        %v733 = vld [vmem:[%s5 + $0xb0] sm:$0xff]
        %v734 = vld [vmem:[%s5 + $0xb8] sm:$0xff]
        %v735 = vld [vmem:[%s5 + $0xc0] sm:$0xff]
        %v736 = vld [vmem:[%s5 + $0xc8] sm:$0xff]
        %v737 = vld [vmem:[%s5 + $0xd0] sm:$0xff]
        %v738 = vld [vmem:[%s5 + $0xd8] sm:$0xff]
        %v739 = vld [vmem:[%s5 + $0xe0] sm:$0xff]
        %v740 = vld [vmem:[%s5 + $0xe8] sm:$0xff]
        %v741 = vld [vmem:[%s5 + $0xf0] sm:$0xff]
        %v742 = vld [vmem:[%s5 + $0xf8] sm:$0xff]
        %v743 = vld [vmem:[%s5 + $0x100] sm:$0xff]
        %v744 = vld [vmem:[%s5 + $0x108] sm:$0xff]
        %v745 = vld [vmem:[%s5 + $0x110] sm:$0xff]
        %v746 = vld [vmem:[%s5 + $0x118] sm:$0xff]
        %v747 = vld [vmem:[%s5 + $0x120] sm:$0xff]
        %v748 = vld [vmem:[%s5 + $0x128] sm:$0xff]
        %v749 = vld [vmem:[%s5 + $0x130] sm:$0xff]
        %v750 = vld [vmem:[%s5 + $0x138] sm:$0xff]
        %v751 = vld [vmem:[%s5 + $0x140] sm:$0xff]
        %v752 = vld [vmem:[%s5 + $0x148] sm:$0xff]
        %v753 = vld [vmem:[%s5 + $0x150] sm:$0xff]
        %v754 = vld [vmem:[%s5 + $0x158] sm:$0xff]
        %v755 = vld [vmem:[%s5 + $0x160] sm:$0xff]
        %v756 = vld [vmem:[%s5 + $0x168] sm:$0xff]
        %v757 = vld [vmem:[%s5 + $0x170] sm:$0xff]
        %v758 = vld [vmem:[%s5 + $0x178] sm:$0xff]
        %v759 = vld [vmem:[%s5 + $0x180] sm:$0xff]
        %v760 = vld [vmem:[%s5 + $0x188] sm:$0xff]
        %v761 = vld [vmem:[%s5 + $0x190] sm:$0xff]
        %v762 = vld [vmem:[%s5 + $0x198] sm:$0xff]
        %v763 = vld [vmem:[%s5 + $0x1a0] sm:$0xff]
        %v764 = vld [vmem:[%s5 + $0x1a8] sm:$0xff]
        %v765 = vld [vmem:[%s5 + $0x1b0] sm:$0xff]
        %v766 = vld [vmem:[%s5 + $0x1b8] sm:$0xff]
        %v767 = vld [vmem:[%s5 + $0x1c0] sm:$0xff]
        %v768 = vld [vmem:[%s5 + $0x1c8] sm:$0xff]
        %v769 = vld [vmem:[%s5 + $0x1d0] sm:$0xff]
        %v770 = vld [vmem:[%s5 + $0x1d8] sm:$0xff]
        %v771 = vld [vmem:[%s5 + $0x1e0] sm:$0xff]
        %v772 = vld [vmem:[%s5 + $0x1e8] sm:$0xff]
        %v773 = vld [vmem:[%s5 + $0x1f0] sm:$0xff]
        %v774 = vld [vmem:[%s5 + $0x1f8] sm:$0xff]
        %v775 = vld [vmem:[#allocation6] sm:$0xff]
        %v777 = vlaneseq
        %v778 = vshrl.u32 %v777, 7
        %v779 = vsub.s32 0, %v778
        %v780 = vrot.slane %v775, %v779
        %v781 = vlaneseq
        %v782 = vshrl.u32 %v781, 7
        %v783 = vsub.s32 1, %v782
        %v784 = vrot.slane %v775, %v783
        %v785 = vlaneseq
        %v786 = vshrl.u32 %v785, 7
        %v787 = vsub.s32 2, %v786
        %v788 = vrot.slane %v775, %v787
        %v789 = vlaneseq
        %v790 = vshrl.u32 %v789, 7
        %v791 = vsub.s32 3, %v790
        %v792 = vrot.slane %v775, %v791
        %v793 = vlaneseq
        %v794 = vshrl.u32 %v793, 7
        %v795 = vsub.s32 4, %v794
        %v796 = vrot.slane %v775, %v795
        %v797 = vlaneseq
        %v798 = vshrl.u32 %v797, 7
        %v799 = vsub.s32 5, %v798
        %v800 = vrot.slane %v775, %v799
        %v801 = vlaneseq
        %v802 = vshrl.u32 %v801, 7
        %v803 = vsub.s32 6, %v802
        %v804 = vrot.slane %v775, %v803
        %v805 = vlaneseq
        %v806 = vshrl.u32 %v805, 7
        %v807 = vsub.s32 7, %v806
        %v808 = vrot.slane %v775, %v807
        %v881 = vunpack.c.l.b16 %v711
        %v882 = vunpack.c.h.b16 %v711
        %v883 = vunpack.c.l.b16 %v712
        %v884 = vunpack.c.h.b16 %v712
        %v885 = vunpack.c.l.b16 %v713
        %v886 = vunpack.c.h.b16 %v713
        %v887 = vunpack.c.l.b16 %v714
        %v888 = vunpack.c.h.b16 %v714
        %v889 = vunpack.c.l.b16 %v715
        %v890 = vunpack.c.h.b16 %v715
        %v891 = vunpack.c.l.b16 %v716
        %v892 = vunpack.c.h.b16 %v716
        %v893 = vunpack.c.l.b16 %v717
        %v894 = vunpack.c.h.b16 %v717
        %v895 = vunpack.c.l.b16 %v718
        %v896 = vunpack.c.h.b16 %v718
        %v897 = vunpack.c.l.b16 %v719
        %v898 = vunpack.c.h.b16 %v719
        %v899 = vunpack.c.l.b16 %v720
        %v900 = vunpack.c.h.b16 %v720
        %v901 = vunpack.c.l.b16 %v721
        %v902 = vunpack.c.h.b16 %v721
        %v903 = vunpack.c.l.b16 %v722
        %v904 = vunpack.c.h.b16 %v722
        %v905 = vunpack.c.l.b16 %v723
        %v906 = vunpack.c.h.b16 %v723
        %v907 = vunpack.c.l.b16 %v724
        %v908 = vunpack.c.h.b16 %v724
        %v909 = vunpack.c.l.b16 %v725
        %v910 = vunpack.c.h.b16 %v725
        %v911 = vunpack.c.l.b16 %v726
        %v912 = vunpack.c.h.b16 %v726
        %v913 = vunpack.c.l.b16 %v727
        %v914 = vunpack.c.h.b16 %v727
        %v915 = vunpack.c.l.b16 %v728
        %v916 = vunpack.c.h.b16 %v728
        %v917 = vunpack.c.l.b16 %v729
        %v918 = vunpack.c.h.b16 %v729
        %v919 = vunpack.c.l.b16 %v730
        %v920 = vunpack.c.h.b16 %v730
        %v921 = vunpack.c.l.b16 %v731
        %v922 = vunpack.c.h.b16 %v731
        %v923 = vunpack.c.l.b16 %v732
        %v924 = vunpack.c.h.b16 %v732
        %v925 = vunpack.c.l.b16 %v733
        %v926 = vunpack.c.h.b16 %v733
        %v927 = vunpack.c.l.b16 %v734
        %v928 = vunpack.c.h.b16 %v734
        %v929 = vunpack.c.l.b16 %v735
        %v930 = vunpack.c.h.b16 %v735
        %v931 = vunpack.c.l.b16 %v736
        %v932 = vunpack.c.h.b16 %v736
        %v933 = vunpack.c.l.b16 %v737
        %v934 = vunpack.c.h.b16 %v737
        %v935 = vunpack.c.l.b16 %v738
        %v936 = vunpack.c.h.b16 %v738
        %v937 = vunpack.c.l.b16 %v739
        %v938 = vunpack.c.h.b16 %v739
        %v939 = vunpack.c.l.b16 %v740
        %v940 = vunpack.c.h.b16 %v740
        %v941 = vunpack.c.l.b16 %v741
        %v942 = vunpack.c.h.b16 %v741
        %v943 = vunpack.c.l.b16 %v742
        %v944 = vunpack.c.h.b16 %v742
        %v945 = vunpack.c.l.b16 %v743
        %v946 = vunpack.c.h.b16 %v743
        %v947 = vunpack.c.l.b16 %v744
        %v948 = vunpack.c.h.b16 %v744
        %v949 = vunpack.c.l.b16 %v745
        %v950 = vunpack.c.h.b16 %v745
        %v951 = vunpack.c.l.b16 %v746
        %v952 = vunpack.c.h.b16 %v746
        %v953 = vunpack.c.l.b16 %v747
        %v954 = vunpack.c.h.b16 %v747
        %v955 = vunpack.c.l.b16 %v748
        %v956 = vunpack.c.h.b16 %v748
        %v957 = vunpack.c.l.b16 %v749
        %v958 = vunpack.c.h.b16 %v749
        %v959 = vunpack.c.l.b16 %v750
        %v960 = vunpack.c.h.b16 %v750
        %v961 = vunpack.c.l.b16 %v751
        %v962 = vunpack.c.h.b16 %v751
        %v963 = vunpack.c.l.b16 %v752
        %v964 = vunpack.c.h.b16 %v752
        %v965 = vunpack.c.l.b16 %v753
        %v966 = vunpack.c.h.b16 %v753
        %v967 = vunpack.c.l.b16 %v754
        %v968 = vunpack.c.h.b16 %v754
        %v969 = vunpack.c.l.b16 %v755
        %v970 = vunpack.c.h.b16 %v755
        %v971 = vunpack.c.l.b16 %v756
        %v972 = vunpack.c.h.b16 %v756
        %v973 = vunpack.c.l.b16 %v757
        %v974 = vunpack.c.h.b16 %v757
        %v975 = vunpack.c.l.b16 %v758
        %v976 = vunpack.c.h.b16 %v758
        %v977 = vunpack.c.l.b16 %v759
        %v978 = vunpack.c.h.b16 %v759
        %v979 = vunpack.c.l.b16 %v760
        %v980 = vunpack.c.h.b16 %v760
        %v981 = vunpack.c.l.b16 %v761
        %v982 = vunpack.c.h.b16 %v761
        %v983 = vunpack.c.l.b16 %v762
        %v984 = vunpack.c.h.b16 %v762
        %v985 = vunpack.c.l.b16 %v763
        %v986 = vunpack.c.h.b16 %v763
        %v987 = vunpack.c.l.b16 %v764
        %v988 = vunpack.c.h.b16 %v764
        %v989 = vunpack.c.l.b16 %v765
        %v990 = vunpack.c.h.b16 %v765
        %v991 = vunpack.c.l.b16 %v766
        %v992 = vunpack.c.h.b16 %v766
        %v993 = vunpack.c.l.b16 %v767
        %v994 = vunpack.c.h.b16 %v767
        %v995 = vunpack.c.l.b16 %v768
        %v996 = vunpack.c.h.b16 %v768
        %v997 = vunpack.c.l.b16 %v769
        %v998 = vunpack.c.h.b16 %v769
        %v999 = vunpack.c.l.b16 %v770
        %v1000 = vunpack.c.h.b16 %v770
        %v1001 = vunpack.c.l.b16 %v771
        %v1002 = vunpack.c.h.b16 %v771
        %v1003 = vunpack.c.l.b16 %v772
        %v1004 = vunpack.c.h.b16 %v772
        %v1005 = vunpack.c.l.b16 %v773
        %v1006 = vunpack.c.h.b16 %v773
        %v1007 = vunpack.c.l.b16 %v774
        %v1008 = vunpack.c.h.b16 %v774
        %v1009 = vpack.c.b16 %v889, %v881
        %v1010 = vpack.c.b16 %v890, %v882
        %v1011 = vpack.c.b16 %v891, %v883
        %v1012 = vpack.c.b16 %v892, %v884
        %v1013 = vpack.c.b16 %v893, %v885
        %v1014 = vpack.c.b16 %v894, %v886
        %v1015 = vpack.c.b16 %v895, %v887
        %v1016 = vpack.c.b16 %v896, %v888
        %v1017 = vpack.c.b16 %v905, %v897
        %v1018 = vpack.c.b16 %v906, %v898
        %v1019 = vpack.c.b16 %v907, %v899
        %v1020 = vpack.c.b16 %v908, %v900
        %v1021 = vpack.c.b16 %v909, %v901
        %v1022 = vpack.c.b16 %v910, %v902
        %v1023 = vpack.c.b16 %v911, %v903
        %v1024 = vpack.c.b16 %v912, %v904
        %v1025 = vpack.c.b16 %v921, %v913
        %v1026 = vpack.c.b16 %v922, %v914
        %v1027 = vpack.c.b16 %v923, %v915
        %v1028 = vpack.c.b16 %v924, %v916
        %v1029 = vpack.c.b16 %v925, %v917
        %v1030 = vpack.c.b16 %v926, %v918
        %v1031 = vpack.c.b16 %v927, %v919
        %v1032 = vpack.c.b16 %v928, %v920
        %v1033 = vpack.c.b16 %v937, %v929
        %v1034 = vpack.c.b16 %v938, %v930
        %v1035 = vpack.c.b16 %v939, %v931
        %v1036 = vpack.c.b16 %v940, %v932
        %v1037 = vpack.c.b16 %v941, %v933
        %v1038 = vpack.c.b16 %v942, %v934
        %v1039 = vpack.c.b16 %v943, %v935
        %v1040 = vpack.c.b16 %v944, %v936
        %v1041 = vpack.c.b16 %v953, %v945
        %v1042 = vpack.c.b16 %v954, %v946
        %v1043 = vpack.c.b16 %v955, %v947
        %v1044 = vpack.c.b16 %v956, %v948
        %v1045 = vpack.c.b16 %v957, %v949
        %v1046 = vpack.c.b16 %v958, %v950
        %v1047 = vpack.c.b16 %v959, %v951
        %v1048 = vpack.c.b16 %v960, %v952
        %v1049 = vpack.c.b16 %v969, %v961
        %v1050 = vpack.c.b16 %v970, %v962
        %v1051 = vpack.c.b16 %v971, %v963
        %v1052 = vpack.c.b16 %v972, %v964
        %v1053 = vpack.c.b16 %v973, %v965
        %v1054 = vpack.c.b16 %v974, %v966
        %v1055 = vpack.c.b16 %v975, %v967
        %v1056 = vpack.c.b16 %v976, %v968
        %v1057 = vpack.c.b16 %v985, %v977
        %v1058 = vpack.c.b16 %v986, %v978
        %v1059 = vpack.c.b16 %v987, %v979
        %v1060 = vpack.c.b16 %v988, %v980
        %v1061 = vpack.c.b16 %v989, %v981
        %v1062 = vpack.c.b16 %v990, %v982
        %v1063 = vpack.c.b16 %v991, %v983
        %v1064 = vpack.c.b16 %v992, %v984
        %v1065 = vpack.c.b16 %v1001, %v993
        %v1066 = vpack.c.b16 %v1002, %v994
        %v1067 = vpack.c.b16 %v1003, %v995
        %v1068 = vpack.c.b16 %v1004, %v996
        %v1069 = vpack.c.b16 %v1005, %v997
        %v1070 = vpack.c.b16 %v1006, %v998
        %v1071 = vpack.c.b16 %v1007, %v999
        %v1072 = vpack.c.b16 %v1008, %v1000
        %1137 = vmatprep.subr.bf16.mxu0 %v1066
        %1138 = vmatpush1.bf16.msra.mxu0 %v1065
        %1139 = vmatprep.subr.bf16.mxu0 %v1058
        %1140 = vmatpush1.bf16.msra.mxu0 %v1057
        %1141 = vmatprep.subr.bf16.mxu0 %v1050
        %1142 = vmatpush1.bf16.msra.mxu0 %v1049
        %1143 = vmatprep.subr.bf16.mxu0 %v1042
        %1144 = vmatpush1.bf16.msra.mxu0 %v1041
        %1145 = vmatprep.subr.bf16.mxu0 %v1034
        %1146 = vmatpush1.bf16.msra.mxu0 %v1033
        %1147 = vmatprep.subr.bf16.mxu0 %v1026
        %1148 = vmatpush1.bf16.msra.mxu0 %v1025
        %1149 = vmatprep.subr.bf16.mxu0 %v1018
        %1150 = vmatpush1.bf16.msra.mxu0 %v1017
        %1151 = vmatprep.subr.bf16.mxu0 %v1010
        %1152 = vmatpush1.bf16.msra.mxu0 %v1009
        %1153 = vmatprep.subr.bf16.mxu0 0
        %1154 = vmatpush2.bf16.msra.mxu0 0
        %1155 = vmatprep.subr.bf16.mxu0 0
        %1156 = vmatpush2.bf16.msra.mxu0 0
        %1157 = vmatprep.subr.bf16.mxu0 0
        %1158 = vmatpush2.bf16.msra.mxu0 0
        %1159 = vmatprep.subr.bf16.mxu0 0
        %1160 = vmatpush2.bf16.msra.mxu0 0
        %1161 = vmatprep.subr.bf16.mxu0 0
        %1162 = vmatpush2.bf16.msra.mxu0 0
        %1163 = vmatprep.subr.bf16.mxu0 0
        %1164 = vmatpush2.bf16.msra.mxu0 0
        %1165 = vmatprep.subr.bf16.mxu0 0
        %1166 = vmatpush2.bf16.msra.mxu0 0
        %1167 = vmatprep.subr.bf16.mxu0 0
        %1168 = vmatpush2.bf16.msra.mxu0 0
        %1169 = vmatprep.mubr.bf16.mxu0 0
        %1170 = vmatmul.mubr.bf16.gmra.mxu0 %v703
        %v1171 = vpop.f32.mrf.mxu0
        %v1172 = vadd.f32 %v780, %v1171
        %v1173 = vpop.f32.mrf.mxu0
        %v1174 = vadd.f32 %v784, %v1173
        %v1175 = vpop.f32.mrf.mxu0
        %v1176 = vadd.f32 %v780, %v1175
        %v1177 = vpop.f32.mrf.mxu0
        %v1178 = vadd.f32 %v784, %v1177
        %1179 = vmatprep.mubr.bf16.mxu0 0
        %1180 = vmatmul.mubr.bf16.gmra.mxu0 %v704
        %v1181 = vpop.f32.mrf.mxu0
        %v1182 = vadd.f32 %v780, %v1181
        %v1183 = vpop.f32.mrf.mxu0
        %v1184 = vadd.f32 %v784, %v1183
        %v1185 = vpop.f32.mrf.mxu0
        %v1186 = vadd.f32 %v780, %v1185
        %v1187 = vpop.f32.mrf.mxu0
        %v1188 = vadd.f32 %v784, %v1187
        %1189 = vmatprep.mubr.bf16.mxu0 0
        %1190 = vmatmul.mubr.bf16.gmra.mxu0 %v705
        %v1191 = vpop.f32.mrf.mxu0
        %v1192 = vadd.f32 %v780, %v1191
        %v1193 = vpop.f32.mrf.mxu0
        %v1194 = vadd.f32 %v784, %v1193
        %v1195 = vpop.f32.mrf.mxu0
        %v1196 = vadd.f32 %v780, %v1195
        %v1197 = vpop.f32.mrf.mxu0
        %v1198 = vadd.f32 %v784, %v1197
        %1199 = vmatprep.mubr.bf16.mxu0 0
        %1200 = vmatmul.mubr.bf16.gmra.mxu0 %v706
        %v1201 = vpop.f32.mrf.mxu0
        %v1202 = vadd.f32 %v780, %v1201
        %v1203 = vpop.f32.mrf.mxu0
        %v1204 = vadd.f32 %v784, %v1203
        %v1205 = vpop.f32.mrf.mxu0
        %v1206 = vadd.f32 %v780, %v1205
        %v1207 = vpop.f32.mrf.mxu0
        %v1208 = vadd.f32 %v784, %v1207
        %1209 = vmatprep.mubr.bf16.mxu0 0
        %1210 = vmatmul.mubr.bf16.gmra.mxu0 %v707
        %v1211 = vpop.f32.mrf.mxu0
        %v1212 = vadd.f32 %v780, %v1211
        %v1213 = vpop.f32.mrf.mxu0
        %v1214 = vadd.f32 %v784, %v1213
        %v1215 = vpop.f32.mrf.mxu0
        %v1216 = vadd.f32 %v780, %v1215
        %v1217 = vpop.f32.mrf.mxu0
        %v1218 = vadd.f32 %v784, %v1217
        %1219 = vmatprep.mubr.bf16.mxu0 0
        %1220 = vmatmul.mubr.bf16.gmra.mxu0 %v708
        %v1221 = vpop.f32.mrf.mxu0
        %v1222 = vadd.f32 %v780, %v1221
        %v1223 = vpop.f32.mrf.mxu0
        %v1224 = vadd.f32 %v784, %v1223
        %v1225 = vpop.f32.mrf.mxu0
        %v1226 = vadd.f32 %v780, %v1225
        %v1227 = vpop.f32.mrf.mxu0
        %v1228 = vadd.f32 %v784, %v1227
        %1229 = vmatprep.mubr.bf16.mxu0 0
        %1230 = vmatmul.mubr.bf16.gmra.mxu0 %v709
        %v1231 = vpop.f32.mrf.mxu0
        %v1232 = vadd.f32 %v780, %v1231
        %v1233 = vpop.f32.mrf.mxu0
        %v1234 = vadd.f32 %v784, %v1233
        %v1235 = vpop.f32.mrf.mxu0
        %v1236 = vadd.f32 %v780, %v1235
        %v1237 = vpop.f32.mrf.mxu0
        %v1238 = vadd.f32 %v784, %v1237
        %1239 = vmatprep.mubr.bf16.mxu0 0
        %1240 = vmatmul.mubr.bf16.gmra.mxu0 %v710
        %v1241 = vpop.f32.mrf.mxu0
        %v1242 = vadd.f32 %v780, %v1241
        %v1243 = vpop.f32.mrf.mxu0
        %v1244 = vadd.f32 %v784, %v1243
        %v1245 = vpop.f32.mrf.mxu0
        %v1246 = vadd.f32 %v780, %v1245
        %v1247 = vpop.f32.mrf.mxu0
        %v1248 = vadd.f32 %v784, %v1247
        %1249 = vdwg.mxu0
        %1250 = vmatprep.subr.bf16.mxu0 %v1068
        %1251 = vmatpush1.bf16.msra.mxu0 %v1067
        %1252 = vmatprep.subr.bf16.mxu0 %v1060
        %1253 = vmatpush1.bf16.msra.mxu0 %v1059
        %1254 = vmatprep.subr.bf16.mxu0 %v1052
        %1255 = vmatpush1.bf16.msra.mxu0 %v1051
        %1256 = vmatprep.subr.bf16.mxu0 %v1044
        %1257 = vmatpush1.bf16.msra.mxu0 %v1043
        %1258 = vmatprep.subr.bf16.mxu0 %v1036
        %1259 = vmatpush1.bf16.msra.mxu0 %v1035
        %1260 = vmatprep.subr.bf16.mxu0 %v1028
        %1261 = vmatpush1.bf16.msra.mxu0 %v1027
        %1262 = vmatprep.subr.bf16.mxu0 %v1020
        %1263 = vmatpush1.bf16.msra.mxu0 %v1019
        %1264 = vmatprep.subr.bf16.mxu0 %v1012
        %1265 = vmatpush1.bf16.msra.mxu0 %v1011
        %1266 = vmatprep.subr.bf16.mxu0 0
        %1267 = vmatpush2.bf16.msra.mxu0 0
        %1268 = vmatprep.subr.bf16.mxu0 0
        %1269 = vmatpush2.bf16.msra.mxu0 0
        %1270 = vmatprep.subr.bf16.mxu0 0
        %1271 = vmatpush2.bf16.msra.mxu0 0
        %1272 = vmatprep.subr.bf16.mxu0 0
        %1273 = vmatpush2.bf16.msra.mxu0 0
        %1274 = vmatprep.subr.bf16.mxu0 0
        %1275 = vmatpush2.bf16.msra.mxu0 0
        %1276 = vmatprep.subr.bf16.mxu0 0
        %1277 = vmatpush2.bf16.msra.mxu0 0
        %1278 = vmatprep.subr.bf16.mxu0 0
        %1279 = vmatpush2.bf16.msra.mxu0 0
        %1280 = vmatprep.subr.bf16.mxu0 0
        %1281 = vmatpush2.bf16.msra.mxu0 0
        %1282 = vmatprep.mubr.bf16.mxu0 0
        %1283 = vmatmul.mubr.bf16.gmra.mxu0 %v703
        %v1284 = vpop.f32.mrf.mxu0
        %v1285 = vadd.f32 %v788, %v1284
        %v1286 = vpop.f32.mrf.mxu0
        %v1287 = vadd.f32 %v792, %v1286
        %v1288 = vpop.f32.mrf.mxu0
        %v1289 = vadd.f32 %v788, %v1288
        %v1290 = vpop.f32.mrf.mxu0
        %v1291 = vadd.f32 %v792, %v1290
        %1292 = vmatprep.mubr.bf16.mxu0 0
        %1293 = vmatmul.mubr.bf16.gmra.mxu0 %v704
        %v1294 = vpop.f32.mrf.mxu0
        %v1295 = vadd.f32 %v788, %v1294
        %v1296 = vpop.f32.mrf.mxu0
        %v1297 = vadd.f32 %v792, %v1296
        %v1298 = vpop.f32.mrf.mxu0
        %v1299 = vadd.f32 %v788, %v1298
        %v1300 = vpop.f32.mrf.mxu0
        %v1301 = vadd.f32 %v792, %v1300
        %1302 = vmatprep.mubr.bf16.mxu0 0
        %1303 = vmatmul.mubr.bf16.gmra.mxu0 %v705
        %v1304 = vpop.f32.mrf.mxu0
        %v1305 = vadd.f32 %v788, %v1304
        %v1306 = vpop.f32.mrf.mxu0
        %v1307 = vadd.f32 %v792, %v1306
        %v1308 = vpop.f32.mrf.mxu0
        %v1309 = vadd.f32 %v788, %v1308
        %v1310 = vpop.f32.mrf.mxu0
        %v1311 = vadd.f32 %v792, %v1310
        %1312 = vmatprep.mubr.bf16.mxu0 0
        %1313 = vmatmul.mubr.bf16.gmra.mxu0 %v706
        %v1314 = vpop.f32.mrf.mxu0
        %v1315 = vadd.f32 %v788, %v1314
        %v1316 = vpop.f32.mrf.mxu0
        %v1317 = vadd.f32 %v792, %v1316
        %v1318 = vpop.f32.mrf.mxu0
        %v1319 = vadd.f32 %v788, %v1318
        %v1320 = vpop.f32.mrf.mxu0
        %v1321 = vadd.f32 %v792, %v1320
        %1322 = vmatprep.mubr.bf16.mxu0 0
        %1323 = vmatmul.mubr.bf16.gmra.mxu0 %v707
        %v1324 = vpop.f32.mrf.mxu0
        %v1325 = vadd.f32 %v788, %v1324
        %v1326 = vpop.f32.mrf.mxu0
        %v1327 = vadd.f32 %v792, %v1326
        %v1328 = vpop.f32.mrf.mxu0
        %v1329 = vadd.f32 %v788, %v1328
        %v1330 = vpop.f32.mrf.mxu0
        %v1331 = vadd.f32 %v792, %v1330
        %1332 = vmatprep.mubr.bf16.mxu0 0
        %1333 = vmatmul.mubr.bf16.gmra.mxu0 %v708
        %v1334 = vpop.f32.mrf.mxu0
        %v1335 = vadd.f32 %v788, %v1334
        %v1336 = vpop.f32.mrf.mxu0
        %v1337 = vadd.f32 %v792, %v1336
        %v1338 = vpop.f32.mrf.mxu0
        %v1339 = vadd.f32 %v788, %v1338
        %v1340 = vpop.f32.mrf.mxu0
        %v1341 = vadd.f32 %v792, %v1340
        %1342 = vmatprep.mubr.bf16.mxu0 0
        %1343 = vmatmul.mubr.bf16.gmra.mxu0 %v709
        %v1344 = vpop.f32.mrf.mxu0
        %v1345 = vadd.f32 %v788, %v1344
        %v1346 = vpop.f32.mrf.mxu0
        %v1347 = vadd.f32 %v792, %v1346
        %v1348 = vpop.f32.mrf.mxu0
        %v1349 = vadd.f32 %v788, %v1348
        %v1350 = vpop.f32.mrf.mxu0
        %v1351 = vadd.f32 %v792, %v1350
        %1352 = vmatprep.mubr.bf16.mxu0 0
        %1353 = vmatmul.mubr.bf16.gmra.mxu0 %v710
        %v1354 = vpop.f32.mrf.mxu0
        %v1355 = vadd.f32 %v788, %v1354
        %v1356 = vpop.f32.mrf.mxu0
        %v1357 = vadd.f32 %v792, %v1356
        %v1358 = vpop.f32.mrf.mxu0
        %v1359 = vadd.f32 %v788, %v1358
        %v1360 = vpop.f32.mrf.mxu0
        %v1361 = vadd.f32 %v792, %v1360
        %1362 = vdwg.mxu0
        %1363 = vmatprep.subr.bf16.mxu0 %v1070
        %1364 = vmatpush1.bf16.msra.mxu0 %v1069
        %1365 = vmatprep.subr.bf16.mxu0 %v1062
        %1366 = vmatpush1.bf16.msra.mxu0 %v1061
        %1367 = vmatprep.subr.bf16.mxu0 %v1054
        %1368 = vmatpush1.bf16.msra.mxu0 %v1053
        %1369 = vmatprep.subr.bf16.mxu0 %v1046
        %1370 = vmatpush1.bf16.msra.mxu0 %v1045
        %1371 = vmatprep.subr.bf16.mxu0 %v1038
        %1372 = vmatpush1.bf16.msra.mxu0 %v1037
        %1373 = vmatprep.subr.bf16.mxu0 %v1030
        %1374 = vmatpush1.bf16.msra.mxu0 %v1029
        %1375 = vmatprep.subr.bf16.mxu0 %v1022
        %1376 = vmatpush1.bf16.msra.mxu0 %v1021
        %1377 = vmatprep.subr.bf16.mxu0 %v1014
        %1378 = vmatpush1.bf16.msra.mxu0 %v1013
        %1379 = vmatprep.subr.bf16.mxu0 0
        %1380 = vmatpush2.bf16.msra.mxu0 0
        %1381 = vmatprep.subr.bf16.mxu0 0
        %1382 = vmatpush2.bf16.msra.mxu0 0
        %1383 = vmatprep.subr.bf16.mxu0 0
        %1384 = vmatpush2.bf16.msra.mxu0 0
        %1385 = vmatprep.subr.bf16.mxu0 0
        %1386 = vmatpush2.bf16.msra.mxu0 0
        %1387 = vmatprep.subr.bf16.mxu0 0
        %1388 = vmatpush2.bf16.msra.mxu0 0
        %1389 = vmatprep.subr.bf16.mxu0 0
        %1390 = vmatpush2.bf16.msra.mxu0 0
        %1391 = vmatprep.subr.bf16.mxu0 0
        %1392 = vmatpush2.bf16.msra.mxu0 0
        %1393 = vmatprep.subr.bf16.mxu0 0
        %1394 = vmatpush2.bf16.msra.mxu0 0
        %1395 = vmatprep.mubr.bf16.mxu0 0
        %1396 = vmatmul.mubr.bf16.gmra.mxu0 %v703
        %v1397 = vpop.f32.mrf.mxu0
        %v1398 = vadd.f32 %v796, %v1397
        %v1399 = vpop.f32.mrf.mxu0
        %v1400 = vadd.f32 %v800, %v1399
        %v1401 = vpop.f32.mrf.mxu0
        %v1402 = vadd.f32 %v796, %v1401
        %v1403 = vpop.f32.mrf.mxu0
        %v1404 = vadd.f32 %v800, %v1403
        %1405 = vmatprep.mubr.bf16.mxu0 0
        %1406 = vmatmul.mubr.bf16.gmra.mxu0 %v704
        %v1407 = vpop.f32.mrf.mxu0
        %v1408 = vadd.f32 %v796, %v1407
        %v1409 = vpop.f32.mrf.mxu0
        %v1410 = vadd.f32 %v800, %v1409
        %v1411 = vpop.f32.mrf.mxu0
        %v1412 = vadd.f32 %v796, %v1411
        %v1413 = vpop.f32.mrf.mxu0
        %v1414 = vadd.f32 %v800, %v1413
        %1415 = vmatprep.mubr.bf16.mxu0 0
        %1416 = vmatmul.mubr.bf16.gmra.mxu0 %v705
        %v1417 = vpop.f32.mrf.mxu0
        %v1418 = vadd.f32 %v796, %v1417
        %v1419 = vpop.f32.mrf.mxu0
        %v1420 = vadd.f32 %v800, %v1419
        %v1421 = vpop.f32.mrf.mxu0
        %v1422 = vadd.f32 %v796, %v1421
        %v1423 = vpop.f32.mrf.mxu0
        %v1424 = vadd.f32 %v800, %v1423
        %1425 = vmatprep.mubr.bf16.mxu0 0
        %1426 = vmatmul.mubr.bf16.gmra.mxu0 %v706
        %v1427 = vpop.f32.mrf.mxu0
        %v1428 = vadd.f32 %v796, %v1427
        %v1429 = vpop.f32.mrf.mxu0
        %v1430 = vadd.f32 %v800, %v1429
        %v1431 = vpop.f32.mrf.mxu0
        %v1432 = vadd.f32 %v796, %v1431
        %v1433 = vpop.f32.mrf.mxu0
        %v1434 = vadd.f32 %v800, %v1433
        %1435 = vmatprep.mubr.bf16.mxu0 0
        %1436 = vmatmul.mubr.bf16.gmra.mxu0 %v707
        %v1437 = vpop.f32.mrf.mxu0
        %v1438 = vadd.f32 %v796, %v1437
        %v1439 = vpop.f32.mrf.mxu0
        %v1440 = vadd.f32 %v800, %v1439
        %v1441 = vpop.f32.mrf.mxu0
        %v1442 = vadd.f32 %v796, %v1441
        %v1443 = vpop.f32.mrf.mxu0
        %v1444 = vadd.f32 %v800, %v1443
        %1445 = vmatprep.mubr.bf16.mxu0 0
        %1446 = vmatmul.mubr.bf16.gmra.mxu0 %v708
        %v1447 = vpop.f32.mrf.mxu0
        %v1448 = vadd.f32 %v796, %v1447
        %v1449 = vpop.f32.mrf.mxu0
        %v1450 = vadd.f32 %v800, %v1449
        %v1451 = vpop.f32.mrf.mxu0
        %v1452 = vadd.f32 %v796, %v1451
        %v1453 = vpop.f32.mrf.mxu0
        %v1454 = vadd.f32 %v800, %v1453
        %1455 = vmatprep.mubr.bf16.mxu0 0
        %1456 = vmatmul.mubr.bf16.gmra.mxu0 %v709
        %v1457 = vpop.f32.mrf.mxu0
        %v1458 = vadd.f32 %v796, %v1457
        %v1459 = vpop.f32.mrf.mxu0
        %v1460 = vadd.f32 %v800, %v1459
        %v1461 = vpop.f32.mrf.mxu0
        %v1462 = vadd.f32 %v796, %v1461
        %v1463 = vpop.f32.mrf.mxu0
        %v1464 = vadd.f32 %v800, %v1463
        %1465 = vmatprep.mubr.bf16.mxu0 0
        %1466 = vmatmul.mubr.bf16.gmra.mxu0 %v710
        %v1467 = vpop.f32.mrf.mxu0
        %v1468 = vadd.f32 %v796, %v1467
        %v1469 = vpop.f32.mrf.mxu0
        %v1470 = vadd.f32 %v800, %v1469
        %v1471 = vpop.f32.mrf.mxu0
        %v1472 = vadd.f32 %v796, %v1471
        %v1473 = vpop.f32.mrf.mxu0
        %v1474 = vadd.f32 %v800, %v1473
        %1475 = vdwg.mxu0
        %1476 = vmatprep.subr.bf16.mxu0 %v1072
        %1477 = vmatpush1.bf16.msra.mxu0 %v1071
        %1478 = vmatprep.subr.bf16.mxu0 %v1064
        %1479 = vmatpush1.bf16.msra.mxu0 %v1063
        %1480 = vmatprep.subr.bf16.mxu0 %v1056
        %1481 = vmatpush1.bf16.msra.mxu0 %v1055
        %1482 = vmatprep.subr.bf16.mxu0 %v1048
        %1483 = vmatpush1.bf16.msra.mxu0 %v1047
        %1484 = vmatprep.subr.bf16.mxu0 %v1040
        %1485 = vmatpush1.bf16.msra.mxu0 %v1039
        %1486 = vmatprep.subr.bf16.mxu0 %v1032
        %1487 = vmatpush1.bf16.msra.mxu0 %v1031
        %1488 = vmatprep.subr.bf16.mxu0 %v1024
        %1489 = vmatpush1.bf16.msra.mxu0 %v1023
        %1490 = vmatprep.subr.bf16.mxu0 %v1016
        %1491 = vmatpush1.bf16.msra.mxu0 %v1015
        %1492 = vmatprep.subr.bf16.mxu0 0
        %1493 = vmatpush2.bf16.msra.mxu0 0
        %1494 = vmatprep.subr.bf16.mxu0 0
        %1495 = vmatpush2.bf16.msra.mxu0 0
        %1496 = vmatprep.subr.bf16.mxu0 0
        %1497 = vmatpush2.bf16.msra.mxu0 0
        %1498 = vmatprep.subr.bf16.mxu0 0
        %1499 = vmatpush2.bf16.msra.mxu0 0
        %1500 = vmatprep.subr.bf16.mxu0 0
        %1501 = vmatpush2.bf16.msra.mxu0 0
        %1502 = vmatprep.subr.bf16.mxu0 0
        %1503 = vmatpush2.bf16.msra.mxu0 0
        %1504 = vmatprep.subr.bf16.mxu0 0
        %1505 = vmatpush2.bf16.msra.mxu0 0
        %1506 = vmatprep.subr.bf16.mxu0 0
        %1507 = vmatpush2.bf16.msra.mxu0 0
        %1508 = vmatprep.mubr.bf16.mxu0 0
        %1509 = vmatmul.mubr.bf16.gmra.mxu0 %v703
        %v1510 = vpop.f32.mrf.mxu0
        %v1511 = vadd.f32 %v804, %v1510
        %v1512 = vpop.f32.mrf.mxu0
        %v1513 = vadd.f32 %v808, %v1512
        %v1514 = vpop.f32.mrf.mxu0
        %v1515 = vadd.f32 %v804, %v1514
        %v1516 = vpop.f32.mrf.mxu0
        %v1517 = vadd.f32 %v808, %v1516
        %1518 = vmatprep.mubr.bf16.mxu0 0
        %1519 = vmatmul.mubr.bf16.gmra.mxu0 %v704
        %v1520 = vpop.f32.mrf.mxu0
        %v1521 = vadd.f32 %v804, %v1520
        %v1522 = vpop.f32.mrf.mxu0
        %v1523 = vadd.f32 %v808, %v1522
        %v1524 = vpop.f32.mrf.mxu0
        %v1525 = vadd.f32 %v804, %v1524
        %v1526 = vpop.f32.mrf.mxu0
        %v1527 = vadd.f32 %v808, %v1526
        %1528 = vmatprep.mubr.bf16.mxu0 0
        %1529 = vmatmul.mubr.bf16.gmra.mxu0 %v705
        %v1530 = vpop.f32.mrf.mxu0
        %v1531 = vadd.f32 %v804, %v1530
        %v1532 = vpop.f32.mrf.mxu0
        %v1533 = vadd.f32 %v808, %v1532
        %v1534 = vpop.f32.mrf.mxu0
        %v1535 = vadd.f32 %v804, %v1534
        %v1536 = vpop.f32.mrf.mxu0
        %v1537 = vadd.f32 %v808, %v1536
        %1538 = vmatprep.mubr.bf16.mxu0 0
        %1539 = vmatmul.mubr.bf16.gmra.mxu0 %v706
        %v1540 = vpop.f32.mrf.mxu0
        %v1541 = vadd.f32 %v804, %v1540
        %v1542 = vpop.f32.mrf.mxu0
        %v1543 = vadd.f32 %v808, %v1542
        %v1544 = vpop.f32.mrf.mxu0
        %v1545 = vadd.f32 %v804, %v1544
        %v1546 = vpop.f32.mrf.mxu0
        %v1547 = vadd.f32 %v808, %v1546
        %1548 = vmatprep.mubr.bf16.mxu0 0
        %1549 = vmatmul.mubr.bf16.gmra.mxu0 %v707
        %v1550 = vpop.f32.mrf.mxu0
        %v1551 = vadd.f32 %v804, %v1550
        %v1552 = vpop.f32.mrf.mxu0
        %v1553 = vadd.f32 %v808, %v1552
        %v1554 = vpop.f32.mrf.mxu0
        %v1555 = vadd.f32 %v804, %v1554
        %v1556 = vpop.f32.mrf.mxu0
        %v1557 = vadd.f32 %v808, %v1556
        %1558 = vmatprep.mubr.bf16.mxu0 0
        %1559 = vmatmul.mubr.bf16.gmra.mxu0 %v708
        %v1560 = vpop.f32.mrf.mxu0
        %v1561 = vadd.f32 %v804, %v1560
        %v1562 = vpop.f32.mrf.mxu0
        %v1563 = vadd.f32 %v808, %v1562
        %v1564 = vpop.f32.mrf.mxu0
        %v1565 = vadd.f32 %v804, %v1564
        %v1566 = vpop.f32.mrf.mxu0
        %v1567 = vadd.f32 %v808, %v1566
        %1568 = vmatprep.mubr.bf16.mxu0 0
        %1569 = vmatmul.mubr.bf16.gmra.mxu0 %v709
        %v1570 = vpop.f32.mrf.mxu0
        %v1571 = vadd.f32 %v804, %v1570
        %v1572 = vpop.f32.mrf.mxu0
        %v1573 = vadd.f32 %v808, %v1572
        %v1574 = vpop.f32.mrf.mxu0
        %v1575 = vadd.f32 %v804, %v1574
        %v1576 = vpop.f32.mrf.mxu0
        %v1577 = vadd.f32 %v808, %v1576
        %1578 = vmatprep.mubr.bf16.mxu0 0
        %1579 = vmatmul.mubr.bf16.gmra.mxu0 %v710
        %v1580 = vpop.f32.mrf.mxu0
        %v1581 = vadd.f32 %v804, %v1580
        %v1582 = vpop.f32.mrf.mxu0
        %v1583 = vadd.f32 %v808, %v1582
        %v1584 = vpop.f32.mrf.mxu0
        %v1585 = vadd.f32 %v804, %v1584
        %v1586 = vpop.f32.mrf.mxu0
        %v1587 = vadd.f32 %v808, %v1586
        %1588 = vdwg.mxu0
        %v1589 = vmax.f32 %v1172, 0.0
        %v1590 = vmax.f32 %v1174, 0.0
        %v1591 = vmax.f32 %v1285, 0.0
        %v1592 = vmax.f32 %v1287, 0.0
        %v1593 = vmax.f32 %v1398, 0.0
        %v1594 = vmax.f32 %v1400, 0.0
        %v1595 = vmax.f32 %v1511, 0.0
        %v1596 = vmax.f32 %v1513, 0.0
        %v1597 = vmax.f32 %v1176, 0.0
        %v1598 = vmax.f32 %v1178, 0.0
        %v1599 = vmax.f32 %v1289, 0.0
        %v1600 = vmax.f32 %v1291, 0.0
        %v1601 = vmax.f32 %v1402, 0.0
        %v1602 = vmax.f32 %v1404, 0.0
        %v1603 = vmax.f32 %v1515, 0.0
        %v1604 = vmax.f32 %v1517, 0.0
        %v1605 = vmax.f32 %v1182, 0.0
        %v1606 = vmax.f32 %v1184, 0.0
        %v1607 = vmax.f32 %v1295, 0.0
        %v1608 = vmax.f32 %v1297, 0.0
        %v1609 = vmax.f32 %v1408, 0.0
        %v1610 = vmax.f32 %v1410, 0.0
        %v1611 = vmax.f32 %v1521, 0.0
        %v1612 = vmax.f32 %v1523, 0.0
        %v1613 = vmax.f32 %v1186, 0.0
        %v1614 = vmax.f32 %v1188, 0.0
        %v1615 = vmax.f32 %v1299, 0.0
        %v1616 = vmax.f32 %v1301, 0.0
        %v1617 = vmax.f32 %v1412, 0.0
        %v1618 = vmax.f32 %v1414, 0.0
        %v1619 = vmax.f32 %v1525, 0.0
        %v1620 = vmax.f32 %v1527, 0.0
        %v1621 = vmax.f32 %v1192, 0.0
        %v1622 = vmax.f32 %v1194, 0.0
        %v1623 = vmax.f32 %v1305, 0.0
        %v1624 = vmax.f32 %v1307, 0.0
        %v1625 = vmax.f32 %v1418, 0.0
        %v1626 = vmax.f32 %v1420, 0.0
        %v1627 = vmax.f32 %v1531, 0.0
        %v1628 = vmax.f32 %v1533, 0.0
        %v1629 = vmax.f32 %v1196, 0.0
        %v1630 = vmax.f32 %v1198, 0.0
        %v1631 = vmax.f32 %v1309, 0.0
        %v1632 = vmax.f32 %v1311, 0.0
        %v1633 = vmax.f32 %v1422, 0.0
        %v1634 = vmax.f32 %v1424, 0.0
        %v1635 = vmax.f32 %v1535, 0.0
        %v1636 = vmax.f32 %v1537, 0.0
        %v1637 = vmax.f32 %v1202, 0.0
        %v1638 = vmax.f32 %v1204, 0.0
        %v1639 = vmax.f32 %v1315, 0.0
        %v1640 = vmax.f32 %v1317, 0.0
        %v1641 = vmax.f32 %v1428, 0.0
        %v1642 = vmax.f32 %v1430, 0.0
        %v1643 = vmax.f32 %v1541, 0.0
        %v1644 = vmax.f32 %v1543, 0.0
        %v1645 = vmax.f32 %v1206, 0.0
        %v1646 = vmax.f32 %v1208, 0.0
        %v1647 = vmax.f32 %v1319, 0.0
        %v1648 = vmax.f32 %v1321, 0.0
        %v1649 = vmax.f32 %v1432, 0.0
        %v1650 = vmax.f32 %v1434, 0.0
        %v1651 = vmax.f32 %v1545, 0.0
        %v1652 = vmax.f32 %v1547, 0.0
        %v1653 = vmax.f32 %v1212, 0.0
        %v1654 = vmax.f32 %v1214, 0.0
        %v1655 = vmax.f32 %v1325, 0.0
        %v1656 = vmax.f32 %v1327, 0.0
        %v1657 = vmax.f32 %v1438, 0.0
        %v1658 = vmax.f32 %v1440, 0.0
        %v1659 = vmax.f32 %v1551, 0.0
        %v1660 = vmax.f32 %v1553, 0.0
        %v1661 = vmax.f32 %v1216, 0.0
        %v1662 = vmax.f32 %v1218, 0.0
        %v1663 = vmax.f32 %v1329, 0.0
        %v1664 = vmax.f32 %v1331, 0.0
        %v1665 = vmax.f32 %v1442, 0.0
        %v1666 = vmax.f32 %v1444, 0.0
        %v1667 = vmax.f32 %v1555, 0.0
        %v1668 = vmax.f32 %v1557, 0.0
        %v1669 = vmax.f32 %v1222, 0.0
        %v1670 = vmax.f32 %v1224, 0.0
        %v1671 = vmax.f32 %v1335, 0.0
        %v1672 = vmax.f32 %v1337, 0.0
        %v1673 = vmax.f32 %v1448, 0.0
        %v1674 = vmax.f32 %v1450, 0.0
        %v1675 = vmax.f32 %v1561, 0.0
        %v1676 = vmax.f32 %v1563, 0.0
        %v1677 = vmax.f32 %v1226, 0.0
        %v1678 = vmax.f32 %v1228, 0.0
        %v1679 = vmax.f32 %v1339, 0.0
        %v1680 = vmax.f32 %v1341, 0.0
        %v1681 = vmax.f32 %v1452, 0.0
        %v1682 = vmax.f32 %v1454, 0.0
        %v1683 = vmax.f32 %v1565, 0.0
        %v1684 = vmax.f32 %v1567, 0.0
        %v1685 = vmax.f32 %v1232, 0.0
        %v1686 = vmax.f32 %v1234, 0.0
        %v1687 = vmax.f32 %v1345, 0.0
        %v1688 = vmax.f32 %v1347, 0.0
        %v1689 = vmax.f32 %v1458, 0.0
        %v1690 = vmax.f32 %v1460, 0.0
        %v1691 = vmax.f32 %v1571, 0.0
        %v1692 = vmax.f32 %v1573, 0.0
        %v1693 = vmax.f32 %v1236, 0.0
        %v1694 = vmax.f32 %v1238, 0.0
        %v1695 = vmax.f32 %v1349, 0.0
        %v1696 = vmax.f32 %v1351, 0.0
        %v1697 = vmax.f32 %v1462, 0.0
        %v1698 = vmax.f32 %v1464, 0.0
        %v1699 = vmax.f32 %v1575, 0.0
        %v1700 = vmax.f32 %v1577, 0.0
        %v1701 = vmax.f32 %v1242, 0.0
        %v1702 = vmax.f32 %v1244, 0.0
        %v1703 = vmax.f32 %v1355, 0.0
        %v1704 = vmax.f32 %v1357, 0.0
        %v1705 = vmax.f32 %v1468, 0.0
        %v1706 = vmax.f32 %v1470, 0.0
        %v1707 = vmax.f32 %v1581, 0.0
        %v1708 = vmax.f32 %v1583, 0.0
        %v1709 = vmax.f32 %v1246, 0.0
        %v1710 = vmax.f32 %v1248, 0.0
        %v1711 = vmax.f32 %v1359, 0.0
        %v1712 = vmax.f32 %v1361, 0.0
        %v1713 = vmax.f32 %v1472, 0.0
        %v1714 = vmax.f32 %v1474, 0.0
        %v1715 = vmax.f32 %v1585, 0.0
        %v1716 = vmax.f32 %v1587, 0.0
        %v1717 = vmax.f32 %v1589, %v1597
        %v1718 = vmax.f32 %v1717, %v1605
        %v1719 = vmax.f32 %v1718, %v1613
        %v1720 = vmax.f32 %v1719, %v1621
        %v1721 = vmax.f32 %v1720, %v1629
        %v1722 = vmax.f32 %v1721, %v1637
        %v1723 = vmax.f32 %v1722, %v1645
        %v1724 = vmax.f32 %v1723, %v1653
        %v1725 = vmax.f32 %v1724, %v1661
        %v1726 = vmax.f32 %v1725, %v1669
        %v1727 = vmax.f32 %v1726, %v1677
        %v1728 = vmax.f32 %v1727, %v1685
        %v1729 = vmax.f32 %v1728, %v1693
        %v1730 = vmax.f32 %v1729, %v1701
        %v1731 = vmax.f32 %v1730, %v1709
        %v1732 = vrot.slane %v1731, 4
        %v1733 = vmax.f32 %v1731, %v1732
        %v1734 = vrot.slane %v1733, 2
        %v1735 = vmax.f32 %v1733, %v1734
        %v1736 = vrot.slane %v1735, 1
        %v1737 = vmax.f32 %v1735, %v1736
        %v1738 = vmax.f32 %v1590, %v1598
        %v1739 = vmax.f32 %v1738, %v1606
        %v1740 = vmax.f32 %v1739, %v1614
        %v1741 = vmax.f32 %v1740, %v1622
        %v1742 = vmax.f32 %v1741, %v1630
        %v1743 = vmax.f32 %v1742, %v1638
        %v1744 = vmax.f32 %v1743, %v1646
        %v1745 = vmax.f32 %v1744, %v1654
        %v1746 = vmax.f32 %v1745, %v1662
        %v1747 = vmax.f32 %v1746, %v1670
        %v1748 = vmax.f32 %v1747, %v1678
        %v1749 = vmax.f32 %v1748, %v1686
        %v1750 = vmax.f32 %v1749, %v1694
        %v1751 = vmax.f32 %v1750, %v1702
        %v1752 = vmax.f32 %v1751, %v1710
        %v1753 = vrot.slane %v1752, 4
        %v1754 = vmax.f32 %v1752, %v1753
        %v1755 = vrot.slane %v1754, 2
        %v1756 = vmax.f32 %v1754, %v1755
        %v1757 = vrot.slane %v1756, 1
        %v1758 = vmax.f32 %v1756, %v1757
        %v1759 = vmax.f32 %v1591, %v1599
        %v1760 = vmax.f32 %v1759, %v1607
        %v1761 = vmax.f32 %v1760, %v1615
        %v1762 = vmax.f32 %v1761, %v1623
        %v1763 = vmax.f32 %v1762, %v1631
        %v1764 = vmax.f32 %v1763, %v1639
        %v1765 = vmax.f32 %v1764, %v1647
        %v1766 = vmax.f32 %v1765, %v1655
        %v1767 = vmax.f32 %v1766, %v1663
        %v1768 = vmax.f32 %v1767, %v1671
        %v1769 = vmax.f32 %v1768, %v1679
        %v1770 = vmax.f32 %v1769, %v1687
        %v1771 = vmax.f32 %v1770, %v1695
        %v1772 = vmax.f32 %v1771, %v1703
        %v1773 = vmax.f32 %v1772, %v1711
        %v1774 = vrot.slane %v1773, 4
        %v1775 = vmax.f32 %v1773, %v1774
        %v1776 = vrot.slane %v1775, 2
        %v1777 = vmax.f32 %v1775, %v1776
        %v1778 = vrot.slane %v1777, 1
        %v1779 = vmax.f32 %v1777, %v1778
        %v1780 = vmax.f32 %v1592, %v1600
        %v1781 = vmax.f32 %v1780, %v1608
        %v1782 = vmax.f32 %v1781, %v1616
        %v1783 = vmax.f32 %v1782, %v1624
        %v1784 = vmax.f32 %v1783, %v1632
        %v1785 = vmax.f32 %v1784, %v1640
        %v1786 = vmax.f32 %v1785, %v1648
        %v1787 = vmax.f32 %v1786, %v1656
        %v1788 = vmax.f32 %v1787, %v1664
        %v1789 = vmax.f32 %v1788, %v1672
        %v1790 = vmax.f32 %v1789, %v1680
        %v1791 = vmax.f32 %v1790, %v1688
        %v1792 = vmax.f32 %v1791, %v1696
        %v1793 = vmax.f32 %v1792, %v1704
        %v1794 = vmax.f32 %v1793, %v1712
        %v1795 = vrot.slane %v1794, 4
        %v1796 = vmax.f32 %v1794, %v1795
        %v1797 = vrot.slane %v1796, 2
        %v1798 = vmax.f32 %v1796, %v1797
        %v1799 = vrot.slane %v1798, 1
        %v1800 = vmax.f32 %v1798, %v1799
        %v1801 = vmax.f32 %v1593, %v1601
        %v1802 = vmax.f32 %v1801, %v1609
        %v1803 = vmax.f32 %v1802, %v1617
        %v1804 = vmax.f32 %v1803, %v1625
        %v1805 = vmax.f32 %v1804, %v1633
        %v1806 = vmax.f32 %v1805, %v1641
        %v1807 = vmax.f32 %v1806, %v1649
        %v1808 = vmax.f32 %v1807, %v1657
        %v1809 = vmax.f32 %v1808, %v1665
        %v1810 = vmax.f32 %v1809, %v1673
        %v1811 = vmax.f32 %v1810, %v1681
        %v1812 = vmax.f32 %v1811, %v1689
        %v1813 = vmax.f32 %v1812, %v1697
        %v1814 = vmax.f32 %v1813, %v1705
        %v1815 = vmax.f32 %v1814, %v1713
        %v1816 = vrot.slane %v1815, 4
        %v1817 = vmax.f32 %v1815, %v1816
        %v1818 = vrot.slane %v1817, 2
        %v1819 = vmax.f32 %v1817, %v1818
        %v1820 = vrot.slane %v1819, 1
        %v1821 = vmax.f32 %v1819, %v1820
        %v1822 = vmax.f32 %v1594, %v1602
        %v1823 = vmax.f32 %v1822, %v1610
        %v1824 = vmax.f32 %v1823, %v1618
        %v1825 = vmax.f32 %v1824, %v1626
        %v1826 = vmax.f32 %v1825, %v1634
        %v1827 = vmax.f32 %v1826, %v1642
        %v1828 = vmax.f32 %v1827, %v1650
        %v1829 = vmax.f32 %v1828, %v1658
        %v1830 = vmax.f32 %v1829, %v1666
        %v1831 = vmax.f32 %v1830, %v1674
        %v1832 = vmax.f32 %v1831, %v1682
        %v1833 = vmax.f32 %v1832, %v1690
        %v1834 = vmax.f32 %v1833, %v1698
        %v1835 = vmax.f32 %v1834, %v1706
        %v1836 = vmax.f32 %v1835, %v1714
        %v1837 = vrot.slane %v1836, 4
        %v1838 = vmax.f32 %v1836, %v1837
        %v1839 = vrot.slane %v1838, 2
        %v1840 = vmax.f32 %v1838, %v1839
        %v1841 = vrot.slane %v1840, 1
        %v1842 = vmax.f32 %v1840, %v1841
        %v1843 = vmax.f32 %v1595, %v1603
        %v1844 = vmax.f32 %v1843, %v1611
        %v1845 = vmax.f32 %v1844, %v1619
        %v1846 = vmax.f32 %v1845, %v1627
        %v1847 = vmax.f32 %v1846, %v1635
        %v1848 = vmax.f32 %v1847, %v1643
        %v1849 = vmax.f32 %v1848, %v1651
        %v1850 = vmax.f32 %v1849, %v1659
        %v1851 = vmax.f32 %v1850, %v1667
        %v1852 = vmax.f32 %v1851, %v1675
        %v1853 = vmax.f32 %v1852, %v1683
        %v1854 = vmax.f32 %v1853, %v1691
        %v1855 = vmax.f32 %v1854, %v1699
        %v1856 = vmax.f32 %v1855, %v1707
        %v1857 = vmax.f32 %v1856, %v1715
        %v1858 = vrot.slane %v1857, 4
        %v1859 = vmax.f32 %v1857, %v1858
        %v1860 = vrot.slane %v1859, 2
        %v1861 = vmax.f32 %v1859, %v1860
        %v1862 = vrot.slane %v1861, 1
        %v1863 = vmax.f32 %v1861, %v1862
        %v1864 = vmax.f32 %v1596, %v1604
        %v1865 = vmax.f32 %v1864, %v1612
        %v1866 = vmax.f32 %v1865, %v1620
        %v1867 = vmax.f32 %v1866, %v1628
        %v1868 = vmax.f32 %v1867, %v1636
        %v1869 = vmax.f32 %v1868, %v1644
        %v1870 = vmax.f32 %v1869, %v1652
        %v1871 = vmax.f32 %v1870, %v1660
        %v1872 = vmax.f32 %v1871, %v1668
        %v1873 = vmax.f32 %v1872, %v1676
        %v1874 = vmax.f32 %v1873, %v1684
        %v1875 = vmax.f32 %v1874, %v1692
        %v1876 = vmax.f32 %v1875, %v1700
        %v1877 = vmax.f32 %v1876, %v1708
        %v1878 = vmax.f32 %v1877, %v1716
        %v1879 = vrot.slane %v1878, 4
        %v1880 = vmax.f32 %v1878, %v1879
        %v1881 = vrot.slane %v1880, 2
        %v1882 = vmax.f32 %v1880, %v1881
        %v1883 = vrot.slane %v1882, 1
        %v1884 = vmax.f32 %v1882, %v1883
        %p1885 = scmp.eq.s32.totalorder %s25, 0
        // Predicated region
        $region61: #{pointnet_forward.2} parent=47 // pred_check
          %p1886 = pneg %p1885
        $region62: #{pointnet_forward.2} parent=47 // pred_check_branch
          %1888 = sbr.rel (%p1886) target = $region64
        $region63: #{pointnet_forward.2} parent=47 // pred_region
          %1889 = vst [vmem:[%s342] sm:$0xff] -inf
        $region64: #{pointnet_forward.2} parent=47 // pred_fallthru
          _
        %v1890 = vld [vmem:[%s342] sm:$0xff]
        %v1899 = vcombine.low %v1737, %v1758
        %v1900 = vcombine.low %v1779, %v1800
        %v1901 = vcombine.low %v1821, %v1842
        %v1902 = vcombine.low %v1863, %v1884
        %v1904 = vunpack.c.l.s4 1966171168
        %v1905 = vunpack.c.0.s8 %v1904
        %v1906 = vlaneseq
        %v1907 = vshrl.u32 %v1906, 7
        %v1908 = vsub.s32 %v1905, %v1907
        %v1909 = vrot.slane %v1899, %v1908
        %v1911 = vunpack.c.l.s4 1966171168
        %v1912 = vunpack.c.0.s8 %v1911
        %v1913 = vlaneseq
        %v1914 = vshrl.u32 %v1913, 7
        %v1915 = vsub.s32 %v1912, %v1914
        %v1916 = vrot.slane %v1900, %v1915
        %v1918 = vunpack.c.l.s4 1966171168
        %v1919 = vunpack.c.0.s8 %v1918
        %v1920 = vlaneseq
        %v1921 = vshrl.u32 %v1920, 7
        %v1922 = vsub.s32 %v1919, %v1921
        %v1923 = vrot.slane %v1901, %v1922
        %v1925 = vunpack.c.l.s4 1966171168
        %v1926 = vunpack.c.0.s8 %v1925
        %v1927 = vlaneseq
        %v1928 = vshrl.u32 %v1927, 7
        %v1929 = vsub.s32 %v1926, %v1928
        %v1930 = vrot.slane %v1902, %v1929
        %v1931 = vcombine.low %v1909, %v1916
        %v1932 = vcombine.low %v1923, %v1930
        %v1934 = vunpack.c.l.s4 1966171168
        %v1935 = vunpack.c.0.s8 %v1934
        %v1936 = vlaneseq
        %v1937 = vshrl.u32 %v1936, 7
        %v1938 = vsub.s32 %v1935, %v1937
        %v1939 = vrot.slane %v1931, %v1938
        %v1941 = vunpack.c.l.s4 1966171168
        %v1942 = vunpack.c.0.s8 %v1941
        %v1943 = vlaneseq
        %v1944 = vshrl.u32 %v1943, 7
        %v1945 = vsub.s32 %v1942, %v1944
        %v1946 = vrot.slane %v1932, %v1945
        %v1947 = vcombine.low %v1939, %v1946
        %v1949 = vmax.f32 %v1890, %v1947
        %1950 = vst [vmem:[%s342] sm:$0xff] %v1949
        %p1951 = scmp.lt.s32.totalorder %s24, 1
        %s1952 = scalar_select %p1951, %s24, 1
        %s1953 = smul.addr %s1952, 8
        %s1954 = scalar_lea.vmem %s7, %s1953
        // Predicated region
        $region65: #{pointnet_forward.2} parent=47 // pred_check
          %p1955 = pneg %p204
        $region66: #{pointnet_forward.2} parent=47 // pred_check_branch
          %1957 = sbr.rel (%p1955) target = $region68
        $region67: #{pointnet_forward.2} parent=47 // pred_region
          _
        $region68: #{pointnet_forward.2} parent=47 // pred_fallthru
          _
      $region48: #{pointnet_forward.2} parent=5 // pred_fallthru
        _
      %p1958 = scmp.le.s32.totalorder 2, %s15
      // Predicated region
      $region69: #{pointnet_forward.2} parent=5 // pred_check
        %p1959 = pneg %p1958
      $region70: #{pointnet_forward.2} parent=5 // pred_check_branch
        %1961 = sbr.rel (%p1959) target = $region72
      $region71: #{pointnet_forward.2} parent=5 // pred_region
        %s1962 = ssub.s32 %s15, 2
        // Predicated region
        $region73: #{pointnet_forward.2} parent=71 // pred_check
          %p1963 = pneg %p210
        $region74: #{pointnet_forward.2} parent=71 // pred_check_branch
          %1965 = sbr.rel (%p1963) target = $region76
        $region75: #{pointnet_forward.2} parent=71 // pred_region
          %p1966 = scmp.lt.s32.totalorder %s26, 1
          %s1967 = scalar_select %p1966, %s26, 1
          %s1968 = smul.addr %s1967, 8
          %s1969 = scalar_lea.vmem %s7, %s1968
        $region76: #{pointnet_forward.2} parent=71 // pred_fallthru
          _
      $region72: #{pointnet_forward.2} parent=5 // pred_fallthru
        _
    $region6: #{pointnet_forward.2} parent=1 // loop_footer
      %s19 = sadd.s32 1, %s15
    $region7: #{pointnet_forward.2} parent=1 // loop_footer_branch
      %14 = sbr.rel target = $region3
    $region8: #{pointnet_forward.2} parent=1 // loop_exit
      _
    %1970 = vsyncpa [#allocation3], 1
    %s1971 = scalar_lea.sflag [#allocation3], 1
    %1972 = vsyncpa %s1971, 1
    %1973 = vsyncpa [#allocation5], 1

// kernel: pointnet_forward.3
$region0: #{pointnet_forward.3}
  #allocation0 [shape = 'u32[]', space=smem, size = 0x4, offset = 0x4, fixed_abs, tag = 'smem constant byte address 0x4 - core index']
  #allocation1 [shape = 'u32[144,128]{1,0:T(1,128)}', space=vmem, size = 0x12000, scoped, tag = 'internal scratch']
  %s0 = inlined_call_operand.vmem [shape: f32[2,1024], index: 0, kind: input, shape index: {}]
  %s1 = inlined_call_operand.vmem [shape: bf16[1024,512], index: 1, kind: input, shape index: {}]
  %s2 = inlined_call_operand.vmem [shape: f32[1,512], index: 2, kind: input, shape index: {}]
  %s3 = inlined_call_operand.vmem [shape: bf16[512,256], index: 3, kind: input, shape index: {}]
  %s4 = inlined_call_operand.vmem [shape: f32[1,256], index: 4, kind: input, shape index: {}]
  %s5 = inlined_call_operand.vmem [shape: bf16[256,128], index: 5, kind: input, shape index: {}]
  %s6 = inlined_call_operand.vmem [shape: f32[1,128], index: 6, kind: input, shape index: {}]
  %s7 = inlined_call_operand.hbm [shape: f32[2,128], index: 7, kind: output, shape index: {}]
  %s8 = sld [smem:[#allocation0]]
  $region38: #{pointnet_forward.3} parent=0
    _
  %s10 = ssub.s32 1, %s8
  %s11 = scalar_select 0, %s10, %s8
  $region1: #{pointnet_forward.3} parent=0
    #allocation2 [shape = 'u8[1024]{0}', space=vmem, size = 0x400, scoped, tag = 'output window, operand 0, single buffered']
    #allocation3 [shape = 's32[1]{0}', space=sflag, size = 0x4, scoped, tag = 'scoped memory for pointnet_forward.3']
    %12 = vsyncpa [#allocation3], 0
    // Predicated region
    $region2: #{pointnet_forward.3} parent=1 // pred_check
      _
    $region3: #{pointnet_forward.3} parent=1 // pred_check_branch
      %14 = sbr.rel (0) target = $region5
    $region4: #{pointnet_forward.3} parent=1 // pred_region
      _
    $region5: #{pointnet_forward.3} parent=1 // pred_fallthru
      _
    // Predicated region
    $region6: #{pointnet_forward.3} parent=1 // pred_check
      _
    $region7: #{pointnet_forward.3} parent=1 // pred_check_branch
      %16 = sbr.rel (0) target = $region9
    $region8: #{pointnet_forward.3} parent=1 // pred_region
      _
    $region9: #{pointnet_forward.3} parent=1 // pred_fallthru
      _
    // Predicated region
    $region10: #{pointnet_forward.3} parent=1 // pred_check
      _
    $region11: #{pointnet_forward.3} parent=1 // pred_check_branch
      %18 = sbr.rel (0) target = $region13
    $region12: #{pointnet_forward.3} parent=1 // pred_region
      _
    $region13: #{pointnet_forward.3} parent=1 // pred_fallthru
      _
    // Predicated region
    $region14: #{pointnet_forward.3} parent=1 // pred_check
      _
    $region15: #{pointnet_forward.3} parent=1 // pred_check_branch
      %20 = sbr.rel (0) target = $region17
    $region16: #{pointnet_forward.3} parent=1 // pred_region
      _
    $region17: #{pointnet_forward.3} parent=1 // pred_fallthru
      _
    // Predicated region
    $region18: #{pointnet_forward.3} parent=1 // pred_check
      _
    $region19: #{pointnet_forward.3} parent=1 // pred_check_branch
      %22 = sbr.rel (0) target = $region21
    $region20: #{pointnet_forward.3} parent=1 // pred_region
      _
    $region21: #{pointnet_forward.3} parent=1 // pred_fallthru
      _
    // Predicated region
    $region22: #{pointnet_forward.3} parent=1 // pred_check
      _
    $region23: #{pointnet_forward.3} parent=1 // pred_check_branch
      %24 = sbr.rel (0) target = $region25
    $region24: #{pointnet_forward.3} parent=1 // pred_region
      _
    $region25: #{pointnet_forward.3} parent=1 // pred_fallthru
      _
    // Predicated region
    $region26: #{pointnet_forward.3} parent=1 // pred_check
      _
    $region27: #{pointnet_forward.3} parent=1 // pred_check_branch
      %26 = sbr.rel (0) target = $region29
    $region28: #{pointnet_forward.3} parent=1 // pred_region
      _
    $region29: #{pointnet_forward.3} parent=1 // pred_fallthru
      _
    %v28 = vld [vmem:[%s0] sm:$0xff]
    %v29 = vld [vmem:[%s0 + $0x8] sm:$0xff]
    %v32 = vcombine.high %v28, %v28
    %v34 = vunpack.c.l.s4 1983009808
    %v35 = vunpack.c.0.s8 %v34
    %v36 = vlaneseq
    %v37 = vshrl.u32 %v36, 7
    %v38 = vsub.s32 %v35, %v37
    %v39 = vrot.slane %v28, %v38
    %v41 = vunpack.c.l.s4 1983009808
    %v42 = vunpack.c.0.s8 %v41
    %v43 = vlaneseq
    %v44 = vshrl.u32 %v43, 7
    %v45 = vsub.s32 %v42, %v44
    %v46 = vrot.slane %v32, %v45
    %v47 = vcombine.high %v39, %v39
    %v48 = vcombine.high %v46, %v46
    %v49 = vcombine.high %v29, %v29
    %v51 = vunpack.c.l.s4 1983009808
    %v52 = vunpack.c.0.s8 %v51
    %v53 = vlaneseq
    %v54 = vshrl.u32 %v53, 7
    %v55 = vsub.s32 %v52, %v54
    %v56 = vrot.slane %v29, %v55
    %v58 = vunpack.c.l.s4 1983009808
    %v59 = vunpack.c.0.s8 %v58
    %v60 = vlaneseq
    %v61 = vshrl.u32 %v60, 7
    %v62 = vsub.s32 %v59, %v61
    %v63 = vrot.slane %v49, %v62
    %v64 = vcombine.high %v56, %v56
    %v65 = vcombine.high %v63, %v63
    %v74 = vpack.c.bf16 %v39, %v39
    %v75 = vpack.c.bf16 %v47, %v47
    %v76 = vpack.c.bf16 %v46, %v46
    %v77 = vpack.c.bf16 %v48, %v48
    %v78 = vpack.c.bf16 %v56, %v56
    %v79 = vpack.c.bf16 %v64, %v64
    %v80 = vpack.c.bf16 %v63, %v63
    %v81 = vpack.c.bf16 %v65, %v65
    %v82 = vld [vmem:[%s1] sm:$0xff]
    %v83 = vld [vmem:[%s1 + $0x8] sm:$0xff]
    %v84 = vld [vmem:[%s1 + $0x10] sm:$0xff]
    %v85 = vld [vmem:[%s1 + $0x18] sm:$0xff]
    %v86 = vld [vmem:[%s1 + $0x20] sm:$0xff]
    %v87 = vld [vmem:[%s1 + $0x28] sm:$0xff]
    %v88 = vld [vmem:[%s1 + $0x30] sm:$0xff]
    %v89 = vld [vmem:[%s1 + $0x38] sm:$0xff]
    %v90 = vld [vmem:[%s1 + $0x40] sm:$0xff]
    %v91 = vld [vmem:[%s1 + $0x48] sm:$0xff]
    %v92 = vld [vmem:[%s1 + $0x50] sm:$0xff]
    %v93 = vld [vmem:[%s1 + $0x58] sm:$0xff]
    %v94 = vld [vmem:[%s1 + $0x60] sm:$0xff]
    %v95 = vld [vmem:[%s1 + $0x68] sm:$0xff]
    %v96 = vld [vmem:[%s1 + $0x70] sm:$0xff]
    %v97 = vld [vmem:[%s1 + $0x78] sm:$0xff]
    %v98 = vld [vmem:[%s1 + $0x80] sm:$0xff]
    %v99 = vld [vmem:[%s1 + $0x88] sm:$0xff]
    %v100 = vld [vmem:[%s1 + $0x90] sm:$0xff]
    %v101 = vld [vmem:[%s1 + $0x98] sm:$0xff]
    %v102 = vld [vmem:[%s1 + $0xa0] sm:$0xff]
    %v103 = vld [vmem:[%s1 + $0xa8] sm:$0xff]
    %v104 = vld [vmem:[%s1 + $0xb0] sm:$0xff]
    %v105 = vld [vmem:[%s1 + $0xb8] sm:$0xff]
    %v106 = vld [vmem:[%s1 + $0xc0] sm:$0xff]
    %v107 = vld [vmem:[%s1 + $0xc8] sm:$0xff]
    %v108 = vld [vmem:[%s1 + $0xd0] sm:$0xff]
    %v109 = vld [vmem:[%s1 + $0xd8] sm:$0xff]
    %v110 = vld [vmem:[%s1 + $0xe0] sm:$0xff]
    %v111 = vld [vmem:[%s1 + $0xe8] sm:$0xff]
    %v112 = vld [vmem:[%s1 + $0xf0] sm:$0xff]
    %v113 = vld [vmem:[%s1 + $0xf8] sm:$0xff]
    %v114 = vld [vmem:[%s1 + $0x100] sm:$0xff]
    %v115 = vld [vmem:[%s1 + $0x108] sm:$0xff]
    %v116 = vld [vmem:[%s1 + $0x110] sm:$0xff]
    %v117 = vld [vmem:[%s1 + $0x118] sm:$0xff]
    %v118 = vld [vmem:[%s1 + $0x120] sm:$0xff]
    %v119 = vld [vmem:[%s1 + $0x128] sm:$0xff]
    %v120 = vld [vmem:[%s1 + $0x130] sm:$0xff]
    %v121 = vld [vmem:[%s1 + $0x138] sm:$0xff]
    %v122 = vld [vmem:[%s1 + $0x140] sm:$0xff]
    %v123 = vld [vmem:[%s1 + $0x148] sm:$0xff]
    %v124 = vld [vmem:[%s1 + $0x150] sm:$0xff]
    %v125 = vld [vmem:[%s1 + $0x158] sm:$0xff]
    %v126 = vld [vmem:[%s1 + $0x160] sm:$0xff]
    %v127 = vld [vmem:[%s1 + $0x168] sm:$0xff]
    %v128 = vld [vmem:[%s1 + $0x170] sm:$0xff]
    %v129 = vld [vmem:[%s1 + $0x178] sm:$0xff]
    %v130 = vld [vmem:[%s1 + $0x180] sm:$0xff]
    %v131 = vld [vmem:[%s1 + $0x188] sm:$0xff]
    %v132 = vld [vmem:[%s1 + $0x190] sm:$0xff]
    %v133 = vld [vmem:[%s1 + $0x198] sm:$0xff]
    %v134 = vld [vmem:[%s1 + $0x1a0] sm:$0xff]
    %v135 = vld [vmem:[%s1 + $0x1a8] sm:$0xff]
    %v136 = vld [vmem:[%s1 + $0x1b0] sm:$0xff]
    %v137 = vld [vmem:[%s1 + $0x1b8] sm:$0xff]
    %v138 = vld [vmem:[%s1 + $0x1c0] sm:$0xff]
    %v139 = vld [vmem:[%s1 + $0x1c8] sm:$0xff]
    %v140 = vld [vmem:[%s1 + $0x1d0] sm:$0xff]
    %v141 = vld [vmem:[%s1 + $0x1d8] sm:$0xff]
    %v142 = vld [vmem:[%s1 + $0x1e0] sm:$0xff]
    %v143 = vld [vmem:[%s1 + $0x1e8] sm:$0xff]
    %v144 = vld [vmem:[%s1 + $0x1f0] sm:$0xff]
    %v145 = vld [vmem:[%s1 + $0x1f8] sm:$0xff]
    %v146 = vld [vmem:[%s1 + $0x200] sm:$0xff]
    %v147 = vld [vmem:[%s1 + $0x208] sm:$0xff]
    %v148 = vld [vmem:[%s1 + $0x210] sm:$0xff]
    %v149 = vld [vmem:[%s1 + $0x218] sm:$0xff]
    %v150 = vld [vmem:[%s1 + $0x220] sm:$0xff]
    %v151 = vld [vmem:[%s1 + $0x228] sm:$0xff]
    %v152 = vld [vmem:[%s1 + $0x230] sm:$0xff]
    %v153 = vld [vmem:[%s1 + $0x238] sm:$0xff]
    %v154 = vld [vmem:[%s1 + $0x240] sm:$0xff]
    %v155 = vld [vmem:[%s1 + $0x248] sm:$0xff]
    %v156 = vld [vmem:[%s1 + $0x250] sm:$0xff]
    %v157 = vld [vmem:[%s1 + $0x258] sm:$0xff]
    %v158 = vld [vmem:[%s1 + $0x260] sm:$0xff]
    %v159 = vld [vmem:[%s1 + $0x268] sm:$0xff]
    %v160 = vld [vmem:[%s1 + $0x270] sm:$0xff]
    %v161 = vld [vmem:[%s1 + $0x278] sm:$0xff]
    %v162 = vld [vmem:[%s1 + $0x280] sm:$0xff]
    %v163 = vld [vmem:[%s1 + $0x288] sm:$0xff]
    %v164 = vld [vmem:[%s1 + $0x290] sm:$0xff]
    %v165 = vld [vmem:[%s1 + $0x298] sm:$0xff]
    %v166 = vld [vmem:[%s1 + $0x2a0] sm:$0xff]
    %v167 = vld [vmem:[%s1 + $0x2a8] sm:$0xff]
    %v168 = vld [vmem:[%s1 + $0x2b0] sm:$0xff]
    %v169 = vld [vmem:[%s1 + $0x2b8] sm:$0xff]
    %v170 = vld [vmem:[%s1 + $0x2c0] sm:$0xff]
    %v171 = vld [vmem:[%s1 + $0x2c8] sm:$0xff]
    %v172 = vld [vmem:[%s1 + $0x2d0] sm:$0xff]
    %v173 = vld [vmem:[%s1 + $0x2d8] sm:$0xff]
    %v174 = vld [vmem:[%s1 + $0x2e0] sm:$0xff]
    %v175 = vld [vmem:[%s1 + $0x2e8] sm:$0xff]
    %v176 = vld [vmem:[%s1 + $0x2f0] sm:$0xff]
    %v177 = vld [vmem:[%s1 + $0x2f8] sm:$0xff]
    %v178 = vld [vmem:[%s1 + $0x300] sm:$0xff]
    %v179 = vld [vmem:[%s1 + $0x308] sm:$0xff]
    %v180 = vld [vmem:[%s1 + $0x310] sm:$0xff]
    %v181 = vld [vmem:[%s1 + $0x318] sm:$0xff]
    %v182 = vld [vmem:[%s1 + $0x320] sm:$0xff]
    %v183 = vld [vmem:[%s1 + $0x328] sm:$0xff]
    %v184 = vld [vmem:[%s1 + $0x330] sm:$0xff]
    %v185 = vld [vmem:[%s1 + $0x338] sm:$0xff]
    %v186 = vld [vmem:[%s1 + $0x340] sm:$0xff]
    %v187 = vld [vmem:[%s1 + $0x348] sm:$0xff]
    %v188 = vld [vmem:[%s1 + $0x350] sm:$0xff]
    %v189 = vld [vmem:[%s1 + $0x358] sm:$0xff]
    %v190 = vld [vmem:[%s1 + $0x360] sm:$0xff]
    %v191 = vld [vmem:[%s1 + $0x368] sm:$0xff]
    %v192 = vld [vmem:[%s1 + $0x370] sm:$0xff]
    %v193 = vld [vmem:[%s1 + $0x378] sm:$0xff]
    %v194 = vld [vmem:[%s1 + $0x380] sm:$0xff]
    %v195 = vld [vmem:[%s1 + $0x388] sm:$0xff]
    %v196 = vld [vmem:[%s1 + $0x390] sm:$0xff]
    %v197 = vld [vmem:[%s1 + $0x398] sm:$0xff]
    %v198 = vld [vmem:[%s1 + $0x3a0] sm:$0xff]
    %v199 = vld [vmem:[%s1 + $0x3a8] sm:$0xff]
    %v200 = vld [vmem:[%s1 + $0x3b0] sm:$0xff]
    %v201 = vld [vmem:[%s1 + $0x3b8] sm:$0xff]
    %v202 = vld [vmem:[%s1 + $0x3c0] sm:$0xff]
    %v203 = vld [vmem:[%s1 + $0x3c8] sm:$0xff]
    %v204 = vld [vmem:[%s1 + $0x3d0] sm:$0xff]
    %v205 = vld [vmem:[%s1 + $0x3d8] sm:$0xff]
    %v206 = vld [vmem:[%s1 + $0x3e0] sm:$0xff]
    %v207 = vld [vmem:[%s1 + $0x3e8] sm:$0xff]
    %v208 = vld [vmem:[%s1 + $0x3f0] sm:$0xff]
    %v209 = vld [vmem:[%s1 + $0x3f8] sm:$0xff]
    %v210 = vld [vmem:[%s1 + $0x400] sm:$0xff]
    %v211 = vld [vmem:[%s1 + $0x408] sm:$0xff]
    %v212 = vld [vmem:[%s1 + $0x410] sm:$0xff]
    %v213 = vld [vmem:[%s1 + $0x418] sm:$0xff]
    %v214 = vld [vmem:[%s1 + $0x420] sm:$0xff]
    %v215 = vld [vmem:[%s1 + $0x428] sm:$0xff]
    %v216 = vld [vmem:[%s1 + $0x430] sm:$0xff]
    %v217 = vld [vmem:[%s1 + $0x438] sm:$0xff]
    %v218 = vld [vmem:[%s1 + $0x440] sm:$0xff]
    %v219 = vld [vmem:[%s1 + $0x448] sm:$0xff]
    %v220 = vld [vmem:[%s1 + $0x450] sm:$0xff]
    %v221 = vld [vmem:[%s1 + $0x458] sm:$0xff]
    %v222 = vld [vmem:[%s1 + $0x460] sm:$0xff]
    %v223 = vld [vmem:[%s1 + $0x468] sm:$0xff]
    %v224 = vld [vmem:[%s1 + $0x470] sm:$0xff]
    %v225 = vld [vmem:[%s1 + $0x478] sm:$0xff]
    %v226 = vld [vmem:[%s1 + $0x480] sm:$0xff]
    %v227 = vld [vmem:[%s1 + $0x488] sm:$0xff]
    %v228 = vld [vmem:[%s1 + $0x490] sm:$0xff]
    %v229 = vld [vmem:[%s1 + $0x498] sm:$0xff]
    %v230 = vld [vmem:[%s1 + $0x4a0] sm:$0xff]
    %v231 = vld [vmem:[%s1 + $0x4a8] sm:$0xff]
    %v232 = vld [vmem:[%s1 + $0x4b0] sm:$0xff]
    %v233 = vld [vmem:[%s1 + $0x4b8] sm:$0xff]
    %v234 = vld [vmem:[%s1 + $0x4c0] sm:$0xff]
    %v235 = vld [vmem:[%s1 + $0x4c8] sm:$0xff]
    %v236 = vld [vmem:[%s1 + $0x4d0] sm:$0xff]
    %v237 = vld [vmem:[%s1 + $0x4d8] sm:$0xff]
    %v238 = vld [vmem:[%s1 + $0x4e0] sm:$0xff]
    %v239 = vld [vmem:[%s1 + $0x4e8] sm:$0xff]
    %v240 = vld [vmem:[%s1 + $0x4f0] sm:$0xff]
    %v241 = vld [vmem:[%s1 + $0x4f8] sm:$0xff]
    %v242 = vld [vmem:[%s1 + $0x500] sm:$0xff]
    %v243 = vld [vmem:[%s1 + $0x508] sm:$0xff]
    %v244 = vld [vmem:[%s1 + $0x510] sm:$0xff]
    %v245 = vld [vmem:[%s1 + $0x518] sm:$0xff]
    %v246 = vld [vmem:[%s1 + $0x520] sm:$0xff]
    %v247 = vld [vmem:[%s1 + $0x528] sm:$0xff]
    %v248 = vld [vmem:[%s1 + $0x530] sm:$0xff]
    %v249 = vld [vmem:[%s1 + $0x538] sm:$0xff]
    %v250 = vld [vmem:[%s1 + $0x540] sm:$0xff]
    %v251 = vld [vmem:[%s1 + $0x548] sm:$0xff]
    %v252 = vld [vmem:[%s1 + $0x550] sm:$0xff]
    %v253 = vld [vmem:[%s1 + $0x558] sm:$0xff]
    %v254 = vld [vmem:[%s1 + $0x560] sm:$0xff]
    %v255 = vld [vmem:[%s1 + $0x568] sm:$0xff]
    %v256 = vld [vmem:[%s1 + $0x570] sm:$0xff]
    %v257 = vld [vmem:[%s1 + $0x578] sm:$0xff]
    %v258 = vld [vmem:[%s1 + $0x580] sm:$0xff]
    %v259 = vld [vmem:[%s1 + $0x588] sm:$0xff]
    %v260 = vld [vmem:[%s1 + $0x590] sm:$0xff]
    %v261 = vld [vmem:[%s1 + $0x598] sm:$0xff]
    %v262 = vld [vmem:[%s1 + $0x5a0] sm:$0xff]
    %v263 = vld [vmem:[%s1 + $0x5a8] sm:$0xff]
    %v264 = vld [vmem:[%s1 + $0x5b0] sm:$0xff]
    %v265 = vld [vmem:[%s1 + $0x5b8] sm:$0xff]
    %v266 = vld [vmem:[%s1 + $0x5c0] sm:$0xff]
    %v267 = vld [vmem:[%s1 + $0x5c8] sm:$0xff]
    %v268 = vld [vmem:[%s1 + $0x5d0] sm:$0xff]
    %v269 = vld [vmem:[%s1 + $0x5d8] sm:$0xff]
    %v270 = vld [vmem:[%s1 + $0x5e0] sm:$0xff]
    %v271 = vld [vmem:[%s1 + $0x5e8] sm:$0xff]
    %v272 = vld [vmem:[%s1 + $0x5f0] sm:$0xff]
    %v273 = vld [vmem:[%s1 + $0x5f8] sm:$0xff]
    %v274 = vld [vmem:[%s1 + $0x600] sm:$0xff]
    %v275 = vld [vmem:[%s1 + $0x608] sm:$0xff]
    %v276 = vld [vmem:[%s1 + $0x610] sm:$0xff]
    %v277 = vld [vmem:[%s1 + $0x618] sm:$0xff]
    %v278 = vld [vmem:[%s1 + $0x620] sm:$0xff]
    %v279 = vld [vmem:[%s1 + $0x628] sm:$0xff]
    %v280 = vld [vmem:[%s1 + $0x630] sm:$0xff]
    %v281 = vld [vmem:[%s1 + $0x638] sm:$0xff]
    %v282 = vld [vmem:[%s1 + $0x640] sm:$0xff]
    %v283 = vld [vmem:[%s1 + $0x648] sm:$0xff]
    %v284 = vld [vmem:[%s1 + $0x650] sm:$0xff]
    %v285 = vld [vmem:[%s1 + $0x658] sm:$0xff]
    %v286 = vld [vmem:[%s1 + $0x660] sm:$0xff]
    %v287 = vld [vmem:[%s1 + $0x668] sm:$0xff]
    %v288 = vld [vmem:[%s1 + $0x670] sm:$0xff]
    %v289 = vld [vmem:[%s1 + $0x678] sm:$0xff]
    %v290 = vld [vmem:[%s1 + $0x680] sm:$0xff]
    %v291 = vld [vmem:[%s1 + $0x688] sm:$0xff]
    %v292 = vld [vmem:[%s1 + $0x690] sm:$0xff]
    %v293 = vld [vmem:[%s1 + $0x698] sm:$0xff]
    %v294 = vld [vmem:[%s1 + $0x6a0] sm:$0xff]
    %v295 = vld [vmem:[%s1 + $0x6a8] sm:$0xff]
    %v296 = vld [vmem:[%s1 + $0x6b0] sm:$0xff]
    %v297 = vld [vmem:[%s1 + $0x6b8] sm:$0xff]
    %v298 = vld [vmem:[%s1 + $0x6c0] sm:$0xff]
    %v299 = vld [vmem:[%s1 + $0x6c8] sm:$0xff]
    %v300 = vld [vmem:[%s1 + $0x6d0] sm:$0xff]
    %v301 = vld [vmem:[%s1 + $0x6d8] sm:$0xff]
    %v302 = vld [vmem:[%s1 + $0x6e0] sm:$0xff]
    %v303 = vld [vmem:[%s1 + $0x6e8] sm:$0xff]
    %v304 = vld [vmem:[%s1 + $0x6f0] sm:$0xff]
    %v305 = vld [vmem:[%s1 + $0x6f8] sm:$0xff]
    %v306 = vld [vmem:[%s1 + $0x700] sm:$0xff]
    %v307 = vld [vmem:[%s1 + $0x708] sm:$0xff]
    %v308 = vld [vmem:[%s1 + $0x710] sm:$0xff]
    %v309 = vld [vmem:[%s1 + $0x718] sm:$0xff]
    %v310 = vld [vmem:[%s1 + $0x720] sm:$0xff]
    %v311 = vld [vmem:[%s1 + $0x728] sm:$0xff]
    %v312 = vld [vmem:[%s1 + $0x730] sm:$0xff]
    %v313 = vld [vmem:[%s1 + $0x738] sm:$0xff]
    %v314 = vld [vmem:[%s1 + $0x740] sm:$0xff]
    %v315 = vld [vmem:[%s1 + $0x748] sm:$0xff]
    %v316 = vld [vmem:[%s1 + $0x750] sm:$0xff]
    %v317 = vld [vmem:[%s1 + $0x758] sm:$0xff]
    %v318 = vld [vmem:[%s1 + $0x760] sm:$0xff]
    %v319 = vld [vmem:[%s1 + $0x768] sm:$0xff]
    %v320 = vld [vmem:[%s1 + $0x770] sm:$0xff]
    %v321 = vld [vmem:[%s1 + $0x778] sm:$0xff]
    %v322 = vld [vmem:[%s1 + $0x780] sm:$0xff]
    %v323 = vld [vmem:[%s1 + $0x788] sm:$0xff]
    %v324 = vld [vmem:[%s1 + $0x790] sm:$0xff]
    %v325 = vld [vmem:[%s1 + $0x798] sm:$0xff]
    %v326 = vld [vmem:[%s1 + $0x7a0] sm:$0xff]
    %v327 = vld [vmem:[%s1 + $0x7a8] sm:$0xff]
    %v328 = vld [vmem:[%s1 + $0x7b0] sm:$0xff]
    %v329 = vld [vmem:[%s1 + $0x7b8] sm:$0xff]
    %v330 = vld [vmem:[%s1 + $0x7c0] sm:$0xff]
    %v331 = vld [vmem:[%s1 + $0x7c8] sm:$0xff]
    %v332 = vld [vmem:[%s1 + $0x7d0] sm:$0xff]
    %v333 = vld [vmem:[%s1 + $0x7d8] sm:$0xff]
    %v334 = vld [vmem:[%s1 + $0x7e0] sm:$0xff]
    %v335 = vld [vmem:[%s1 + $0x7e8] sm:$0xff]
    %v336 = vld [vmem:[%s1 + $0x7f0] sm:$0xff]
    %v337 = vld [vmem:[%s1 + $0x7f8] sm:$0xff]
    %v338 = vld [vmem:[%s2] sm:$0xf]
    %v340 = vlaneseq
    %v341 = vshrl.u32 %v340, 7
    %v342 = vsub.s32 0, %v341
    %v343 = vrot.slane %v338, %v342
    %v344 = vlaneseq
    %v345 = vshrl.u32 %v344, 7
    %v346 = vsub.s32 1, %v345
    %v347 = vrot.slane %v338, %v346
    %v348 = vlaneseq
    %v349 = vshrl.u32 %v348, 7
    %v350 = vsub.s32 2, %v349
    %v351 = vrot.slane %v338, %v350
    %v352 = vlaneseq
    %v353 = vshrl.u32 %v352, 7
    %v354 = vsub.s32 3, %v353
    %v355 = vrot.slane %v338, %v354
    %v616 = vunpack.c.l.b16 %v82
    %v617 = vunpack.c.h.b16 %v82
    %v618 = vunpack.c.l.b16 %v83
    %v619 = vunpack.c.h.b16 %v83
    %v620 = vunpack.c.l.b16 %v84
    %v621 = vunpack.c.h.b16 %v84
    %v622 = vunpack.c.l.b16 %v85
    %v623 = vunpack.c.h.b16 %v85
    %v624 = vunpack.c.l.b16 %v86
    %v625 = vunpack.c.h.b16 %v86
    %v626 = vunpack.c.l.b16 %v87
    %v627 = vunpack.c.h.b16 %v87
    %v628 = vunpack.c.l.b16 %v88
    %v629 = vunpack.c.h.b16 %v88
    %v630 = vunpack.c.l.b16 %v89
    %v631 = vunpack.c.h.b16 %v89
    %v632 = vunpack.c.l.b16 %v90
    %v633 = vunpack.c.h.b16 %v90
    %v634 = vunpack.c.l.b16 %v91
    %v635 = vunpack.c.h.b16 %v91
    %v636 = vunpack.c.l.b16 %v92
    %v637 = vunpack.c.h.b16 %v92
    %v638 = vunpack.c.l.b16 %v93
    %v639 = vunpack.c.h.b16 %v93
    %v640 = vunpack.c.l.b16 %v94
    %v641 = vunpack.c.h.b16 %v94
    %v642 = vunpack.c.l.b16 %v95
    %v643 = vunpack.c.h.b16 %v95
    %v644 = vunpack.c.l.b16 %v96
    %v645 = vunpack.c.h.b16 %v96
    %v646 = vunpack.c.l.b16 %v97
    %v647 = vunpack.c.h.b16 %v97
    %v648 = vunpack.c.l.b16 %v98
    %v649 = vunpack.c.h.b16 %v98
    %v650 = vunpack.c.l.b16 %v99
    %v651 = vunpack.c.h.b16 %v99
    %v652 = vunpack.c.l.b16 %v100
    %v653 = vunpack.c.h.b16 %v100
    %v654 = vunpack.c.l.b16 %v101
    %v655 = vunpack.c.h.b16 %v101
    %v656 = vunpack.c.l.b16 %v102
    %v657 = vunpack.c.h.b16 %v102
    %v658 = vunpack.c.l.b16 %v103
    %v659 = vunpack.c.h.b16 %v103
    %v660 = vunpack.c.l.b16 %v104
    %v661 = vunpack.c.h.b16 %v104
    %v662 = vunpack.c.l.b16 %v105
    %v663 = vunpack.c.h.b16 %v105
    %v664 = vunpack.c.l.b16 %v106
    %v665 = vunpack.c.h.b16 %v106
    %v666 = vunpack.c.l.b16 %v107
    %v667 = vunpack.c.h.b16 %v107
    %v668 = vunpack.c.l.b16 %v108
    %v669 = vunpack.c.h.b16 %v108
    %v670 = vunpack.c.l.b16 %v109
    %v671 = vunpack.c.h.b16 %v109
    %v672 = vunpack.c.l.b16 %v110
    %v673 = vunpack.c.h.b16 %v110
    %v674 = vunpack.c.l.b16 %v111
    %v675 = vunpack.c.h.b16 %v111
    %v676 = vunpack.c.l.b16 %v112
    %v677 = vunpack.c.h.b16 %v112
    %v678 = vunpack.c.l.b16 %v113
    %v679 = vunpack.c.h.b16 %v113
    %v680 = vunpack.c.l.b16 %v114
    %v681 = vunpack.c.h.b16 %v114
    %v682 = vunpack.c.l.b16 %v115
    %v683 = vunpack.c.h.b16 %v115
    %v684 = vunpack.c.l.b16 %v116
    %v685 = vunpack.c.h.b16 %v116
    %v686 = vunpack.c.l.b16 %v117
    %v687 = vunpack.c.h.b16 %v117
    %v688 = vunpack.c.l.b16 %v118
    %v689 = vunpack.c.h.b16 %v118
    %v690 = vunpack.c.l.b16 %v119
    %v691 = vunpack.c.h.b16 %v119
    %v692 = vunpack.c.l.b16 %v120
    %v693 = vunpack.c.h.b16 %v120
    %v694 = vunpack.c.l.b16 %v121
    %v695 = vunpack.c.h.b16 %v121
    %v696 = vunpack.c.l.b16 %v122
    %v697 = vunpack.c.h.b16 %v122
    %v698 = vunpack.c.l.b16 %v123
    %v699 = vunpack.c.h.b16 %v123
    %v700 = vunpack.c.l.b16 %v124
    %v701 = vunpack.c.h.b16 %v124
    %v702 = vunpack.c.l.b16 %v125
    %v703 = vunpack.c.h.b16 %v125
    %v704 = vunpack.c.l.b16 %v126
    %v705 = vunpack.c.h.b16 %v126
    %v706 = vunpack.c.l.b16 %v127
    %v707 = vunpack.c.h.b16 %v127
    %v708 = vunpack.c.l.b16 %v128
    %v709 = vunpack.c.h.b16 %v128
    %v710 = vunpack.c.l.b16 %v129
    %v711 = vunpack.c.h.b16 %v129
    %v712 = vunpack.c.l.b16 %v130
    %v713 = vunpack.c.h.b16 %v130
    %v714 = vunpack.c.l.b16 %v131
    %v715 = vunpack.c.h.b16 %v131
    %v716 = vunpack.c.l.b16 %v132
    %v717 = vunpack.c.h.b16 %v132
    %v718 = vunpack.c.l.b16 %v133
    %v719 = vunpack.c.h.b16 %v133
    %v720 = vunpack.c.l.b16 %v134
    %v721 = vunpack.c.h.b16 %v134
    %v722 = vunpack.c.l.b16 %v135
    %v723 = vunpack.c.h.b16 %v135
    %v724 = vunpack.c.l.b16 %v136
    %v725 = vunpack.c.h.b16 %v136
    %v726 = vunpack.c.l.b16 %v137
    %v727 = vunpack.c.h.b16 %v137
    %v728 = vunpack.c.l.b16 %v138
    %v729 = vunpack.c.h.b16 %v138
    %v730 = vunpack.c.l.b16 %v139
    %v731 = vunpack.c.h.b16 %v139
    %v732 = vunpack.c.l.b16 %v140
    %v733 = vunpack.c.h.b16 %v140
    %v734 = vunpack.c.l.b16 %v141
    %v735 = vunpack.c.h.b16 %v141
    %v736 = vunpack.c.l.b16 %v142
    %v737 = vunpack.c.h.b16 %v142
    %v738 = vunpack.c.l.b16 %v143
    %v739 = vunpack.c.h.b16 %v143
    %v740 = vunpack.c.l.b16 %v144
    %v741 = vunpack.c.h.b16 %v144
    %v742 = vunpack.c.l.b16 %v145
    %v743 = vunpack.c.h.b16 %v145
    %v744 = vunpack.c.l.b16 %v146
    %v745 = vunpack.c.h.b16 %v146
    %v746 = vunpack.c.l.b16 %v147
    %v747 = vunpack.c.h.b16 %v147
    %v748 = vunpack.c.l.b16 %v148
    %v749 = vunpack.c.h.b16 %v148
    %v750 = vunpack.c.l.b16 %v149
    %v751 = vunpack.c.h.b16 %v149
    %v752 = vunpack.c.l.b16 %v150
    %v753 = vunpack.c.h.b16 %v150
    %v754 = vunpack.c.l.b16 %v151
    %v755 = vunpack.c.h.b16 %v151
    %v756 = vunpack.c.l.b16 %v152
    %v757 = vunpack.c.h.b16 %v152
    %v758 = vunpack.c.l.b16 %v153
    %v759 = vunpack.c.h.b16 %v153
    %v760 = vunpack.c.l.b16 %v154
    %v761 = vunpack.c.h.b16 %v154
    %v762 = vunpack.c.l.b16 %v155
    %v763 = vunpack.c.h.b16 %v155
    %v764 = vunpack.c.l.b16 %v156
    %v765 = vunpack.c.h.b16 %v156
    %v766 = vunpack.c.l.b16 %v157
    %v767 = vunpack.c.h.b16 %v157
    %v768 = vunpack.c.l.b16 %v158
    %v769 = vunpack.c.h.b16 %v158
    %v770 = vunpack.c.l.b16 %v159
    %v771 = vunpack.c.h.b16 %v159
    %v772 = vunpack.c.l.b16 %v160
    %v773 = vunpack.c.h.b16 %v160
    %v774 = vunpack.c.l.b16 %v161
    %v775 = vunpack.c.h.b16 %v161
    %v776 = vunpack.c.l.b16 %v162
    %v777 = vunpack.c.h.b16 %v162
    %v778 = vunpack.c.l.b16 %v163
    %v779 = vunpack.c.h.b16 %v163
    %v780 = vunpack.c.l.b16 %v164
    %v781 = vunpack.c.h.b16 %v164
    %v782 = vunpack.c.l.b16 %v165
    %v783 = vunpack.c.h.b16 %v165
    %v784 = vunpack.c.l.b16 %v166
    %v785 = vunpack.c.h.b16 %v166
    %v786 = vunpack.c.l.b16 %v167
    %v787 = vunpack.c.h.b16 %v167
    %v788 = vunpack.c.l.b16 %v168
    %v789 = vunpack.c.h.b16 %v168
    %v790 = vunpack.c.l.b16 %v169
    %v791 = vunpack.c.h.b16 %v169
    %v792 = vunpack.c.l.b16 %v170
    %v793 = vunpack.c.h.b16 %v170
    %v794 = vunpack.c.l.b16 %v171
    %v795 = vunpack.c.h.b16 %v171
    %v796 = vunpack.c.l.b16 %v172
    %v797 = vunpack.c.h.b16 %v172
    %v798 = vunpack.c.l.b16 %v173
    %v799 = vunpack.c.h.b16 %v173
    %v800 = vunpack.c.l.b16 %v174
    %v801 = vunpack.c.h.b16 %v174
    %v802 = vunpack.c.l.b16 %v175
    %v803 = vunpack.c.h.b16 %v175
    %v804 = vunpack.c.l.b16 %v176
    %v805 = vunpack.c.h.b16 %v176
    %v806 = vunpack.c.l.b16 %v177
    %v807 = vunpack.c.h.b16 %v177
    %v808 = vunpack.c.l.b16 %v178
    %v809 = vunpack.c.h.b16 %v178
    %v810 = vunpack.c.l.b16 %v179
    %v811 = vunpack.c.h.b16 %v179
    %v812 = vunpack.c.l.b16 %v180
    %v813 = vunpack.c.h.b16 %v180
    %v814 = vunpack.c.l.b16 %v181
    %v815 = vunpack.c.h.b16 %v181
    %v816 = vunpack.c.l.b16 %v182
    %v817 = vunpack.c.h.b16 %v182
    %v818 = vunpack.c.l.b16 %v183
    %v819 = vunpack.c.h.b16 %v183
    %v820 = vunpack.c.l.b16 %v184
    %v821 = vunpack.c.h.b16 %v184
    %v822 = vunpack.c.l.b16 %v185
    %v823 = vunpack.c.h.b16 %v185
    %v824 = vunpack.c.l.b16 %v186
    %v825 = vunpack.c.h.b16 %v186
    %v826 = vunpack.c.l.b16 %v187
    %v827 = vunpack.c.h.b16 %v187
    %v828 = vunpack.c.l.b16 %v188
    %v829 = vunpack.c.h.b16 %v188
    %v830 = vunpack.c.l.b16 %v189
    %v831 = vunpack.c.h.b16 %v189
    %v832 = vunpack.c.l.b16 %v190
    %v833 = vunpack.c.h.b16 %v190
    %v834 = vunpack.c.l.b16 %v191
    %v835 = vunpack.c.h.b16 %v191
    %v836 = vunpack.c.l.b16 %v192
    %v837 = vunpack.c.h.b16 %v192
    %v838 = vunpack.c.l.b16 %v193
    %v839 = vunpack.c.h.b16 %v193
    %v840 = vunpack.c.l.b16 %v194
    %v841 = vunpack.c.h.b16 %v194
    %v842 = vunpack.c.l.b16 %v195
    %v843 = vunpack.c.h.b16 %v195
    %v844 = vunpack.c.l.b16 %v196
    %v845 = vunpack.c.h.b16 %v196
    %v846 = vunpack.c.l.b16 %v197
    %v847 = vunpack.c.h.b16 %v197
    %v848 = vunpack.c.l.b16 %v198
    %v849 = vunpack.c.h.b16 %v198
    %v850 = vunpack.c.l.b16 %v199
    %v851 = vunpack.c.h.b16 %v199
    %v852 = vunpack.c.l.b16 %v200
    %v853 = vunpack.c.h.b16 %v200
    %v854 = vunpack.c.l.b16 %v201
    %v855 = vunpack.c.h.b16 %v201
    %v856 = vunpack.c.l.b16 %v202
    %v857 = vunpack.c.h.b16 %v202
    %v858 = vunpack.c.l.b16 %v203
    %v859 = vunpack.c.h.b16 %v203
    %v860 = vunpack.c.l.b16 %v204
    %v861 = vunpack.c.h.b16 %v204
    %v862 = vunpack.c.l.b16 %v205
    %v863 = vunpack.c.h.b16 %v205
    %v864 = vunpack.c.l.b16 %v206
    %v865 = vunpack.c.h.b16 %v206
    %v866 = vunpack.c.l.b16 %v207
    %v867 = vunpack.c.h.b16 %v207
    %v868 = vunpack.c.l.b16 %v208
    %v869 = vunpack.c.h.b16 %v208
    %v870 = vunpack.c.l.b16 %v209
    %v871 = vunpack.c.h.b16 %v209
    %v872 = vunpack.c.l.b16 %v210
    %v873 = vunpack.c.h.b16 %v210
    %v874 = vunpack.c.l.b16 %v211
    %v875 = vunpack.c.h.b16 %v211
    %v876 = vunpack.c.l.b16 %v212
    %v877 = vunpack.c.h.b16 %v212
    %v878 = vunpack.c.l.b16 %v213
    %v879 = vunpack.c.h.b16 %v213
    %v880 = vunpack.c.l.b16 %v214
    %v881 = vunpack.c.h.b16 %v214
    %v882 = vunpack.c.l.b16 %v215
    %v883 = vunpack.c.h.b16 %v215
    %v884 = vunpack.c.l.b16 %v216
    %v885 = vunpack.c.h.b16 %v216
    %v886 = vunpack.c.l.b16 %v217
    %v887 = vunpack.c.h.b16 %v217
    %v888 = vunpack.c.l.b16 %v218
    %v889 = vunpack.c.h.b16 %v218
    %v890 = vunpack.c.l.b16 %v219
    %v891 = vunpack.c.h.b16 %v219
    %v892 = vunpack.c.l.b16 %v220
    %v893 = vunpack.c.h.b16 %v220
    %v894 = vunpack.c.l.b16 %v221
    %v895 = vunpack.c.h.b16 %v221
    %v896 = vunpack.c.l.b16 %v222
    %v897 = vunpack.c.h.b16 %v222
    %v898 = vunpack.c.l.b16 %v223
    %v899 = vunpack.c.h.b16 %v223
    %v900 = vunpack.c.l.b16 %v224
    %v901 = vunpack.c.h.b16 %v224
    %v902 = vunpack.c.l.b16 %v225
    %v903 = vunpack.c.h.b16 %v225
    %v904 = vunpack.c.l.b16 %v226
    %v905 = vunpack.c.h.b16 %v226
    %v906 = vunpack.c.l.b16 %v227
    %v907 = vunpack.c.h.b16 %v227
    %v908 = vunpack.c.l.b16 %v228
    %v909 = vunpack.c.h.b16 %v228
    %v910 = vunpack.c.l.b16 %v229
    %v911 = vunpack.c.h.b16 %v229
    %v912 = vunpack.c.l.b16 %v230
    %v913 = vunpack.c.h.b16 %v230
    %v914 = vunpack.c.l.b16 %v231
    %v915 = vunpack.c.h.b16 %v231
    %v916 = vunpack.c.l.b16 %v232
    %v917 = vunpack.c.h.b16 %v232
    %v918 = vunpack.c.l.b16 %v233
    %v919 = vunpack.c.h.b16 %v233
    %v920 = vunpack.c.l.b16 %v234
    %v921 = vunpack.c.h.b16 %v234
    %v922 = vunpack.c.l.b16 %v235
    %v923 = vunpack.c.h.b16 %v235
    %v924 = vunpack.c.l.b16 %v236
    %v925 = vunpack.c.h.b16 %v236
    %v926 = vunpack.c.l.b16 %v237
    %v927 = vunpack.c.h.b16 %v237
    %v928 = vunpack.c.l.b16 %v238
    %v929 = vunpack.c.h.b16 %v238
    %v930 = vunpack.c.l.b16 %v239
    %v931 = vunpack.c.h.b16 %v239
    %v932 = vunpack.c.l.b16 %v240
    %v933 = vunpack.c.h.b16 %v240
    %v934 = vunpack.c.l.b16 %v241
    %v935 = vunpack.c.h.b16 %v241
    %v936 = vunpack.c.l.b16 %v242
    %v937 = vunpack.c.h.b16 %v242
    %v938 = vunpack.c.l.b16 %v243
    %v939 = vunpack.c.h.b16 %v243
    %v940 = vunpack.c.l.b16 %v244
    %v941 = vunpack.c.h.b16 %v244
    %v942 = vunpack.c.l.b16 %v245
    %v943 = vunpack.c.h.b16 %v245
    %v944 = vunpack.c.l.b16 %v246
    %v945 = vunpack.c.h.b16 %v246
    %v946 = vunpack.c.l.b16 %v247
    %v947 = vunpack.c.h.b16 %v247
    %v948 = vunpack.c.l.b16 %v248
    %v949 = vunpack.c.h.b16 %v248
    %v950 = vunpack.c.l.b16 %v249
    %v951 = vunpack.c.h.b16 %v249
    %v952 = vunpack.c.l.b16 %v250
    %v953 = vunpack.c.h.b16 %v250
    %v954 = vunpack.c.l.b16 %v251
    %v955 = vunpack.c.h.b16 %v251
    %v956 = vunpack.c.l.b16 %v252
    %v957 = vunpack.c.h.b16 %v252
    %v958 = vunpack.c.l.b16 %v253
    %v959 = vunpack.c.h.b16 %v253
    %v960 = vunpack.c.l.b16 %v254
    %v961 = vunpack.c.h.b16 %v254
    %v962 = vunpack.c.l.b16 %v255
    %v963 = vunpack.c.h.b16 %v255
    %v964 = vunpack.c.l.b16 %v256
    %v965 = vunpack.c.h.b16 %v256
    %v966 = vunpack.c.l.b16 %v257
    %v967 = vunpack.c.h.b16 %v257
    %v968 = vunpack.c.l.b16 %v258
    %v969 = vunpack.c.h.b16 %v258
    %v970 = vunpack.c.l.b16 %v259
    %v971 = vunpack.c.h.b16 %v259
    %v972 = vunpack.c.l.b16 %v260
    %v973 = vunpack.c.h.b16 %v260
    %v974 = vunpack.c.l.b16 %v261
    %v975 = vunpack.c.h.b16 %v261
    %v976 = vunpack.c.l.b16 %v262
    %v977 = vunpack.c.h.b16 %v262
    %v978 = vunpack.c.l.b16 %v263
    %v979 = vunpack.c.h.b16 %v263
    %v980 = vunpack.c.l.b16 %v264
    %v981 = vunpack.c.h.b16 %v264
    %v982 = vunpack.c.l.b16 %v265
    %v983 = vunpack.c.h.b16 %v265
    %v984 = vunpack.c.l.b16 %v266
    %v985 = vunpack.c.h.b16 %v266
    %v986 = vunpack.c.l.b16 %v267
    %v987 = vunpack.c.h.b16 %v267
    %v988 = vunpack.c.l.b16 %v268
    %v989 = vunpack.c.h.b16 %v268
    %v990 = vunpack.c.l.b16 %v269
    %v991 = vunpack.c.h.b16 %v269
    %v992 = vunpack.c.l.b16 %v270
    %v993 = vunpack.c.h.b16 %v270
    %v994 = vunpack.c.l.b16 %v271
    %v995 = vunpack.c.h.b16 %v271
    %v996 = vunpack.c.l.b16 %v272
    %v997 = vunpack.c.h.b16 %v272
    %v998 = vunpack.c.l.b16 %v273
    %v999 = vunpack.c.h.b16 %v273
    %v1000 = vunpack.c.l.b16 %v274
    %v1001 = vunpack.c.h.b16 %v274
    %v1002 = vunpack.c.l.b16 %v275
    %v1003 = vunpack.c.h.b16 %v275
    %v1004 = vunpack.c.l.b16 %v276
    %v1005 = vunpack.c.h.b16 %v276
    %v1006 = vunpack.c.l.b16 %v277
    %v1007 = vunpack.c.h.b16 %v277
    %v1008 = vunpack.c.l.b16 %v278
    %v1009 = vunpack.c.h.b16 %v278
    %v1010 = vunpack.c.l.b16 %v279
    %v1011 = vunpack.c.h.b16 %v279
    %v1012 = vunpack.c.l.b16 %v280
    %v1013 = vunpack.c.h.b16 %v280
    %v1014 = vunpack.c.l.b16 %v281
    %v1015 = vunpack.c.h.b16 %v281
    %v1016 = vunpack.c.l.b16 %v282
    %v1017 = vunpack.c.h.b16 %v282
    %v1018 = vunpack.c.l.b16 %v283
    %v1019 = vunpack.c.h.b16 %v283
    %v1020 = vunpack.c.l.b16 %v284
    %v1021 = vunpack.c.h.b16 %v284
    %v1022 = vunpack.c.l.b16 %v285
    %v1023 = vunpack.c.h.b16 %v285
    %v1024 = vunpack.c.l.b16 %v286
    %v1025 = vunpack.c.h.b16 %v286
    %v1026 = vunpack.c.l.b16 %v287
    %v1027 = vunpack.c.h.b16 %v287
    %v1028 = vunpack.c.l.b16 %v288
    %v1029 = vunpack.c.h.b16 %v288
    %v1030 = vunpack.c.l.b16 %v289
    %v1031 = vunpack.c.h.b16 %v289
    %v1032 = vunpack.c.l.b16 %v290
    %v1033 = vunpack.c.h.b16 %v290
    %v1034 = vunpack.c.l.b16 %v291
    %v1035 = vunpack.c.h.b16 %v291
    %v1036 = vunpack.c.l.b16 %v292
    %v1037 = vunpack.c.h.b16 %v292
    %v1038 = vunpack.c.l.b16 %v293
    %v1039 = vunpack.c.h.b16 %v293
    %v1040 = vunpack.c.l.b16 %v294
    %v1041 = vunpack.c.h.b16 %v294
    %v1042 = vunpack.c.l.b16 %v295
    %v1043 = vunpack.c.h.b16 %v295
    %v1044 = vunpack.c.l.b16 %v296
    %v1045 = vunpack.c.h.b16 %v296
    %v1046 = vunpack.c.l.b16 %v297
    %v1047 = vunpack.c.h.b16 %v297
    %v1048 = vunpack.c.l.b16 %v298
    %v1049 = vunpack.c.h.b16 %v298
    %v1050 = vunpack.c.l.b16 %v299
    %v1051 = vunpack.c.h.b16 %v299
    %v1052 = vunpack.c.l.b16 %v300
    %v1053 = vunpack.c.h.b16 %v300
    %v1054 = vunpack.c.l.b16 %v301
    %v1055 = vunpack.c.h.b16 %v301
    %v1056 = vunpack.c.l.b16 %v302
    %v1057 = vunpack.c.h.b16 %v302
    %v1058 = vunpack.c.l.b16 %v303
    %v1059 = vunpack.c.h.b16 %v303
    %v1060 = vunpack.c.l.b16 %v304
    %v1061 = vunpack.c.h.b16 %v304
    %v1062 = vunpack.c.l.b16 %v305
    %v1063 = vunpack.c.h.b16 %v305
    %v1064 = vunpack.c.l.b16 %v306
    %v1065 = vunpack.c.h.b16 %v306
    %v1066 = vunpack.c.l.b16 %v307
    %v1067 = vunpack.c.h.b16 %v307
    %v1068 = vunpack.c.l.b16 %v308
    %v1069 = vunpack.c.h.b16 %v308
    %v1070 = vunpack.c.l.b16 %v309
    %v1071 = vunpack.c.h.b16 %v309
    %v1072 = vunpack.c.l.b16 %v310
    %v1073 = vunpack.c.h.b16 %v310
    %v1074 = vunpack.c.l.b16 %v311
    %v1075 = vunpack.c.h.b16 %v311
    %v1076 = vunpack.c.l.b16 %v312
    %v1077 = vunpack.c.h.b16 %v312
    %v1078 = vunpack.c.l.b16 %v313
    %v1079 = vunpack.c.h.b16 %v313
    %v1080 = vunpack.c.l.b16 %v314
    %v1081 = vunpack.c.h.b16 %v314
    %v1082 = vunpack.c.l.b16 %v315
    %v1083 = vunpack.c.h.b16 %v315
    %v1084 = vunpack.c.l.b16 %v316
    %v1085 = vunpack.c.h.b16 %v316
    %v1086 = vunpack.c.l.b16 %v317
    %v1087 = vunpack.c.h.b16 %v317
    %v1088 = vunpack.c.l.b16 %v318
    %v1089 = vunpack.c.h.b16 %v318
    %v1090 = vunpack.c.l.b16 %v319
    %v1091 = vunpack.c.h.b16 %v319
    %v1092 = vunpack.c.l.b16 %v320
    %v1093 = vunpack.c.h.b16 %v320
    %v1094 = vunpack.c.l.b16 %v321
    %v1095 = vunpack.c.h.b16 %v321
    %v1096 = vunpack.c.l.b16 %v322
    %v1097 = vunpack.c.h.b16 %v322
    %v1098 = vunpack.c.l.b16 %v323
    %v1099 = vunpack.c.h.b16 %v323
    %v1100 = vunpack.c.l.b16 %v324
    %v1101 = vunpack.c.h.b16 %v324
    %v1102 = vunpack.c.l.b16 %v325
    %v1103 = vunpack.c.h.b16 %v325
    %v1104 = vunpack.c.l.b16 %v326
    %v1105 = vunpack.c.h.b16 %v326
    %v1106 = vunpack.c.l.b16 %v327
    %v1107 = vunpack.c.h.b16 %v327
    %v1108 = vunpack.c.l.b16 %v328
    %v1109 = vunpack.c.h.b16 %v328
    %v1110 = vunpack.c.l.b16 %v329
    %v1111 = vunpack.c.h.b16 %v329
    %v1112 = vunpack.c.l.b16 %v330
    %v1113 = vunpack.c.h.b16 %v330
    %v1114 = vunpack.c.l.b16 %v331
    %v1115 = vunpack.c.h.b16 %v331
    %v1116 = vunpack.c.l.b16 %v332
    %v1117 = vunpack.c.h.b16 %v332
    %v1118 = vunpack.c.l.b16 %v333
    %v1119 = vunpack.c.h.b16 %v333
    %v1120 = vunpack.c.l.b16 %v334
    %v1121 = vunpack.c.h.b16 %v334
    %v1122 = vunpack.c.l.b16 %v335
    %v1123 = vunpack.c.h.b16 %v335
    %v1124 = vunpack.c.l.b16 %v336
    %v1125 = vunpack.c.h.b16 %v336
    %v1126 = vunpack.c.l.b16 %v337
    %v1127 = vunpack.c.h.b16 %v337
    %v1128 = vpack.c.b16 %v620, %v616
    %v1129 = vpack.c.b16 %v621, %v617
    %v1130 = vpack.c.b16 %v622, %v618
    %v1131 = vpack.c.b16 %v623, %v619
    %v1132 = vpack.c.b16 %v628, %v624
    %v1133 = vpack.c.b16 %v629, %v625
    %v1134 = vpack.c.b16 %v630, %v626
    %v1135 = vpack.c.b16 %v631, %v627
    %v1136 = vpack.c.b16 %v636, %v632
    %v1137 = vpack.c.b16 %v637, %v633
    %v1138 = vpack.c.b16 %v638, %v634
    %v1139 = vpack.c.b16 %v639, %v635
    %v1140 = vpack.c.b16 %v644, %v640
    %v1141 = vpack.c.b16 %v645, %v641
    %v1142 = vpack.c.b16 %v646, %v642
    %v1143 = vpack.c.b16 %v647, %v643
    %v1144 = vpack.c.b16 %v652, %v648
    %v1145 = vpack.c.b16 %v653, %v649
    %v1146 = vpack.c.b16 %v654, %v650
    %v1147 = vpack.c.b16 %v655, %v651
    %v1148 = vpack.c.b16 %v660, %v656
    %v1149 = vpack.c.b16 %v661, %v657
    %v1150 = vpack.c.b16 %v662, %v658
    %v1151 = vpack.c.b16 %v663, %v659
    %v1152 = vpack.c.b16 %v668, %v664
    %v1153 = vpack.c.b16 %v669, %v665
    %v1154 = vpack.c.b16 %v670, %v666
    %v1155 = vpack.c.b16 %v671, %v667
    %v1156 = vpack.c.b16 %v676, %v672
    %v1157 = vpack.c.b16 %v677, %v673
    %v1158 = vpack.c.b16 %v678, %v674
    %v1159 = vpack.c.b16 %v679, %v675
    %v1160 = vpack.c.b16 %v684, %v680
    %v1161 = vpack.c.b16 %v685, %v681
    %v1162 = vpack.c.b16 %v686, %v682
    %v1163 = vpack.c.b16 %v687, %v683
    %v1164 = vpack.c.b16 %v692, %v688
    %v1165 = vpack.c.b16 %v693, %v689
    %v1166 = vpack.c.b16 %v694, %v690
    %v1167 = vpack.c.b16 %v695, %v691
    %v1168 = vpack.c.b16 %v700, %v696
    %v1169 = vpack.c.b16 %v701, %v697
    %v1170 = vpack.c.b16 %v702, %v698
    %v1171 = vpack.c.b16 %v703, %v699
    %v1172 = vpack.c.b16 %v708, %v704
    %v1173 = vpack.c.b16 %v709, %v705
    %v1174 = vpack.c.b16 %v710, %v706
    %v1175 = vpack.c.b16 %v711, %v707
    %v1176 = vpack.c.b16 %v716, %v712
    %v1177 = vpack.c.b16 %v717, %v713
    %v1178 = vpack.c.b16 %v718, %v714
    %v1179 = vpack.c.b16 %v719, %v715
    %v1180 = vpack.c.b16 %v724, %v720
    %v1181 = vpack.c.b16 %v725, %v721
    %v1182 = vpack.c.b16 %v726, %v722
    %v1183 = vpack.c.b16 %v727, %v723
    %v1184 = vpack.c.b16 %v732, %v728
    %v1185 = vpack.c.b16 %v733, %v729
    %v1186 = vpack.c.b16 %v734, %v730
    %v1187 = vpack.c.b16 %v735, %v731
    %v1188 = vpack.c.b16 %v740, %v736
    %v1189 = vpack.c.b16 %v741, %v737
    %v1190 = vpack.c.b16 %v742, %v738
    %v1191 = vpack.c.b16 %v743, %v739
    %v1192 = vpack.c.b16 %v748, %v744
    %v1193 = vpack.c.b16 %v749, %v745
    %v1194 = vpack.c.b16 %v750, %v746
    %v1195 = vpack.c.b16 %v751, %v747
    %v1196 = vpack.c.b16 %v756, %v752
    %v1197 = vpack.c.b16 %v757, %v753
    %v1198 = vpack.c.b16 %v758, %v754
    %v1199 = vpack.c.b16 %v759, %v755
    %v1200 = vpack.c.b16 %v764, %v760
    %v1201 = vpack.c.b16 %v765, %v761
    %v1202 = vpack.c.b16 %v766, %v762
    %v1203 = vpack.c.b16 %v767, %v763
    %v1204 = vpack.c.b16 %v772, %v768
    %v1205 = vpack.c.b16 %v773, %v769
    %v1206 = vpack.c.b16 %v774, %v770
    %v1207 = vpack.c.b16 %v775, %v771
    %v1208 = vpack.c.b16 %v780, %v776
    %v1209 = vpack.c.b16 %v781, %v777
    %v1210 = vpack.c.b16 %v782, %v778
    %v1211 = vpack.c.b16 %v783, %v779
    %v1212 = vpack.c.b16 %v788, %v784
    %v1213 = vpack.c.b16 %v789, %v785
    %v1214 = vpack.c.b16 %v790, %v786
    %v1215 = vpack.c.b16 %v791, %v787
    %v1216 = vpack.c.b16 %v796, %v792
    %v1217 = vpack.c.b16 %v797, %v793
    %v1218 = vpack.c.b16 %v798, %v794
    %v1219 = vpack.c.b16 %v799, %v795
    %v1220 = vpack.c.b16 %v804, %v800
    %v1221 = vpack.c.b16 %v805, %v801
    %v1222 = vpack.c.b16 %v806, %v802
    %v1223 = vpack.c.b16 %v807, %v803
    %v1224 = vpack.c.b16 %v812, %v808
    %v1225 = vpack.c.b16 %v813, %v809
    %v1226 = vpack.c.b16 %v814, %v810
    %v1227 = vpack.c.b16 %v815, %v811
    %v1228 = vpack.c.b16 %v820, %v816
    %v1229 = vpack.c.b16 %v821, %v817
    %v1230 = vpack.c.b16 %v822, %v818
    %v1231 = vpack.c.b16 %v823, %v819
    %v1232 = vpack.c.b16 %v828, %v824
    %v1233 = vpack.c.b16 %v829, %v825
    %v1234 = vpack.c.b16 %v830, %v826
    %v1235 = vpack.c.b16 %v831, %v827
    %v1236 = vpack.c.b16 %v836, %v832
    %v1237 = vpack.c.b16 %v837, %v833
    %v1238 = vpack.c.b16 %v838, %v834
    %v1239 = vpack.c.b16 %v839, %v835
    %v1240 = vpack.c.b16 %v844, %v840
    %v1241 = vpack.c.b16 %v845, %v841
    %v1242 = vpack.c.b16 %v846, %v842
    %v1243 = vpack.c.b16 %v847, %v843
    %v1244 = vpack.c.b16 %v852, %v848
    %v1245 = vpack.c.b16 %v853, %v849
    %v1246 = vpack.c.b16 %v854, %v850
    %v1247 = vpack.c.b16 %v855, %v851
    %v1248 = vpack.c.b16 %v860, %v856
    %v1249 = vpack.c.b16 %v861, %v857
    %v1250 = vpack.c.b16 %v862, %v858
    %v1251 = vpack.c.b16 %v863, %v859
    %v1252 = vpack.c.b16 %v868, %v864
    %v1253 = vpack.c.b16 %v869, %v865
    %v1254 = vpack.c.b16 %v870, %v866
    %v1255 = vpack.c.b16 %v871, %v867
    %v1256 = vpack.c.b16 %v876, %v872
    %v1257 = vpack.c.b16 %v877, %v873
    %v1258 = vpack.c.b16 %v878, %v874
    %v1259 = vpack.c.b16 %v879, %v875
    %v1260 = vpack.c.b16 %v884, %v880
    %v1261 = vpack.c.b16 %v885, %v881
    %v1262 = vpack.c.b16 %v886, %v882
    %v1263 = vpack.c.b16 %v887, %v883
    %v1264 = vpack.c.b16 %v892, %v888
    %v1265 = vpack.c.b16 %v893, %v889
    %v1266 = vpack.c.b16 %v894, %v890
    %v1267 = vpack.c.b16 %v895, %v891
    %v1268 = vpack.c.b16 %v900, %v896
    %v1269 = vpack.c.b16 %v901, %v897
    %v1270 = vpack.c.b16 %v902, %v898
    %v1271 = vpack.c.b16 %v903, %v899
    %v1272 = vpack.c.b16 %v908, %v904
    %v1273 = vpack.c.b16 %v909, %v905
    %v1274 = vpack.c.b16 %v910, %v906
    %v1275 = vpack.c.b16 %v911, %v907
    %v1276 = vpack.c.b16 %v916, %v912
    %v1277 = vpack.c.b16 %v917, %v913
    %v1278 = vpack.c.b16 %v918, %v914
    %v1279 = vpack.c.b16 %v919, %v915
    %v1280 = vpack.c.b16 %v924, %v920
    %v1281 = vpack.c.b16 %v925, %v921
    %v1282 = vpack.c.b16 %v926, %v922
    %v1283 = vpack.c.b16 %v927, %v923
    %v1284 = vpack.c.b16 %v932, %v928
    %v1285 = vpack.c.b16 %v933, %v929
    %v1286 = vpack.c.b16 %v934, %v930
    %v1287 = vpack.c.b16 %v935, %v931
    %v1288 = vpack.c.b16 %v940, %v936
    %v1289 = vpack.c.b16 %v941, %v937
    %v1290 = vpack.c.b16 %v942, %v938
    %v1291 = vpack.c.b16 %v943, %v939
    %v1292 = vpack.c.b16 %v948, %v944
    %v1293 = vpack.c.b16 %v949, %v945
    %v1294 = vpack.c.b16 %v950, %v946
    %v1295 = vpack.c.b16 %v951, %v947
    %v1296 = vpack.c.b16 %v956, %v952
    %v1297 = vpack.c.b16 %v957, %v953
    %v1298 = vpack.c.b16 %v958, %v954
    %v1299 = vpack.c.b16 %v959, %v955
    %v1300 = vpack.c.b16 %v964, %v960
    %v1301 = vpack.c.b16 %v965, %v961
    %v1302 = vpack.c.b16 %v966, %v962
    %v1303 = vpack.c.b16 %v967, %v963
    %v1304 = vpack.c.b16 %v972, %v968
    %v1305 = vpack.c.b16 %v973, %v969
    %v1306 = vpack.c.b16 %v974, %v970
    %v1307 = vpack.c.b16 %v975, %v971
    %v1308 = vpack.c.b16 %v980, %v976
    %v1309 = vpack.c.b16 %v981, %v977
    %v1310 = vpack.c.b16 %v982, %v978
    %v1311 = vpack.c.b16 %v983, %v979
    %v1312 = vpack.c.b16 %v988, %v984
    %v1313 = vpack.c.b16 %v989, %v985
    %v1314 = vpack.c.b16 %v990, %v986
    %v1315 = vpack.c.b16 %v991, %v987
    %v1316 = vpack.c.b16 %v996, %v992
    %v1317 = vpack.c.b16 %v997, %v993
    %v1318 = vpack.c.b16 %v998, %v994
    %v1319 = vpack.c.b16 %v999, %v995
    %v1320 = vpack.c.b16 %v1004, %v1000
    %v1321 = vpack.c.b16 %v1005, %v1001
    %v1322 = vpack.c.b16 %v1006, %v1002
    %v1323 = vpack.c.b16 %v1007, %v1003
    %v1324 = vpack.c.b16 %v1012, %v1008
    %v1325 = vpack.c.b16 %v1013, %v1009
    %v1326 = vpack.c.b16 %v1014, %v1010
    %v1327 = vpack.c.b16 %v1015, %v1011
    %v1328 = vpack.c.b16 %v1020, %v1016
    %v1329 = vpack.c.b16 %v1021, %v1017
    %v1330 = vpack.c.b16 %v1022, %v1018
    %v1331 = vpack.c.b16 %v1023, %v1019
    %v1332 = vpack.c.b16 %v1028, %v1024
    %v1333 = vpack.c.b16 %v1029, %v1025
    %v1334 = vpack.c.b16 %v1030, %v1026
    %v1335 = vpack.c.b16 %v1031, %v1027
    %v1336 = vpack.c.b16 %v1036, %v1032
    %v1337 = vpack.c.b16 %v1037, %v1033
    %v1338 = vpack.c.b16 %v1038, %v1034
    %v1339 = vpack.c.b16 %v1039, %v1035
    %v1340 = vpack.c.b16 %v1044, %v1040
    %v1341 = vpack.c.b16 %v1045, %v1041
    %v1342 = vpack.c.b16 %v1046, %v1042
    %v1343 = vpack.c.b16 %v1047, %v1043
    %v1344 = vpack.c.b16 %v1052, %v1048
    %v1345 = vpack.c.b16 %v1053, %v1049
    %v1346 = vpack.c.b16 %v1054, %v1050
    %v1347 = vpack.c.b16 %v1055, %v1051
    %v1348 = vpack.c.b16 %v1060, %v1056
    %v1349 = vpack.c.b16 %v1061, %v1057
    %v1350 = vpack.c.b16 %v1062, %v1058
    %v1351 = vpack.c.b16 %v1063, %v1059
    %v1352 = vpack.c.b16 %v1068, %v1064
    %v1353 = vpack.c.b16 %v1069, %v1065
    %v1354 = vpack.c.b16 %v1070, %v1066
    %v1355 = vpack.c.b16 %v1071, %v1067
    %v1356 = vpack.c.b16 %v1076, %v1072
    %v1357 = vpack.c.b16 %v1077, %v1073
    %v1358 = vpack.c.b16 %v1078, %v1074
    %v1359 = vpack.c.b16 %v1079, %v1075
    %v1360 = vpack.c.b16 %v1084, %v1080
    %v1361 = vpack.c.b16 %v1085, %v1081
    %v1362 = vpack.c.b16 %v1086, %v1082
    %v1363 = vpack.c.b16 %v1087, %v1083
    %v1364 = vpack.c.b16 %v1092, %v1088
    %v1365 = vpack.c.b16 %v1093, %v1089
    %v1366 = vpack.c.b16 %v1094, %v1090
    %v1367 = vpack.c.b16 %v1095, %v1091
    %v1368 = vpack.c.b16 %v1100, %v1096
    %v1369 = vpack.c.b16 %v1101, %v1097
    %v1370 = vpack.c.b16 %v1102, %v1098
    %v1371 = vpack.c.b16 %v1103, %v1099
    %v1372 = vpack.c.b16 %v1108, %v1104
    %v1373 = vpack.c.b16 %v1109, %v1105
    %v1374 = vpack.c.b16 %v1110, %v1106
    %v1375 = vpack.c.b16 %v1111, %v1107
    %v1376 = vpack.c.b16 %v1116, %v1112
    %v1377 = vpack.c.b16 %v1117, %v1113
    %v1378 = vpack.c.b16 %v1118, %v1114
    %v1379 = vpack.c.b16 %v1119, %v1115
    %v1380 = vpack.c.b16 %v1124, %v1120
    %v1381 = vpack.c.b16 %v1125, %v1121
    %v1382 = vpack.c.b16 %v1126, %v1122
    %v1383 = vpack.c.b16 %v1127, %v1123
    %1640 = vmatprep.subr.bf16.mxu0 %v1157
    %1641 = vmatpush1.bf16.msra.mxu0 %v1156
    %1642 = vmatprep.subr.bf16.mxu0 %v1153
    %1643 = vmatpush1.bf16.msra.mxu0 %v1152
    %1644 = vmatprep.subr.bf16.mxu0 %v1149
    %1645 = vmatpush1.bf16.msra.mxu0 %v1148
    %1646 = vmatprep.subr.bf16.mxu0 %v1145
    %1647 = vmatpush1.bf16.msra.mxu0 %v1144
    %1648 = vmatprep.subr.bf16.mxu0 %v1141
    %1649 = vmatpush1.bf16.msra.mxu0 %v1140
    %1650 = vmatprep.subr.bf16.mxu0 %v1137
    %1651 = vmatpush1.bf16.msra.mxu0 %v1136
    %1652 = vmatprep.subr.bf16.mxu0 %v1133
    %1653 = vmatpush1.bf16.msra.mxu0 %v1132
    %1654 = vmatprep.subr.bf16.mxu0 %v1129
    %1655 = vmatpush1.bf16.msra.mxu0 %v1128
    %1656 = vmatprep.subr.bf16.mxu0 %v1189
    %1657 = vmatpush2.bf16.msra.mxu0 %v1188
    %1658 = vmatprep.subr.bf16.mxu0 %v1185
    %1659 = vmatpush2.bf16.msra.mxu0 %v1184
    %1660 = vmatprep.subr.bf16.mxu0 %v1181
    %1661 = vmatpush2.bf16.msra.mxu0 %v1180
    %1662 = vmatprep.subr.bf16.mxu0 %v1177
    %1663 = vmatpush2.bf16.msra.mxu0 %v1176
    %1664 = vmatprep.subr.bf16.mxu0 %v1173
    %1665 = vmatpush2.bf16.msra.mxu0 %v1172
    %1666 = vmatprep.subr.bf16.mxu0 %v1169
    %1667 = vmatpush2.bf16.msra.mxu0 %v1168
    %1668 = vmatprep.subr.bf16.mxu0 %v1165
    %1669 = vmatpush2.bf16.msra.mxu0 %v1164
    %1670 = vmatprep.subr.bf16.mxu0 %v1161
    %1671 = vmatpush2.bf16.msra.mxu0 %v1160
    %1672 = vmatprep.mubr.bf16.mxu0 %v75
    %1673 = vmatmul.mubr.bf16.gmra.mxu0 %v74
    %v1674 = vpop.f32.mrf.mxu0
    %v1675 = vadd.f32 %v343, %v1674
    %v1676 = vpop.f32.mrf.mxu0
    %v1677 = vadd.f32 %v347, %v1676
    %v1678 = vpop.f32.mrf.mxu0
    %v1679 = vpop.f32.mrf.mxu0
    %1680 = vdwg.mxu0
    %1681 = vmatprep.subr.bf16.mxu0 %v1221
    %1682 = vmatpush1.bf16.msra.mxu0 %v1220
    %1683 = vmatprep.subr.bf16.mxu0 %v1217
    %1684 = vmatpush1.bf16.msra.mxu0 %v1216
    %1685 = vmatprep.subr.bf16.mxu0 %v1213
    %1686 = vmatpush1.bf16.msra.mxu0 %v1212
    %1687 = vmatprep.subr.bf16.mxu0 %v1209
    %1688 = vmatpush1.bf16.msra.mxu0 %v1208
    %1689 = vmatprep.subr.bf16.mxu0 %v1205
    %1690 = vmatpush1.bf16.msra.mxu0 %v1204
    %1691 = vmatprep.subr.bf16.mxu0 %v1201
    %1692 = vmatpush1.bf16.msra.mxu0 %v1200
    %1693 = vmatprep.subr.bf16.mxu0 %v1197
    %1694 = vmatpush1.bf16.msra.mxu0 %v1196
    %1695 = vmatprep.subr.bf16.mxu0 %v1193
    %1696 = vmatpush1.bf16.msra.mxu0 %v1192
    %1697 = vmatprep.subr.bf16.mxu0 %v1253
    %1698 = vmatpush2.bf16.msra.mxu0 %v1252
    %1699 = vmatprep.subr.bf16.mxu0 %v1249
    %1700 = vmatpush2.bf16.msra.mxu0 %v1248
    %1701 = vmatprep.subr.bf16.mxu0 %v1245
    %1702 = vmatpush2.bf16.msra.mxu0 %v1244
    %1703 = vmatprep.subr.bf16.mxu0 %v1241
    %1704 = vmatpush2.bf16.msra.mxu0 %v1240
    %1705 = vmatprep.subr.bf16.mxu0 %v1237
    %1706 = vmatpush2.bf16.msra.mxu0 %v1236
    %1707 = vmatprep.subr.bf16.mxu0 %v1233
    %1708 = vmatpush2.bf16.msra.mxu0 %v1232
    %1709 = vmatprep.subr.bf16.mxu0 %v1229
    %1710 = vmatpush2.bf16.msra.mxu0 %v1228
    %1711 = vmatprep.subr.bf16.mxu0 %v1225
    %1712 = vmatpush2.bf16.msra.mxu0 %v1224
    %1713 = vmatprep.mubr.bf16.mxu0 %v77
    %1714 = vmatmul.mubr.bf16.gmra.mxu0 %v76
    %v1715 = vpop.f32.mrf.mxu0
    %v1716 = vadd.f32 %v1675, %v1715
    %v1717 = vpop.f32.mrf.mxu0
    %v1718 = vadd.f32 %v1677, %v1717
    %v1719 = vpop.f32.mrf.mxu0
    %v1720 = vpop.f32.mrf.mxu0
    %1721 = vdwg.mxu0
    %1722 = vmatprep.subr.bf16.mxu0 %v1285
    %1723 = vmatpush1.bf16.msra.mxu0 %v1284
    %1724 = vmatprep.subr.bf16.mxu0 %v1281
    %1725 = vmatpush1.bf16.msra.mxu0 %v1280
    %1726 = vmatprep.subr.bf16.mxu0 %v1277
    %1727 = vmatpush1.bf16.msra.mxu0 %v1276
    %1728 = vmatprep.subr.bf16.mxu0 %v1273
    %1729 = vmatpush1.bf16.msra.mxu0 %v1272
    %1730 = vmatprep.subr.bf16.mxu0 %v1269
    %1731 = vmatpush1.bf16.msra.mxu0 %v1268
    %1732 = vmatprep.subr.bf16.mxu0 %v1265
    %1733 = vmatpush1.bf16.msra.mxu0 %v1264
    %1734 = vmatprep.subr.bf16.mxu0 %v1261
    %1735 = vmatpush1.bf16.msra.mxu0 %v1260
    %1736 = vmatprep.subr.bf16.mxu0 %v1257
    %1737 = vmatpush1.bf16.msra.mxu0 %v1256
    %1738 = vmatprep.subr.bf16.mxu0 %v1317
    %1739 = vmatpush2.bf16.msra.mxu0 %v1316
    %1740 = vmatprep.subr.bf16.mxu0 %v1313
    %1741 = vmatpush2.bf16.msra.mxu0 %v1312
    %1742 = vmatprep.subr.bf16.mxu0 %v1309
    %1743 = vmatpush2.bf16.msra.mxu0 %v1308
    %1744 = vmatprep.subr.bf16.mxu0 %v1305
    %1745 = vmatpush2.bf16.msra.mxu0 %v1304
    %1746 = vmatprep.subr.bf16.mxu0 %v1301
    %1747 = vmatpush2.bf16.msra.mxu0 %v1300
    %1748 = vmatprep.subr.bf16.mxu0 %v1297
    %1749 = vmatpush2.bf16.msra.mxu0 %v1296
    %1750 = vmatprep.subr.bf16.mxu0 %v1293
    %1751 = vmatpush2.bf16.msra.mxu0 %v1292
    %1752 = vmatprep.subr.bf16.mxu0 %v1289
    %1753 = vmatpush2.bf16.msra.mxu0 %v1288
    %1754 = vmatprep.mubr.bf16.mxu0 %v79
    %1755 = vmatmul.mubr.bf16.gmra.mxu0 %v78
    %v1756 = vpop.f32.mrf.mxu0
    %v1757 = vadd.f32 %v1716, %v1756
    %v1758 = vpop.f32.mrf.mxu0
    %v1759 = vadd.f32 %v1718, %v1758
    %v1760 = vpop.f32.mrf.mxu0
    %v1761 = vpop.f32.mrf.mxu0
    %1762 = vdwg.mxu0
    %1763 = vmatprep.subr.bf16.mxu0 %v1349
    %1764 = vmatpush1.bf16.msra.mxu0 %v1348
    %1765 = vmatprep.subr.bf16.mxu0 %v1345
    %1766 = vmatpush1.bf16.msra.mxu0 %v1344
    %1767 = vmatprep.subr.bf16.mxu0 %v1341
    %1768 = vmatpush1.bf16.msra.mxu0 %v1340
    %1769 = vmatprep.subr.bf16.mxu0 %v1337
    %1770 = vmatpush1.bf16.msra.mxu0 %v1336
    %1771 = vmatprep.subr.bf16.mxu0 %v1333
    %1772 = vmatpush1.bf16.msra.mxu0 %v1332
    %1773 = vmatprep.subr.bf16.mxu0 %v1329
    %1774 = vmatpush1.bf16.msra.mxu0 %v1328
    %1775 = vmatprep.subr.bf16.mxu0 %v1325
    %1776 = vmatpush1.bf16.msra.mxu0 %v1324
    %1777 = vmatprep.subr.bf16.mxu0 %v1321
    %1778 = vmatpush1.bf16.msra.mxu0 %v1320
    %1779 = vmatprep.subr.bf16.mxu0 %v1381
    %1780 = vmatpush2.bf16.msra.mxu0 %v1380
    %1781 = vmatprep.subr.bf16.mxu0 %v1377
    %1782 = vmatpush2.bf16.msra.mxu0 %v1376
    %1783 = vmatprep.subr.bf16.mxu0 %v1373
    %1784 = vmatpush2.bf16.msra.mxu0 %v1372
    %1785 = vmatprep.subr.bf16.mxu0 %v1369
    %1786 = vmatpush2.bf16.msra.mxu0 %v1368
    %1787 = vmatprep.subr.bf16.mxu0 %v1365
    %1788 = vmatpush2.bf16.msra.mxu0 %v1364
    %1789 = vmatprep.subr.bf16.mxu0 %v1361
    %1790 = vmatpush2.bf16.msra.mxu0 %v1360
    %1791 = vmatprep.subr.bf16.mxu0 %v1357
    %1792 = vmatpush2.bf16.msra.mxu0 %v1356
    %1793 = vmatprep.subr.bf16.mxu0 %v1353
    %1794 = vmatpush2.bf16.msra.mxu0 %v1352
    %1795 = vmatprep.mubr.bf16.mxu0 %v81
    %1796 = vmatmul.mubr.bf16.gmra.mxu0 %v80
    %v1797 = vpop.f32.mrf.mxu0
    %v1798 = vadd.f32 %v1757, %v1797
    %v1799 = vpop.f32.mrf.mxu0
    %v1800 = vadd.f32 %v1759, %v1799
    %v1801 = vpop.f32.mrf.mxu0
    %v1802 = vpop.f32.mrf.mxu0
    %1803 = vdwg.mxu0
    %1804 = vmatprep.subr.bf16.mxu0 %v1159
    %1805 = vmatpush1.bf16.msra.mxu0 %v1158
    %1806 = vmatprep.subr.bf16.mxu0 %v1155
    %1807 = vmatpush1.bf16.msra.mxu0 %v1154
    %1808 = vmatprep.subr.bf16.mxu0 %v1151
    %1809 = vmatpush1.bf16.msra.mxu0 %v1150
    %1810 = vmatprep.subr.bf16.mxu0 %v1147
    %1811 = vmatpush1.bf16.msra.mxu0 %v1146
    %1812 = vmatprep.subr.bf16.mxu0 %v1143
    %1813 = vmatpush1.bf16.msra.mxu0 %v1142
    %1814 = vmatprep.subr.bf16.mxu0 %v1139
    %1815 = vmatpush1.bf16.msra.mxu0 %v1138
    %1816 = vmatprep.subr.bf16.mxu0 %v1135
    %1817 = vmatpush1.bf16.msra.mxu0 %v1134
    %1818 = vmatprep.subr.bf16.mxu0 %v1131
    %1819 = vmatpush1.bf16.msra.mxu0 %v1130
    %1820 = vmatprep.subr.bf16.mxu0 %v1191
    %1821 = vmatpush2.bf16.msra.mxu0 %v1190
    %1822 = vmatprep.subr.bf16.mxu0 %v1187
    %1823 = vmatpush2.bf16.msra.mxu0 %v1186
    %1824 = vmatprep.subr.bf16.mxu0 %v1183
    %1825 = vmatpush2.bf16.msra.mxu0 %v1182
    %1826 = vmatprep.subr.bf16.mxu0 %v1179
    %1827 = vmatpush2.bf16.msra.mxu0 %v1178
    %1828 = vmatprep.subr.bf16.mxu0 %v1175
    %1829 = vmatpush2.bf16.msra.mxu0 %v1174
    %1830 = vmatprep.subr.bf16.mxu0 %v1171
    %1831 = vmatpush2.bf16.msra.mxu0 %v1170
    %1832 = vmatprep.subr.bf16.mxu0 %v1167
    %1833 = vmatpush2.bf16.msra.mxu0 %v1166
    %1834 = vmatprep.subr.bf16.mxu0 %v1163
    %1835 = vmatpush2.bf16.msra.mxu0 %v1162
    %1836 = vmatprep.mubr.bf16.mxu0 %v75
    %1837 = vmatmul.mubr.bf16.gmra.mxu0 %v74
    %v1838 = vpop.f32.mrf.mxu0
    %v1839 = vadd.f32 %v351, %v1838
    %v1840 = vpop.f32.mrf.mxu0
    %v1841 = vadd.f32 %v355, %v1840
    %v1842 = vpop.f32.mrf.mxu0
    %v1843 = vpop.f32.mrf.mxu0
    %1844 = vdwg.mxu0
    %1845 = vmatprep.subr.bf16.mxu0 %v1223
    %1846 = vmatpush1.bf16.msra.mxu0 %v1222
    %1847 = vmatprep.subr.bf16.mxu0 %v1219
    %1848 = vmatpush1.bf16.msra.mxu0 %v1218
    %1849 = vmatprep.subr.bf16.mxu0 %v1215
    %1850 = vmatpush1.bf16.msra.mxu0 %v1214
    %1851 = vmatprep.subr.bf16.mxu0 %v1211
    %1852 = vmatpush1.bf16.msra.mxu0 %v1210
    %1853 = vmatprep.subr.bf16.mxu0 %v1207
    %1854 = vmatpush1.bf16.msra.mxu0 %v1206
    %1855 = vmatprep.subr.bf16.mxu0 %v1203
    %1856 = vmatpush1.bf16.msra.mxu0 %v1202
    %1857 = vmatprep.subr.bf16.mxu0 %v1199
    %1858 = vmatpush1.bf16.msra.mxu0 %v1198
    %1859 = vmatprep.subr.bf16.mxu0 %v1195
    %1860 = vmatpush1.bf16.msra.mxu0 %v1194
    %1861 = vmatprep.subr.bf16.mxu0 %v1255
    %1862 = vmatpush2.bf16.msra.mxu0 %v1254
    %1863 = vmatprep.subr.bf16.mxu0 %v1251
    %1864 = vmatpush2.bf16.msra.mxu0 %v1250
    %1865 = vmatprep.subr.bf16.mxu0 %v1247
    %1866 = vmatpush2.bf16.msra.mxu0 %v1246
    %1867 = vmatprep.subr.bf16.mxu0 %v1243
    %1868 = vmatpush2.bf16.msra.mxu0 %v1242
    %1869 = vmatprep.subr.bf16.mxu0 %v1239
    %1870 = vmatpush2.bf16.msra.mxu0 %v1238
    %1871 = vmatprep.subr.bf16.mxu0 %v1235
    %1872 = vmatpush2.bf16.msra.mxu0 %v1234
    %1873 = vmatprep.subr.bf16.mxu0 %v1231
    %1874 = vmatpush2.bf16.msra.mxu0 %v1230
    %1875 = vmatprep.subr.bf16.mxu0 %v1227
    %1876 = vmatpush2.bf16.msra.mxu0 %v1226
    %1877 = vmatprep.mubr.bf16.mxu0 %v77
    %1878 = vmatmul.mubr.bf16.gmra.mxu0 %v76
    %v1879 = vpop.f32.mrf.mxu0
    %v1880 = vadd.f32 %v1839, %v1879
    %v1881 = vpop.f32.mrf.mxu0
    %v1882 = vadd.f32 %v1841, %v1881
    %v1883 = vpop.f32.mrf.mxu0
    %v1884 = vpop.f32.mrf.mxu0
    %1885 = vdwg.mxu0
    %1886 = vmatprep.subr.bf16.mxu0 %v1287
    %1887 = vmatpush1.bf16.msra.mxu0 %v1286
    %1888 = vmatprep.subr.bf16.mxu0 %v1283
    %1889 = vmatpush1.bf16.msra.mxu0 %v1282
    %1890 = vmatprep.subr.bf16.mxu0 %v1279
    %1891 = vmatpush1.bf16.msra.mxu0 %v1278
    %1892 = vmatprep.subr.bf16.mxu0 %v1275
    %1893 = vmatpush1.bf16.msra.mxu0 %v1274
    %1894 = vmatprep.subr.bf16.mxu0 %v1271
    %1895 = vmatpush1.bf16.msra.mxu0 %v1270
    %1896 = vmatprep.subr.bf16.mxu0 %v1267
    %1897 = vmatpush1.bf16.msra.mxu0 %v1266
    %1898 = vmatprep.subr.bf16.mxu0 %v1263
    %1899 = vmatpush1.bf16.msra.mxu0 %v1262
    %1900 = vmatprep.subr.bf16.mxu0 %v1259
    %1901 = vmatpush1.bf16.msra.mxu0 %v1258
    %1902 = vmatprep.subr.bf16.mxu0 %v1319
    %1903 = vmatpush2.bf16.msra.mxu0 %v1318
    %1904 = vmatprep.subr.bf16.mxu0 %v1315
    %1905 = vmatpush2.bf16.msra.mxu0 %v1314
    %1906 = vmatprep.subr.bf16.mxu0 %v1311
    %1907 = vmatpush2.bf16.msra.mxu0 %v1310
    %1908 = vmatprep.subr.bf16.mxu0 %v1307
    %1909 = vmatpush2.bf16.msra.mxu0 %v1306
    %1910 = vmatprep.subr.bf16.mxu0 %v1303
    %1911 = vmatpush2.bf16.msra.mxu0 %v1302
    %1912 = vmatprep.subr.bf16.mxu0 %v1299
    %1913 = vmatpush2.bf16.msra.mxu0 %v1298
    %1914 = vmatprep.subr.bf16.mxu0 %v1295
    %1915 = vmatpush2.bf16.msra.mxu0 %v1294
    %1916 = vmatprep.subr.bf16.mxu0 %v1291
    %1917 = vmatpush2.bf16.msra.mxu0 %v1290
    %1918 = vmatprep.mubr.bf16.mxu0 %v79
    %1919 = vmatmul.mubr.bf16.gmra.mxu0 %v78
    %v1920 = vpop.f32.mrf.mxu0
    %v1921 = vadd.f32 %v1880, %v1920
    %v1922 = vpop.f32.mrf.mxu0
    %v1923 = vadd.f32 %v1882, %v1922
    %v1924 = vpop.f32.mrf.mxu0
    %v1925 = vpop.f32.mrf.mxu0
    %1926 = vdwg.mxu0
    %1927 = vmatprep.subr.bf16.mxu0 %v1351
    %1928 = vmatpush1.bf16.msra.mxu0 %v1350
    %1929 = vmatprep.subr.bf16.mxu0 %v1347
    %1930 = vmatpush1.bf16.msra.mxu0 %v1346
    %1931 = vmatprep.subr.bf16.mxu0 %v1343
    %1932 = vmatpush1.bf16.msra.mxu0 %v1342
    %1933 = vmatprep.subr.bf16.mxu0 %v1339
    %1934 = vmatpush1.bf16.msra.mxu0 %v1338
    %1935 = vmatprep.subr.bf16.mxu0 %v1335
    %1936 = vmatpush1.bf16.msra.mxu0 %v1334
    %1937 = vmatprep.subr.bf16.mxu0 %v1331
    %1938 = vmatpush1.bf16.msra.mxu0 %v1330
    %1939 = vmatprep.subr.bf16.mxu0 %v1327
    %1940 = vmatpush1.bf16.msra.mxu0 %v1326
    %1941 = vmatprep.subr.bf16.mxu0 %v1323
    %1942 = vmatpush1.bf16.msra.mxu0 %v1322
    %1943 = vmatprep.subr.bf16.mxu0 %v1383
    %1944 = vmatpush2.bf16.msra.mxu0 %v1382
    %1945 = vmatprep.subr.bf16.mxu0 %v1379
    %1946 = vmatpush2.bf16.msra.mxu0 %v1378
    %1947 = vmatprep.subr.bf16.mxu0 %v1375
    %1948 = vmatpush2.bf16.msra.mxu0 %v1374
    %1949 = vmatprep.subr.bf16.mxu0 %v1371
    %1950 = vmatpush2.bf16.msra.mxu0 %v1370
    %1951 = vmatprep.subr.bf16.mxu0 %v1367
    %1952 = vmatpush2.bf16.msra.mxu0 %v1366
    %1953 = vmatprep.subr.bf16.mxu0 %v1363
    %1954 = vmatpush2.bf16.msra.mxu0 %v1362
    %1955 = vmatprep.subr.bf16.mxu0 %v1359
    %1956 = vmatpush2.bf16.msra.mxu0 %v1358
    %1957 = vmatprep.subr.bf16.mxu0 %v1355
    %1958 = vmatpush2.bf16.msra.mxu0 %v1354
    %1959 = vmatprep.mubr.bf16.mxu0 %v81
    %1960 = vmatmul.mubr.bf16.gmra.mxu0 %v80
    %v1961 = vpop.f32.mrf.mxu0
    %v1962 = vadd.f32 %v1921, %v1961
    %v1963 = vpop.f32.mrf.mxu0
    %v1964 = vadd.f32 %v1923, %v1963
    %v1965 = vpop.f32.mrf.mxu0
    %v1966 = vpop.f32.mrf.mxu0
    %1967 = vdwg.mxu0
    %v1968 = vmax.f32 %v1798, 0.0
    %v1969 = vmax.f32 %v1800, 0.0
    %v1970 = vmax.f32 %v1962, 0.0
    %v1971 = vmax.f32 %v1964, 0.0
    %v1972 = vpack.c.bf16 %v1968, %v1968
    %v1973 = vpack.c.bf16 %v1969, %v1969
    %v1974 = vpack.c.bf16 %v1970, %v1970
    %v1975 = vpack.c.bf16 %v1971, %v1971
    %v1976 = vld [vmem:[%s3] sm:$0xff]
    %v1977 = vld [vmem:[%s3 + $0x8] sm:$0xff]
    %v1978 = vld [vmem:[%s3 + $0x10] sm:$0xff]
    %v1979 = vld [vmem:[%s3 + $0x18] sm:$0xff]
    %v1980 = vld [vmem:[%s3 + $0x20] sm:$0xff]
    %v1981 = vld [vmem:[%s3 + $0x28] sm:$0xff]
    %v1982 = vld [vmem:[%s3 + $0x30] sm:$0xff]
    %v1983 = vld [vmem:[%s3 + $0x38] sm:$0xff]
    %v1984 = vld [vmem:[%s3 + $0x40] sm:$0xff]
    %v1985 = vld [vmem:[%s3 + $0x48] sm:$0xff]
    %v1986 = vld [vmem:[%s3 + $0x50] sm:$0xff]
    %v1987 = vld [vmem:[%s3 + $0x58] sm:$0xff]
    %v1988 = vld [vmem:[%s3 + $0x60] sm:$0xff]
    %v1989 = vld [vmem:[%s3 + $0x68] sm:$0xff]
    %v1990 = vld [vmem:[%s3 + $0x70] sm:$0xff]
    %v1991 = vld [vmem:[%s3 + $0x78] sm:$0xff]
    %v1992 = vld [vmem:[%s3 + $0x80] sm:$0xff]
    %v1993 = vld [vmem:[%s3 + $0x88] sm:$0xff]
    %v1994 = vld [vmem:[%s3 + $0x90] sm:$0xff]
    %v1995 = vld [vmem:[%s3 + $0x98] sm:$0xff]
    %v1996 = vld [vmem:[%s3 + $0xa0] sm:$0xff]
    %v1997 = vld [vmem:[%s3 + $0xa8] sm:$0xff]
    %v1998 = vld [vmem:[%s3 + $0xb0] sm:$0xff]
    %v1999 = vld [vmem:[%s3 + $0xb8] sm:$0xff]
    %v2000 = vld [vmem:[%s3 + $0xc0] sm:$0xff]
    %v2001 = vld [vmem:[%s3 + $0xc8] sm:$0xff]
    %v2002 = vld [vmem:[%s3 + $0xd0] sm:$0xff]
    %v2003 = vld [vmem:[%s3 + $0xd8] sm:$0xff]
    %v2004 = vld [vmem:[%s3 + $0xe0] sm:$0xff]
    %v2005 = vld [vmem:[%s3 + $0xe8] sm:$0xff]
    %v2006 = vld [vmem:[%s3 + $0xf0] sm:$0xff]
    %v2007 = vld [vmem:[%s3 + $0xf8] sm:$0xff]
    %v2008 = vld [vmem:[%s3 + $0x100] sm:$0xff]
    %v2009 = vld [vmem:[%s3 + $0x108] sm:$0xff]
    %v2010 = vld [vmem:[%s3 + $0x110] sm:$0xff]
    %v2011 = vld [vmem:[%s3 + $0x118] sm:$0xff]
    %v2012 = vld [vmem:[%s3 + $0x120] sm:$0xff]
    %v2013 = vld [vmem:[%s3 + $0x128] sm:$0xff]
    %v2014 = vld [vmem:[%s3 + $0x130] sm:$0xff]
    %v2015 = vld [vmem:[%s3 + $0x138] sm:$0xff]
    %v2016 = vld [vmem:[%s3 + $0x140] sm:$0xff]
    %v2017 = vld [vmem:[%s3 + $0x148] sm:$0xff]
    %v2018 = vld [vmem:[%s3 + $0x150] sm:$0xff]
    %v2019 = vld [vmem:[%s3 + $0x158] sm:$0xff]
    %v2020 = vld [vmem:[%s3 + $0x160] sm:$0xff]
    %v2021 = vld [vmem:[%s3 + $0x168] sm:$0xff]
    %v2022 = vld [vmem:[%s3 + $0x170] sm:$0xff]
    %v2023 = vld [vmem:[%s3 + $0x178] sm:$0xff]
    %v2024 = vld [vmem:[%s3 + $0x180] sm:$0xff]
    %v2025 = vld [vmem:[%s3 + $0x188] sm:$0xff]
    %v2026 = vld [vmem:[%s3 + $0x190] sm:$0xff]
    %v2027 = vld [vmem:[%s3 + $0x198] sm:$0xff]
    %v2028 = vld [vmem:[%s3 + $0x1a0] sm:$0xff]
    %v2029 = vld [vmem:[%s3 + $0x1a8] sm:$0xff]
    %v2030 = vld [vmem:[%s3 + $0x1b0] sm:$0xff]
    %v2031 = vld [vmem:[%s3 + $0x1b8] sm:$0xff]
    %v2032 = vld [vmem:[%s3 + $0x1c0] sm:$0xff]
    %v2033 = vld [vmem:[%s3 + $0x1c8] sm:$0xff]
    %v2034 = vld [vmem:[%s3 + $0x1d0] sm:$0xff]
    %v2035 = vld [vmem:[%s3 + $0x1d8] sm:$0xff]
    %v2036 = vld [vmem:[%s3 + $0x1e0] sm:$0xff]
    %v2037 = vld [vmem:[%s3 + $0x1e8] sm:$0xff]
    %v2038 = vld [vmem:[%s3 + $0x1f0] sm:$0xff]
    %v2039 = vld [vmem:[%s3 + $0x1f8] sm:$0xff]
    %v2040 = vld [vmem:[%s4] sm:$0x3]
    %v2042 = vlaneseq
    %v2043 = vshrl.u32 %v2042, 7
    %v2044 = vsub.s32 0, %v2043
    %v2045 = vrot.slane %v2040, %v2044
    %v2046 = vlaneseq
    %v2047 = vshrl.u32 %v2046, 7
    %v2048 = vsub.s32 1, %v2047
    %v2049 = vrot.slane %v2040, %v2048
    %v2116 = vunpack.c.l.b16 %v1976
    %v2117 = vunpack.c.h.b16 %v1976
    %v2118 = vunpack.c.l.b16 %v1977
    %v2119 = vunpack.c.h.b16 %v1977
    %v2120 = vunpack.c.l.b16 %v1978
    %v2121 = vunpack.c.h.b16 %v1978
    %v2122 = vunpack.c.l.b16 %v1979
    %v2123 = vunpack.c.h.b16 %v1979
    %v2124 = vunpack.c.l.b16 %v1980
    %v2125 = vunpack.c.h.b16 %v1980
    %v2126 = vunpack.c.l.b16 %v1981
    %v2127 = vunpack.c.h.b16 %v1981
    %v2128 = vunpack.c.l.b16 %v1982
    %v2129 = vunpack.c.h.b16 %v1982
    %v2130 = vunpack.c.l.b16 %v1983
    %v2131 = vunpack.c.h.b16 %v1983
    %v2132 = vunpack.c.l.b16 %v1984
    %v2133 = vunpack.c.h.b16 %v1984
    %v2134 = vunpack.c.l.b16 %v1985
    %v2135 = vunpack.c.h.b16 %v1985
    %v2136 = vunpack.c.l.b16 %v1986
    %v2137 = vunpack.c.h.b16 %v1986
    %v2138 = vunpack.c.l.b16 %v1987
    %v2139 = vunpack.c.h.b16 %v1987
    %v2140 = vunpack.c.l.b16 %v1988
    %v2141 = vunpack.c.h.b16 %v1988
    %v2142 = vunpack.c.l.b16 %v1989
    %v2143 = vunpack.c.h.b16 %v1989
    %v2144 = vunpack.c.l.b16 %v1990
    %v2145 = vunpack.c.h.b16 %v1990
    %v2146 = vunpack.c.l.b16 %v1991
    %v2147 = vunpack.c.h.b16 %v1991
    %v2148 = vunpack.c.l.b16 %v1992
    %v2149 = vunpack.c.h.b16 %v1992
    %v2150 = vunpack.c.l.b16 %v1993
    %v2151 = vunpack.c.h.b16 %v1993
    %v2152 = vunpack.c.l.b16 %v1994
    %v2153 = vunpack.c.h.b16 %v1994
    %v2154 = vunpack.c.l.b16 %v1995
    %v2155 = vunpack.c.h.b16 %v1995
    %v2156 = vunpack.c.l.b16 %v1996
    %v2157 = vunpack.c.h.b16 %v1996
    %v2158 = vunpack.c.l.b16 %v1997
    %v2159 = vunpack.c.h.b16 %v1997
    %v2160 = vunpack.c.l.b16 %v1998
    %v2161 = vunpack.c.h.b16 %v1998
    %v2162 = vunpack.c.l.b16 %v1999
    %v2163 = vunpack.c.h.b16 %v1999
    %v2164 = vunpack.c.l.b16 %v2000
    %v2165 = vunpack.c.h.b16 %v2000
    %v2166 = vunpack.c.l.b16 %v2001
    %v2167 = vunpack.c.h.b16 %v2001
    %v2168 = vunpack.c.l.b16 %v2002
    %v2169 = vunpack.c.h.b16 %v2002
    %v2170 = vunpack.c.l.b16 %v2003
    %v2171 = vunpack.c.h.b16 %v2003
    %v2172 = vunpack.c.l.b16 %v2004
    %v2173 = vunpack.c.h.b16 %v2004
    %v2174 = vunpack.c.l.b16 %v2005
    %v2175 = vunpack.c.h.b16 %v2005
    %v2176 = vunpack.c.l.b16 %v2006
    %v2177 = vunpack.c.h.b16 %v2006
    %v2178 = vunpack.c.l.b16 %v2007
    %v2179 = vunpack.c.h.b16 %v2007
    %v2180 = vunpack.c.l.b16 %v2008
    %v2181 = vunpack.c.h.b16 %v2008
    %v2182 = vunpack.c.l.b16 %v2009
    %v2183 = vunpack.c.h.b16 %v2009
    %v2184 = vunpack.c.l.b16 %v2010
    %v2185 = vunpack.c.h.b16 %v2010
    %v2186 = vunpack.c.l.b16 %v2011
    %v2187 = vunpack.c.h.b16 %v2011
    %v2188 = vunpack.c.l.b16 %v2012
    %v2189 = vunpack.c.h.b16 %v2012
    %v2190 = vunpack.c.l.b16 %v2013
    %v2191 = vunpack.c.h.b16 %v2013
    %v2192 = vunpack.c.l.b16 %v2014
    %v2193 = vunpack.c.h.b16 %v2014
    %v2194 = vunpack.c.l.b16 %v2015
    %v2195 = vunpack.c.h.b16 %v2015
    %v2196 = vunpack.c.l.b16 %v2016
    %v2197 = vunpack.c.h.b16 %v2016
    %v2198 = vunpack.c.l.b16 %v2017
    %v2199 = vunpack.c.h.b16 %v2017
    %v2200 = vunpack.c.l.b16 %v2018
    %v2201 = vunpack.c.h.b16 %v2018
    %v2202 = vunpack.c.l.b16 %v2019
    %v2203 = vunpack.c.h.b16 %v2019
    %v2204 = vunpack.c.l.b16 %v2020
    %v2205 = vunpack.c.h.b16 %v2020
    %v2206 = vunpack.c.l.b16 %v2021
    %v2207 = vunpack.c.h.b16 %v2021
    %v2208 = vunpack.c.l.b16 %v2022
    %v2209 = vunpack.c.h.b16 %v2022
    %v2210 = vunpack.c.l.b16 %v2023
    %v2211 = vunpack.c.h.b16 %v2023
    %v2212 = vunpack.c.l.b16 %v2024
    %v2213 = vunpack.c.h.b16 %v2024
    %v2214 = vunpack.c.l.b16 %v2025
    %v2215 = vunpack.c.h.b16 %v2025
    %v2216 = vunpack.c.l.b16 %v2026
    %v2217 = vunpack.c.h.b16 %v2026
    %v2218 = vunpack.c.l.b16 %v2027
    %v2219 = vunpack.c.h.b16 %v2027
    %v2220 = vunpack.c.l.b16 %v2028
    %v2221 = vunpack.c.h.b16 %v2028
    %v2222 = vunpack.c.l.b16 %v2029
    %v2223 = vunpack.c.h.b16 %v2029
    %v2224 = vunpack.c.l.b16 %v2030
    %v2225 = vunpack.c.h.b16 %v2030
    %v2226 = vunpack.c.l.b16 %v2031
    %v2227 = vunpack.c.h.b16 %v2031
    %v2228 = vunpack.c.l.b16 %v2032
    %v2229 = vunpack.c.h.b16 %v2032
    %v2230 = vunpack.c.l.b16 %v2033
    %v2231 = vunpack.c.h.b16 %v2033
    %v2232 = vunpack.c.l.b16 %v2034
    %v2233 = vunpack.c.h.b16 %v2034
    %v2234 = vunpack.c.l.b16 %v2035
    %v2235 = vunpack.c.h.b16 %v2035
    %v2236 = vunpack.c.l.b16 %v2036
    %v2237 = vunpack.c.h.b16 %v2036
    %v2238 = vunpack.c.l.b16 %v2037
    %v2239 = vunpack.c.h.b16 %v2037
    %v2240 = vunpack.c.l.b16 %v2038
    %v2241 = vunpack.c.h.b16 %v2038
    %v2242 = vunpack.c.l.b16 %v2039
    %v2243 = vunpack.c.h.b16 %v2039
    %v2244 = vpack.c.b16 %v2118, %v2116
    %v2245 = vpack.c.b16 %v2119, %v2117
    %v2246 = vpack.c.b16 %v2122, %v2120
    %v2247 = vpack.c.b16 %v2123, %v2121
    %v2248 = vpack.c.b16 %v2126, %v2124
    %v2249 = vpack.c.b16 %v2127, %v2125
    %v2250 = vpack.c.b16 %v2130, %v2128
    %v2251 = vpack.c.b16 %v2131, %v2129
    %v2252 = vpack.c.b16 %v2134, %v2132
    %v2253 = vpack.c.b16 %v2135, %v2133
    %v2254 = vpack.c.b16 %v2138, %v2136
    %v2255 = vpack.c.b16 %v2139, %v2137
    %v2256 = vpack.c.b16 %v2142, %v2140
    %v2257 = vpack.c.b16 %v2143, %v2141
    %v2258 = vpack.c.b16 %v2146, %v2144
    %v2259 = vpack.c.b16 %v2147, %v2145
    %v2260 = vpack.c.b16 %v2150, %v2148
    %v2261 = vpack.c.b16 %v2151, %v2149
    %v2262 = vpack.c.b16 %v2154, %v2152
    %v2263 = vpack.c.b16 %v2155, %v2153
    %v2264 = vpack.c.b16 %v2158, %v2156
    %v2265 = vpack.c.b16 %v2159, %v2157
    %v2266 = vpack.c.b16 %v2162, %v2160
    %v2267 = vpack.c.b16 %v2163, %v2161
    %v2268 = vpack.c.b16 %v2166, %v2164
    %v2269 = vpack.c.b16 %v2167, %v2165
    %v2270 = vpack.c.b16 %v2170, %v2168
    %v2271 = vpack.c.b16 %v2171, %v2169
    %v2272 = vpack.c.b16 %v2174, %v2172
    %v2273 = vpack.c.b16 %v2175, %v2173
    %v2274 = vpack.c.b16 %v2178, %v2176
    %v2275 = vpack.c.b16 %v2179, %v2177
    %v2276 = vpack.c.b16 %v2182, %v2180
    %v2277 = vpack.c.b16 %v2183, %v2181
    %v2278 = vpack.c.b16 %v2186, %v2184
    %v2279 = vpack.c.b16 %v2187, %v2185
    %v2280 = vpack.c.b16 %v2190, %v2188
    %v2281 = vpack.c.b16 %v2191, %v2189
    %v2282 = vpack.c.b16 %v2194, %v2192
    %v2283 = vpack.c.b16 %v2195, %v2193
    %v2284 = vpack.c.b16 %v2198, %v2196
    %v2285 = vpack.c.b16 %v2199, %v2197
    %v2286 = vpack.c.b16 %v2202, %v2200
    %v2287 = vpack.c.b16 %v2203, %v2201
    %v2288 = vpack.c.b16 %v2206, %v2204
    %v2289 = vpack.c.b16 %v2207, %v2205
    %v2290 = vpack.c.b16 %v2210, %v2208
    %v2291 = vpack.c.b16 %v2211, %v2209
    %v2292 = vpack.c.b16 %v2214, %v2212
    %v2293 = vpack.c.b16 %v2215, %v2213
    %v2294 = vpack.c.b16 %v2218, %v2216
    %v2295 = vpack.c.b16 %v2219, %v2217
    %v2296 = vpack.c.b16 %v2222, %v2220
    %v2297 = vpack.c.b16 %v2223, %v2221
    %v2298 = vpack.c.b16 %v2226, %v2224
    %v2299 = vpack.c.b16 %v2227, %v2225
    %v2300 = vpack.c.b16 %v2230, %v2228
    %v2301 = vpack.c.b16 %v2231, %v2229
    %v2302 = vpack.c.b16 %v2234, %v2232
    %v2303 = vpack.c.b16 %v2235, %v2233
    %v2304 = vpack.c.b16 %v2238, %v2236
    %v2305 = vpack.c.b16 %v2239, %v2237
    %v2306 = vpack.c.b16 %v2242, %v2240
    %v2307 = vpack.c.b16 %v2243, %v2241
    %2372 = vmatprep.subr.bf16.mxu0 %v2259
    %2373 = vmatpush1.bf16.msra.mxu0 %v2258
    %2374 = vmatprep.subr.bf16.mxu0 %v2257
    %2375 = vmatpush1.bf16.msra.mxu0 %v2256
    %2376 = vmatprep.subr.bf16.mxu0 %v2255
    %2377 = vmatpush1.bf16.msra.mxu0 %v2254
    %2378 = vmatprep.subr.bf16.mxu0 %v2253
    %2379 = vmatpush1.bf16.msra.mxu0 %v2252
    %2380 = vmatprep.subr.bf16.mxu0 %v2251
    %2381 = vmatpush1.bf16.msra.mxu0 %v2250
    %2382 = vmatprep.subr.bf16.mxu0 %v2249
    %2383 = vmatpush1.bf16.msra.mxu0 %v2248
    %2384 = vmatprep.subr.bf16.mxu0 %v2247
    %2385 = vmatpush1.bf16.msra.mxu0 %v2246
    %2386 = vmatprep.subr.bf16.mxu0 %v2245
    %2387 = vmatpush1.bf16.msra.mxu0 %v2244
    %2388 = vmatprep.subr.bf16.mxu0 %v2275
    %2389 = vmatpush2.bf16.msra.mxu0 %v2274
    %2390 = vmatprep.subr.bf16.mxu0 %v2273
    %2391 = vmatpush2.bf16.msra.mxu0 %v2272
    %2392 = vmatprep.subr.bf16.mxu0 %v2271
    %2393 = vmatpush2.bf16.msra.mxu0 %v2270
    %2394 = vmatprep.subr.bf16.mxu0 %v2269
    %2395 = vmatpush2.bf16.msra.mxu0 %v2268
    %2396 = vmatprep.subr.bf16.mxu0 %v2267
    %2397 = vmatpush2.bf16.msra.mxu0 %v2266
    %2398 = vmatprep.subr.bf16.mxu0 %v2265
    %2399 = vmatpush2.bf16.msra.mxu0 %v2264
    %2400 = vmatprep.subr.bf16.mxu0 %v2263
    %2401 = vmatpush2.bf16.msra.mxu0 %v2262
    %2402 = vmatprep.subr.bf16.mxu0 %v2261
    %2403 = vmatpush2.bf16.msra.mxu0 %v2260
    %2404 = vmatprep.mubr.bf16.mxu0 %v1973
    %2405 = vmatmul.mubr.bf16.gmra.mxu0 %v1972
    %v2406 = vpop.f32.mrf.mxu0
    %v2407 = vadd.f32 %v2045, %v2406
    %v2408 = vpop.f32.mrf.mxu0
    %v2409 = vadd.f32 %v2049, %v2408
    %v2410 = vpop.f32.mrf.mxu0
    %v2411 = vpop.f32.mrf.mxu0
    %2412 = vdwg.mxu0
    %2413 = vmatprep.subr.bf16.mxu0 %v2291
    %2414 = vmatpush1.bf16.msra.mxu0 %v2290
    %2415 = vmatprep.subr.bf16.mxu0 %v2289
    %2416 = vmatpush1.bf16.msra.mxu0 %v2288
    %2417 = vmatprep.subr.bf16.mxu0 %v2287
    %2418 = vmatpush1.bf16.msra.mxu0 %v2286
    %2419 = vmatprep.subr.bf16.mxu0 %v2285
    %2420 = vmatpush1.bf16.msra.mxu0 %v2284
    %2421 = vmatprep.subr.bf16.mxu0 %v2283
    %2422 = vmatpush1.bf16.msra.mxu0 %v2282
    %2423 = vmatprep.subr.bf16.mxu0 %v2281
    %2424 = vmatpush1.bf16.msra.mxu0 %v2280
    %2425 = vmatprep.subr.bf16.mxu0 %v2279
    %2426 = vmatpush1.bf16.msra.mxu0 %v2278
    %2427 = vmatprep.subr.bf16.mxu0 %v2277
    %2428 = vmatpush1.bf16.msra.mxu0 %v2276
    %2429 = vmatprep.subr.bf16.mxu0 %v2307
    %2430 = vmatpush2.bf16.msra.mxu0 %v2306
    %2431 = vmatprep.subr.bf16.mxu0 %v2305
    %2432 = vmatpush2.bf16.msra.mxu0 %v2304
    %2433 = vmatprep.subr.bf16.mxu0 %v2303
    %2434 = vmatpush2.bf16.msra.mxu0 %v2302
    %2435 = vmatprep.subr.bf16.mxu0 %v2301
    %2436 = vmatpush2.bf16.msra.mxu0 %v2300
    %2437 = vmatprep.subr.bf16.mxu0 %v2299
    %2438 = vmatpush2.bf16.msra.mxu0 %v2298
    %2439 = vmatprep.subr.bf16.mxu0 %v2297
    %2440 = vmatpush2.bf16.msra.mxu0 %v2296
    %2441 = vmatprep.subr.bf16.mxu0 %v2295
    %2442 = vmatpush2.bf16.msra.mxu0 %v2294
    %2443 = vmatprep.subr.bf16.mxu0 %v2293
    %2444 = vmatpush2.bf16.msra.mxu0 %v2292
    %2445 = vmatprep.mubr.bf16.mxu0 %v1975
    %2446 = vmatmul.mubr.bf16.gmra.mxu0 %v1974
    %v2447 = vpop.f32.mrf.mxu0
    %v2448 = vadd.f32 %v2407, %v2447
    %v2449 = vpop.f32.mrf.mxu0
    %v2450 = vadd.f32 %v2409, %v2449
    %v2451 = vpop.f32.mrf.mxu0
    %v2452 = vpop.f32.mrf.mxu0
    %2453 = vdwg.mxu0
    %v2454 = vmax.f32 %v2448, 0.0
    %v2455 = vmax.f32 %v2450, 0.0
    %v2456 = vpack.c.bf16 %v2454, %v2454
    %v2457 = vpack.c.bf16 %v2455, %v2455
    %v2458 = vld [vmem:[%s5] sm:$0xf]
    %v2459 = vld [vmem:[%s5 + $0x4] sm:$0xf]
    %v2460 = vld [vmem:[%s5 + $0x8] sm:$0xf]
    %v2461 = vld [vmem:[%s5 + $0xc] sm:$0xf]
    %v2462 = vld [vmem:[%s5 + $0x10] sm:$0xf]
    %v2463 = vld [vmem:[%s5 + $0x14] sm:$0xf]
    %v2464 = vld [vmem:[%s5 + $0x18] sm:$0xf]
    %v2465 = vld [vmem:[%s5 + $0x1c] sm:$0xf]
    %v2466 = vld [vmem:[%s5 + $0x20] sm:$0xf]
    %v2467 = vld [vmem:[%s5 + $0x24] sm:$0xf]
    %v2468 = vld [vmem:[%s5 + $0x28] sm:$0xf]
    %v2469 = vld [vmem:[%s5 + $0x2c] sm:$0xf]
    %v2470 = vld [vmem:[%s5 + $0x30] sm:$0xf]
    %v2471 = vld [vmem:[%s5 + $0x34] sm:$0xf]
    %v2472 = vld [vmem:[%s5 + $0x38] sm:$0xf]
    %v2473 = vld [vmem:[%s5 + $0x3c] sm:$0xf]
    %v2474 = vld [vmem:[%s5 + $0x40] sm:$0xf]
    %v2475 = vld [vmem:[%s5 + $0x44] sm:$0xf]
    %v2476 = vld [vmem:[%s5 + $0x48] sm:$0xf]
    %v2477 = vld [vmem:[%s5 + $0x4c] sm:$0xf]
    %v2478 = vld [vmem:[%s5 + $0x50] sm:$0xf]
    %v2479 = vld [vmem:[%s5 + $0x54] sm:$0xf]
    %v2480 = vld [vmem:[%s5 + $0x58] sm:$0xf]
    %v2481 = vld [vmem:[%s5 + $0x5c] sm:$0xf]
    %v2482 = vld [vmem:[%s5 + $0x60] sm:$0xf]
    %v2483 = vld [vmem:[%s5 + $0x64] sm:$0xf]
    %v2484 = vld [vmem:[%s5 + $0x68] sm:$0xf]
    %v2485 = vld [vmem:[%s5 + $0x6c] sm:$0xf]
    %v2486 = vld [vmem:[%s5 + $0x70] sm:$0xf]
    %v2487 = vld [vmem:[%s5 + $0x74] sm:$0xf]
    %v2488 = vld [vmem:[%s5 + $0x78] sm:$0xf]
    %v2489 = vld [vmem:[%s5 + $0x7c] sm:$0xf]
    %v2490 = vld [vmem:[%s6] sm:$0x1]
    %v2492 = vlaneseq
    %v2493 = vshrl.u32 %v2492, 7
    %v2494 = vsub.s32 0, %v2493
    %v2495 = vrot.slane %v2490, %v2494
    %v2529 = vunpack.c.l.b16 %v2458
    %v2530 = vunpack.c.l.b16 %v2459
    %v2531 = vunpack.c.l.b16 %v2460
    %v2532 = vunpack.c.l.b16 %v2461
    %v2533 = vunpack.c.l.b16 %v2462
    %v2534 = vunpack.c.l.b16 %v2463
    %v2535 = vunpack.c.l.b16 %v2464
    %v2536 = vunpack.c.l.b16 %v2465
    %v2537 = vunpack.c.l.b16 %v2466
    %v2538 = vunpack.c.l.b16 %v2467
    %v2539 = vunpack.c.l.b16 %v2468
    %v2540 = vunpack.c.l.b16 %v2469
    %v2541 = vunpack.c.l.b16 %v2470
    %v2542 = vunpack.c.l.b16 %v2471
    %v2543 = vunpack.c.l.b16 %v2472
    %v2544 = vunpack.c.l.b16 %v2473
    %v2545 = vunpack.c.l.b16 %v2474
    %v2546 = vunpack.c.l.b16 %v2475
    %v2547 = vunpack.c.l.b16 %v2476
    %v2548 = vunpack.c.l.b16 %v2477
    %v2549 = vunpack.c.l.b16 %v2478
    %v2550 = vunpack.c.l.b16 %v2479
    %v2551 = vunpack.c.l.b16 %v2480
    %v2552 = vunpack.c.l.b16 %v2481
    %v2553 = vunpack.c.l.b16 %v2482
    %v2554 = vunpack.c.l.b16 %v2483
    %v2555 = vunpack.c.l.b16 %v2484
    %v2556 = vunpack.c.l.b16 %v2485
    %v2557 = vunpack.c.l.b16 %v2486
    %v2558 = vunpack.c.l.b16 %v2487
    %v2559 = vunpack.c.l.b16 %v2488
    %v2560 = vunpack.c.l.b16 %v2489
    %v2561 = vpack.c.b16 %v2530, %v2529
    %v2562 = vpack.c.b16 %v2532, %v2531
    %v2563 = vpack.c.b16 %v2534, %v2533
    %v2564 = vpack.c.b16 %v2536, %v2535
    %v2565 = vpack.c.b16 %v2538, %v2537
    %v2566 = vpack.c.b16 %v2540, %v2539
    %v2567 = vpack.c.b16 %v2542, %v2541
    %v2568 = vpack.c.b16 %v2544, %v2543
    %v2569 = vpack.c.b16 %v2546, %v2545
    %v2570 = vpack.c.b16 %v2548, %v2547
    %v2571 = vpack.c.b16 %v2550, %v2549
    %v2572 = vpack.c.b16 %v2552, %v2551
    %v2573 = vpack.c.b16 %v2554, %v2553
    %v2574 = vpack.c.b16 %v2556, %v2555
    %v2575 = vpack.c.b16 %v2558, %v2557
    %v2576 = vpack.c.b16 %v2560, %v2559
    %2593 = vmatprep.subr.bf16.mxu0 0
    %2594 = vmatpush1.bf16.msra.mxu0 %v2568
    %2595 = vmatprep.subr.bf16.mxu0 0
    %2596 = vmatpush1.bf16.msra.mxu0 %v2567
    %2597 = vmatprep.subr.bf16.mxu0 0
    %2598 = vmatpush1.bf16.msra.mxu0 %v2566
    %2599 = vmatprep.subr.bf16.mxu0 0
    %2600 = vmatpush1.bf16.msra.mxu0 %v2565
    %2601 = vmatprep.subr.bf16.mxu0 0
    %2602 = vmatpush1.bf16.msra.mxu0 %v2564
    %2603 = vmatprep.subr.bf16.mxu0 0
    %2604 = vmatpush1.bf16.msra.mxu0 %v2563
    %2605 = vmatprep.subr.bf16.mxu0 0
    %2606 = vmatpush1.bf16.msra.mxu0 %v2562
    %2607 = vmatprep.subr.bf16.mxu0 0
    %2608 = vmatpush1.bf16.msra.mxu0 %v2561
    %2609 = vmatprep.subr.bf16.mxu0 0
    %2610 = vmatpush2.bf16.msra.mxu0 %v2576
    %2611 = vmatprep.subr.bf16.mxu0 0
    %2612 = vmatpush2.bf16.msra.mxu0 %v2575
    %2613 = vmatprep.subr.bf16.mxu0 0
    %2614 = vmatpush2.bf16.msra.mxu0 %v2574
    %2615 = vmatprep.subr.bf16.mxu0 0
    %2616 = vmatpush2.bf16.msra.mxu0 %v2573
    %2617 = vmatprep.subr.bf16.mxu0 0
    %2618 = vmatpush2.bf16.msra.mxu0 %v2572
    %2619 = vmatprep.subr.bf16.mxu0 0
    %2620 = vmatpush2.bf16.msra.mxu0 %v2571
    %2621 = vmatprep.subr.bf16.mxu0 0
    %2622 = vmatpush2.bf16.msra.mxu0 %v2570
    %2623 = vmatprep.subr.bf16.mxu0 0
    %2624 = vmatpush2.bf16.msra.mxu0 %v2569
    %2625 = vmatprep.mubr.bf16.mxu0 %v2457
    %2626 = vmatmul.mubr.bf16.gmra.mxu0 %v2456
    %v2627 = vpop.f32.mrf.mxu0
    %v2628 = vadd.f32 %v2495, %v2627
    %v2629 = vpop.f32.mrf.mxu0
    %v2630 = vpop.f32.mrf.mxu0
    %v2631 = vpop.f32.mrf.mxu0
    %2632 = vdwg.mxu0
    %2633 = vst [vmem:[#allocation2] sm:$0x3] %v2628
    // Predicated region
    $region30: #{pointnet_forward.3} parent=1 // pred_check
      _
    $region31: #{pointnet_forward.3} parent=1 // pred_check_branch
      %2635 = sbr.rel (0) target = $region33
    $region32: #{pointnet_forward.3} parent=1 // pred_region
      %s2637 = ssub.s32 32, 32
      %2638 = vsyncadd [#allocation3], %s2637
      %s2640 = sshll.u32 [#allocation2], 4
      %s2641 = int_to_ptr.vmem [resolvable:$true] %s2640
      %2643 = dma.vmem_to_hbm [thread:$0]  %s2641, 32, %s7, [#allocation3]
    $region33: #{pointnet_forward.3} parent=1 // pred_fallthru
      _
    // Predicated region
    $region34: #{pointnet_forward.3} parent=1 // pred_check
      _
    $region35: #{pointnet_forward.3} parent=1 // pred_check_branch
      %2645 = sbr.rel (0) target = $region37
    $region36: #{pointnet_forward.3} parent=1 // pred_region
      %2646 = dma.done [#allocation3], 32
    $region37: #{pointnet_forward.3} parent=1 // pred_fallthru
      _
    %2647 = vsyncpa [#allocation3], 1

</llo_original>
